<compile_context>
chip_gen: v6e
topology: v6e:2x2x1
jax: 0.10.0
libtpu: 0.0.40
codegen_flags: <defaults>
</compile_context>

<pallas_src>
import functools

import jax
import jax.numpy as jnp
from jax import lax
from jax.experimental import pallas as pl
from jax.experimental.pallas import tpu as pltpu

EPS = 1e-5


# --------------------------------------------------------------------------- utils
def _round_up(x, m):
    return (x + m - 1) // m * m


def _pad_to(a, shape):
    return jnp.pad(a, [(0, t - s) for s, t in zip(a.shape, shape)])


def _pick_row_tile(rows):
    for t in (512, 256, 128, 64, 32, 16, 8):
        if rows % t == 0:
            return t
    return rows


def _bn_scale_shift(stats, count, gamma, beta):
    """Turn per-tile (sum, sumsq) partials into per-channel BN scale/shift."""
    s = jnp.sum(stats[:, 0, :], axis=0)
    ss = jnp.sum(stats[:, 1, :], axis=0)
    mean = s / count
    var = ss / count - mean * mean          # biased variance (training-mode BN)
    scale = gamma * lax.rsqrt(var + EPS)
    shift = beta - mean * scale
    return scale.reshape(1, -1), shift.reshape(1, -1)


# --------------------------------------------------------------------------- kernels
def _conv1x1_stats_kernel(x_ref, w_ref, y_ref, st_ref, *, mxu_dtype):
    # y = x @ w  (MXU, f32 accumulation) + one-pass per-channel sum / sumsq
    y = jnp.dot(x_ref[...].astype(mxu_dtype), w_ref[...],
                preferred_element_type=jnp.float32)
    y_ref[...] = y
    st_ref[0, 0:1, :] = jnp.sum(y, axis=0, keepdims=True)
    st_ref[0, 1:2, :] = jnp.sum(y * y, axis=0, keepdims=True)


def _bn_relu_conv1x1_stats_kernel(x_ref, s_ref, t_ref, w_ref, y_ref, st_ref, *,
                                  mxu_dtype):
    # fused: BN(prev) + ReLU + 1x1 conv + one-pass stats of this conv's output
    a = jnp.maximum(x_ref[...] * s_ref[...] + t_ref[...], 0.0)
    y = jnp.dot(a.astype(mxu_dtype), w_ref[...],
                preferred_element_type=jnp.float32)
    y_ref[...] = y
    st_ref[0, 0:1, :] = jnp.sum(y, axis=0, keepdims=True)
    st_ref[0, 1:2, :] = jnp.sum(y * y, axis=0, keepdims=True)


def _bn_relu_conv3x3_stats_kernel(y1_ref, s_ref, t_ref, w_ref, y2_ref, st_ref,
                                  apad_ref, *, H, W, mxu_dtype):
    # fused: BN1 + ReLU + 3x3 conv (stride 1, pad 1) + one-pass stats of conv output.
    # One image per grid step (no spatial halo across tiles).
    HW = H * W
    P = y1_ref.shape[-1]
    pad = W + 1                                   # halo rows on each side

    a1 = jnp.maximum(y1_ref[0] * s_ref[...] + t_ref[...], 0.0)      # (HW, P) f32

    # halo-only zeroing + single interior store (no full-buffer zero pass)
    apad_ref[0:pad, :] = jnp.zeros((pad, P), jnp.float32)
    apad_ref[pad + HW:pad + HW + pad, :] = jnp.zeros((pad, P), jnp.float32)
    apad_ref[pad:pad + HW, :] = a1

    col = lax.broadcasted_iota(jnp.int32, (HW + 2 * W, 1), 0) % W
    acc = jnp.zeros((HW, P), jnp.float32)

    for dw in (-1, 0, 1):
        # one column-shifted strip per dw (3 activation reads instead of 9);
        # column wrap across image rows is masked out.
        strip = apad_ref[1 + dw:1 + dw + HW + 2 * W, :]              # (HW+2W, P)
        if dw == 1:
            strip = jnp.where(col == W - 1, 0.0, strip)
        elif dw == -1:
            strip = jnp.where(col == 0, 0.0, strip)
        strip = strip.astype(mxu_dtype)
        for dh in (-1, 0, 1):
            # row shift = aligned value slice of the strip (halo provides H zeros)
            tap = strip[(dh + 1) * W:(dh + 1) * W + HW, :]
            acc = acc + jnp.dot(tap, w_ref[(dh + 1) * 3 + (dw + 1)],
                                preferred_element_type=jnp.float32)

    y2_ref[0] = acc
    st_ref[0, 0:1, :] = jnp.sum(acc, axis=0, keepdims=True)
    st_ref[0, 1:2, :] = jnp.sum(acc * acc, axis=0, keepdims=True)


def _bn_add_relu_kernel(y_ref, s_ref, t_ref, r_ref, o_ref):
    # BN3 + residual add + ReLU (all f32, lane-dense stores)
    o_ref[...] = jnp.maximum(y_ref[...] * s_ref[...] + t_ref[...] + r_ref[...], 0.0)


# --------------------------------------------------------------------------- wrapper
def bottleneck_pallas(x_nhwc, params, *, mxu_dtype=jnp.bfloat16):
    w1, w2, w3, g1, b1, g2, b2, g3, b3 = params
    N, H, W, Cin = x_nhwc.shape
    P = w1.shape[1]
    assert w3.shape == (P, Cin)          # downsample=None  =>  inplanes == 4*planes

    Cp = _round_up(Cin, 128)             # lane-dense channel dims (MXU / vst friendly)
    Pp = _round_up(P, 128)
    HW = H * W
    R = N * HW
    TM = _pick_row_tile(R)
    nt = R // TM

    # channel-pad inputs / weights / affine params (zeros => padded lanes stay 0)
    xp = _pad_to(x_nhwc, (N, H, W, Cp)).reshape(R, Cp)
    w1p = _pad_to(w1, (Cp, Pp)).astype(mxu_dtype)
    w2p = _pad_to(w2, (3, 3, Pp, Pp)).reshape(9, Pp, Pp).astype(mxu_dtype)
    w3p = _pad_to(w3, (Pp, Cp)).astype(mxu_dtype)
    g1p, b1p = _pad_to(g1.reshape(-1), (Pp,)), _pad_to(b1.reshape(-1), (Pp,))
    g2p, b2p = _pad_to(g2.reshape(-1), (Pp,)), _pad_to(b2.reshape(-1), (Pp,))
    g3p, b3p = _pad_to(g3.reshape(-1), (Cp,)), _pad_to(b3.reshape(-1), (Cp,))

    cparams = pltpu.CompilerParams(dimension_semantics=("parallel",),
                                   vmem_limit_bytes=32 * 1024 * 1024)

    # ---- stage 1: conv1 (1x1) + partial BN1 stats -----------------------------
    y1, st1 = pl.pallas_call(
        functools.partial(_conv1x1_stats_kernel, mxu_dtype=mxu_dtype),
        grid=(nt,),
        in_specs=[pl.BlockSpec((TM, Cp), lambda i: (i, 0)),
                  pl.BlockSpec((Cp, Pp), lambda i: (0, 0))],
        out_specs=[pl.BlockSpec((TM, Pp), lambda i: (i, 0)),
                   pl.BlockSpec((1, 2, Pp), lambda i: (i, 0, 0))],
        out_shape=(jax.ShapeDtypeStruct((R, Pp), jnp.float32),
                   jax.ShapeDtypeStruct((nt, 2, Pp), jnp.float32)),
        compiler_params=cparams,
    )(xp, w1p)
    s1, t1 = _bn_scale_shift(st1, R, g1p, b1p)

    # ---- stage 2: BN1+ReLU + conv2 (3x3, pad=1) + partial BN2 stats -----------
    y2, st2 = pl.pallas_call(
        functools.partial(_bn_relu_conv3x3_stats_kernel, H=H, W=W,
                          mxu_dtype=mxu_dtype),
        grid=(N,),
        in_specs=[pl.BlockSpec((1, HW, Pp), lambda n: (n, 0, 0)),
                  pl.BlockSpec((1, Pp), lambda n: (0, 0)),
                  pl.BlockSpec((1, Pp), lambda n: (0, 0)),
                  pl.BlockSpec((9, Pp, Pp), lambda n: (0, 0, 0))],
        out_specs=[pl.BlockSpec((1, HW, Pp), lambda n: (n, 0, 0)),
                   pl.BlockSpec((1, 2, Pp), lambda n: (n, 0, 0))],
        out_shape=(jax.ShapeDtypeStruct((N, HW, Pp), jnp.float32),
                   jax.ShapeDtypeStruct((N, 2, Pp), jnp.float32)),
        scratch_shapes=[pltpu.VMEM((HW + 2 * W + 2, Pp), jnp.float32)],
        compiler_params=cparams,
    )(y1.reshape(N, HW, Pp), s1, t1, w2p)
    s2, t2 = _bn_scale_shift(st2, R, g2p, b2p)

    # ---- stage 3: BN2+ReLU + conv3 (1x1) + partial BN3 stats ------------------
    y3, st3 = pl.pallas_call(
        functools.partial(_bn_relu_conv1x1_stats_kernel, mxu_dtype=mxu_dtype),
        grid=(nt,),
        in_specs=[pl.BlockSpec((TM, Pp), lambda i: (i, 0)),
                  pl.BlockSpec((1, Pp), lambda i: (0, 0)),
                  pl.BlockSpec((1, Pp), lambda i: (0, 0)),
                  pl.BlockSpec((Pp, Cp), lambda i: (0, 0))],
        out_specs=[pl.BlockSpec((TM, Cp), lambda i: (i, 0)),
                   pl.BlockSpec((1, 2, Cp), lambda i: (i, 0, 0))],
        out_shape=(jax.ShapeDtypeStruct((R, Cp), jnp.float32),
                   jax.ShapeDtypeStruct((nt, 2, Cp), jnp.float32)),
        compiler_params=cparams,
    )(y2.reshape(R, Pp), s2, t2, w3p)
    s3, t3 = _bn_scale_shift(st3, R, g3p, b3p)

    # ---- stage 4: BN3 + residual add + ReLU -----------------------------------
    out = pl.pallas_call(
        _bn_add_relu_kernel,
        grid=(nt,),
        in_specs=[pl.BlockSpec((TM, Cp), lambda i: (i, 0)),
                  pl.BlockSpec((1, Cp), lambda i: (0, 0)),
                  pl.BlockSpec((1, Cp), lambda i: (0, 0)),
                  pl.BlockSpec((TM, Cp), lambda i: (i, 0))],
        out_specs=pl.BlockSpec((TM, Cp), lambda i: (i, 0)),
        out_shape=jax.ShapeDtypeStruct((R, Cp), jnp.float32),
        compiler_params=cparams,
    )(y3, s3, t3, xp)

    return out.reshape(N, H, W, Cp)[..., :Cin]


# --------------------------------------------------------------------------- reference
def _bn_ref(v, g, b):
    mean = v.mean(axis=(0, 1, 2), keepdims=True)
    var = ((v - mean) ** 2).mean(axis=(0, 1, 2), keepdims=True)
    return (v - mean) * lax.rsqrt(var + EPS) * g.reshape(1, 1, 1, -1) \
        + b.reshape(1, 1, 1, -1)


def bottleneck_ref(x_nhwc, params):
    w1, w2, w3, g1, b1, g2, b2, g3, b3 = params
    dn = lax.conv_dimension_numbers(x_nhwc.shape, (1, 1, 1, 1),
                                    ('NHWC', 'HWIO', 'NHWC'))
    out = lax.conv_general_dilated(x_nhwc, w1.reshape(1, 1, *w1.shape),
                                   (1, 1), 'VALID', dimension_numbers=dn)
    out = jax.nn.relu(_bn_ref(out, g1, b1))
    out = lax.conv_general_dilated(out, w2, (1, 1), ((1, 1), (1, 1)),
                                   dimension_numbers=dn)
    out = jax.nn.relu(_bn_ref(out, g2, b2))
    out = lax.conv_general_dilated(out, w3.reshape(1, 1, *w3.shape),
                                   (1, 1), 'VALID', dimension_numbers=dn)
    out = _bn_ref(out, g3, b3)
    return jax.nn.relu(out + x_nhwc)


# --------------------------------------------------------------------------- main
if __name__ == "__main__":
    N, H, W = 2, 8, 8
    planes = 8
    inplanes = planes * 4        # 32 (downsample=None requires inplanes == 4*planes)

    key = jax.random.PRNGKey(0)
    kx, k1, k2, k3 = jax.random.split(key, 4)

    w1 = jax.random.normal(k1, (inplanes, planes), jnp.float32) * 0.1       # 1x1
    w2 = jax.random.normal(k2, (3, 3, planes, planes), jnp.float32) * 0.1   # 3x3 HWIO
    w3 = jax.random.normal(k3, (planes, planes * 4), jnp.float32) * 0.1     # 1x1
    g1 = 1.0 + 0.01 * jnp.arange(planes, dtype=jnp.float32)
    b1 = 0.02 * jnp.arange(planes, dtype=jnp.float32)
    g2 = 1.0 - 0.01 * jnp.arange(planes, dtype=jnp.float32)
    b2 = -0.01 * jnp.arange(planes, dtype=jnp.float32)
    g3 = 1.0 + 0.005 * jnp.arange(planes * 4, dtype=jnp.float32)
    b3 = 0.005 * jnp.arange(planes * 4, dtype=jnp.float32)
    params = (w1, w2, w3, g1, b1, g2, b2, g3, b3)

    # PyTorch-convention NCHW input, transposed to NHWC for the kernels.
    x_nchw = jax.random.normal(kx, (N, inplanes, H, W), jnp.float32)
    x_nhwc = jnp.transpose(x_nchw, (0, 2, 3, 1))

    ref_nhwc = bottleneck_ref(x_nhwc, params)
    fwd = jax.jit(bottleneck_pallas, static_argnames=("mxu_dtype",))

    # Exact path (f32 MXU operands): tight structural / numerical check.
    out_f32 = fwd(x_nhwc, params, mxu_dtype=jnp.float32)
    jax.block_until_ready(out_f32)
    err_f32 = float(jnp.max(jnp.abs(out_f32 - ref_nhwc)))
    assert err_f32 < 1e-3, err_f32

    # Fast path (bf16 MXU operands, f32 accumulation / BN / residual).
    # bf16 rounding compounds through three chained convs that are each renormalised
    # to unit scale by BatchNorm; observed max-abs-error vs the f32 reference ~1e-2.
    out_bf16 = fwd(x_nhwc, params, mxu_dtype=jnp.bfloat16)
    jax.block_until_ready(out_bf16)
    err_bf16 = float(jnp.max(jnp.abs(out_bf16 - ref_nhwc)))
    assert err_bf16 < 1e-1, err_bf16

    out_nchw = jnp.transpose(out_bf16, (0, 3, 1, 2))
    assert out_nchw.shape == x_nchw.shape
    print("KERNEL_OK")
</pallas_src>

<mosaic_0001>
module attributes {stable_mosaic.version = 11 : i64} {
  func.func @_conv1x1_stats_kernel(%arg0: i32, %arg1: memref<128x128xf32, #tpu.memory_space<vmem>>, %arg2: memref<128x128xf32, #tpu.memory_space<vmem>>, %arg3: memref<128x128xf32, #tpu.memory_space<vmem>>, %arg4: memref<1x2x128xf32, #tpu.memory_space<vmem>>) attributes {dimension_semantics = [#tpu.dimension_semantics<parallel>], iteration_bounds = array<i64: 1>, scalar_prefetch = 0 : i64, scratch_operands = 0 : i64, tpu.core_type = #tpu.core_type<tc>, window_params = [{transform_indices = @transform_0, window_bounds = array<i64: 128, 128>}, {pipeline_mode = #tpu.pipeline_mode<synchronous>, transform_indices = @transform_1, window_bounds = array<i64: 128, 128>}, {transform_indices = @transform_2, window_bounds = array<i64: 128, 128>}, {transform_indices = @transform_3, window_bounds = array<i64: 1, 2, 128>}]} {
    %c0 = arith.constant 0 : index
    %c0_0 = arith.constant 0 : index
    %0 = vector.load %arg1[%c0, %c0_0] : memref<128x128xf32, #tpu.memory_space<vmem>>, vector<128x128xf32>
    %c0_1 = arith.constant 0 : index
    %c0_2 = arith.constant 0 : index
    %1 = vector.load %arg2[%c0_1, %c0_2] : memref<128x128xf32, #tpu.memory_space<vmem>>, vector<128x128xf32>
    %cst = arith.constant dense<0.000000e+00> : vector<128x128xf32>
    %2 = tpu.matmul %0, %1, %cst {dimension_numbers = #tpu.dot_dimension_numbers<[1], [0], [0], [1], [0, 0, 1, 1], [], []>} : vector<128x128xf32>, vector<128x128xf32>, vector<128x128xf32> -> vector<128x128xf32>
    %c0_3 = arith.constant 0 : index
    %c0_4 = arith.constant 0 : index
    %3 = vector.load %arg3[%c0_3, %c0_4] : memref<128x128xf32, #tpu.memory_space<vmem>>, vector<128x128xf32>
    tpu.vector_store %arg3[%c0_3, %c0_4], %2 {strides = array<i32>} : memref<128x128xf32, #tpu.memory_space<vmem>>, vector<128x128xf32>,
    %cst_5 = arith.constant dense<0.000000e+00> : vector<128xf32>
    %4 = vector.multi_reduction <add>, %2, %cst_5 [0] : vector<128x128xf32> to vector<128xf32>
    %5 = vector.shape_cast %4 : vector<128xf32> to vector<1x128xf32>
    %c0_6 = arith.constant 0 : index
    %c0_7 = arith.constant 0 : index
    %c0_8 = arith.constant 0 : index
    %6 = vector.load %arg4[%c0_6, %c0_7, %c0_8] : memref<1x2x128xf32, #tpu.memory_space<vmem>>, vector<1x1x128xf32>
    %7 = vector.shape_cast %6 : vector<1x1x128xf32> to vector<1x128xf32>
    %8 = vector.shape_cast %5 : vector<1x128xf32> to vector<1x1x128xf32>
    tpu.vector_store %arg4[%c0_6, %c0_7, %c0_8], %8 {strides = array<i32>} : memref<1x2x128xf32, #tpu.memory_space<vmem>>, vector<1x1x128xf32>,
    %9 = arith.mulf %2, %2 : vector<128x128xf32>
    %cst_9 = arith.constant dense<0.000000e+00> : vector<128xf32>
    %10 = vector.multi_reduction <add>, %9, %cst_9 [0] : vector<128x128xf32> to vector<128xf32>
    %11 = vector.shape_cast %10 : vector<128xf32> to vector<1x128xf32>
    %c0_10 = arith.constant 0 : index
    %c1 = arith.constant 1 : index
    %c0_11 = arith.constant 0 : index
    %12 = vector.load %arg4[%c0_10, %c1, %c0_11] : memref<1x2x128xf32, #tpu.memory_space<vmem>>, vector<1x1x128xf32>
    %13 = vector.shape_cast %12 : vector<1x1x128xf32> to vector<1x128xf32>
    %14 = vector.shape_cast %11 : vector<1x128xf32> to vector<1x1x128xf32>
    tpu.vector_store %arg4[%c0_10, %c1, %c0_11], %14 {strides = array<i32>} : memref<1x2x128xf32, #tpu.memory_space<vmem>>, vector<1x1x128xf32>,
    return
  }
  func.func @transform_0(%arg0: i32) -> (i32, i32) {
    %c0_i32 = arith.constant 0 : i32
    %c0_i32_0 = arith.constant 0 : i32
    return %arg0, %c0_i32 : i32, i32
  }
  func.func @transform_1(%arg0: i32) -> (i32, i32) {
    %c0_i32 = arith.constant 0 : i32
    %c0_i32_0 = arith.constant 0 : i32
    %c0_i32_1 = arith.constant 0 : i32
    return %c0_i32, %c0_i32_0 : i32, i32
  }
  func.func @transform_2(%arg0: i32) -> (i32, i32) {
    %c0_i32 = arith.constant 0 : i32
    %c0_i32_0 = arith.constant 0 : i32
    return %arg0, %c0_i32 : i32, i32
  }
  func.func @transform_3(%arg0: i32) -> (i32, i32, i32) {
    %c0_i32 = arith.constant 0 : i32
    %c0_i32_0 = arith.constant 0 : i32
    %c0_i32_1 = arith.constant 0 : i32
    return %arg0, %c0_i32, %c0_i32_0 : i32, i32, i32
  }
}

module attributes {stable_mosaic.version = 11 : i64} {
  func.func @_bn_relu_conv3x3_stats_kernel(%arg0: i32, %arg1: memref<1x64x128xf32, #tpu.memory_space<vmem>>, %arg2: memref<1x128xf32, #tpu.memory_space<vmem>>, %arg3: memref<1x128xf32, #tpu.memory_space<vmem>>, %arg4: memref<9x128x128xf32, #tpu.memory_space<vmem>>, %arg5: memref<1x64x128xf32, #tpu.memory_space<vmem>>, %arg6: memref<1x2x128xf32, #tpu.memory_space<vmem>>, %arg7: memref<82x128xf32, #tpu.memory_space<vmem>>) attributes {dimension_semantics = [#tpu.dimension_semantics<parallel>], iteration_bounds = array<i64: 2>, scalar_prefetch = 0 : i64, scratch_operands = 1 : i64, tpu.core_type = #tpu.core_type<tc>, window_params = [{transform_indices = @transform_0, window_bounds = array<i64: 1, 64, 128>}, {pipeline_mode = #tpu.pipeline_mode<synchronous>, transform_indices = @transform_1, window_bounds = array<i64: 1, 128>}, {pipeline_mode = #tpu.pipeline_mode<synchronous>, transform_indices = @transform_2, window_bounds = array<i64: 1, 128>}, {pipeline_mode = #tpu.pipeline_mode<synchronous>, transform_indices = @transform_3, window_bounds = array<i64: 9, 128, 128>}, {transform_indices = @transform_4, window_bounds = array<i64: 1, 64, 128>}, {transform_indices = @transform_5, window_bounds = array<i64: 1, 2, 128>}]} {
    %c0 = arith.constant 0 : index
    %c0_0 = arith.constant 0 : index
    %c0_1 = arith.constant 0 : index
    %0 = vector.load %arg1[%c0, %c0_0, %c0_1] : memref<1x64x128xf32, #tpu.memory_space<vmem>>, vector<1x64x128xf32>
    %1 = vector.shape_cast %0 : vector<1x64x128xf32> to vector<64x128xf32>
    %c0_2 = arith.constant 0 : index
    %c0_3 = arith.constant 0 : index
    %2 = vector.load %arg2[%c0_2, %c0_3] : memref<1x128xf32, #tpu.memory_space<vmem>>, vector<1x128xf32>
    %3 = vector.broadcast %2 : vector<1x128xf32> to vector<64x128xf32>
    %4 = arith.mulf %1, %3 : vector<64x128xf32>
    %c0_4 = arith.constant 0 : index
    %c0_5 = arith.constant 0 : index
    %5 = vector.load %arg3[%c0_4, %c0_5] : memref<1x128xf32, #tpu.memory_space<vmem>>, vector<1x128xf32>
    %6 = vector.broadcast %5 : vector<1x128xf32> to vector<64x128xf32>
    %7 = arith.addf %4, %6 : vector<64x128xf32>
    %cst = arith.constant 0.000000e+00 : f32
    %8 = vector.broadcast %cst : f32 to vector<64x128xf32>
    %9 = arith.maximumf %7, %8 : vector<64x128xf32>
    %cst_6 = arith.constant 0.000000e+00 : f32
    %10 = vector.broadcast %cst_6 : f32 to vector<9x128xf32>
    %c0_7 = arith.constant 0 : index
    %c0_8 = arith.constant 0 : index
    %11 = vector.load %arg7[%c0_7, %c0_8] : memref<82x128xf32, #tpu.memory_space<vmem>>, vector<9x128xf32>
    tpu.vector_store %arg7[%c0_7, %c0_8], %10 {strides = array<i32>} : memref<82x128xf32, #tpu.memory_space<vmem>>, vector<9x128xf32>,
    %cst_9 = arith.constant 0.000000e+00 : f32
    %12 = vector.broadcast %cst_9 : f32 to vector<9x128xf32>
    %c73 = arith.constant 73 : index
    %c0_10 = arith.constant 0 : index
    %13 = vector.load %arg7[%c73, %c0_10] : memref<82x128xf32, #tpu.memory_space<vmem>>, vector<9x128xf32>
    tpu.vector_store %arg7[%c73, %c0_10], %12 {strides = array<i32>} : memref<82x128xf32, #tpu.memory_space<vmem>>, vector<9x128xf32>,
    %c9 = arith.constant 9 : index
    %c0_11 = arith.constant 0 : index
    %14 = vector.load %arg7[%c9, %c0_11] : memref<82x128xf32, #tpu.memory_space<vmem>>, vector<64x128xf32>
    tpu.vector_store %arg7[%c9, %c0_11], %9 {strides = array<i32>} : memref<82x128xf32, #tpu.memory_space<vmem>>, vector<64x128xf32>,
    %15 = tpu.iota {dimensions = array<i32: 0>} : vector<80x1xi32>
    %c8_i32 = arith.constant 8 : i32
    %c0_i32 = arith.constant 0 : i32
    %16 = arith.cmpi eq, %c8_i32, %c0_i32 : i32
    %c1_i32 = arith.constant 1 : i32
    %17 = arith.select %16, %c1_i32, %c8_i32 : i32
    %18 = vector.broadcast %17 : i32 to vector<80x1xi32>
    %19 = arith.remsi %15, %18 : vector<80x1xi32>
    %c0_i32_12 = arith.constant 0 : i32
    %20 = vector.broadcast %c0_i32_12 : i32 to vector<80x1xi32>
    %21 = arith.cmpi ne, %19, %20 : vector<80x1xi32>
    %c0_i32_13 = arith.constant 0 : i32
    %22 = vector.broadcast %c0_i32_13 : i32 to vector<80x1xi32>
    %23 = arith.cmpi slt, %19, %22 : vector<80x1xi32>
    %c0_i32_14 = arith.constant 0 : i32
    %24 = arith.cmpi slt, %17, %c0_i32_14 : i32
    %25 = vector.broadcast %24 : i1 to vector<80x1xi1>
    %26 = vector.broadcast %25 : vector<80x1xi1> to vector<80x1xi1>
    %27 = arith.xori %23, %26 : vector<80x1xi1>
    %28 = arith.andi %27, %21 : vector<80x1xi1>
    %29 = vector.broadcast %17 : i32 to vector<80x1xi32>
    %30 = arith.addi %19, %29 : vector<80x1xi32>
    %31 = arith.select %28, %30, %19 : vector<80x1xi1>, vector<80x1xi32>
    %cst_15 = arith.constant 0.000000e+00 : f32
    %32 = vector.broadcast %cst_15 : f32 to vector<64x128xf32>
    %c0_16 = arith.constant 0 : index
    %c0_17 = arith.constant 0 : index
    %33 = vector.load %arg7[%c0_16, %c0_17] : memref<82x128xf32, #tpu.memory_space<vmem>>, vector<80x128xf32>
    %c0_i32_18 = arith.constant 0 : i32
    %34 = vector.broadcast %c0_i32_18 : i32 to vector<80x1xi32>
    %35 = arith.cmpi eq, %31, %34 : vector<80x1xi32>
    %cst_19 = arith.constant 0.000000e+00 : f32
    %36 = vector.shape_cast %35 : vector<80x1xi1> to vector<80x1xi1>
    %37 = vector.broadcast %36 : vector<80x1xi1> to vector<80x128xi1>
    %38 = vector.broadcast %cst_19 : f32 to vector<80x128xf32>
    %39 = arith.select %37, %38, %33 : vector<80x128xi1>, vector<80x128xf32>
    %40 = vector.extract_strided_slice %39 {offsets = [0, 0], sizes = [64, 128], strides = [1, 1]} : vector<80x128xf32> to vector<64x128xf32>
    %c0_20 = arith.constant 0 : index
    %c0_21 = arith.constant 0 : index
    %c0_22 = arith.constant 0 : index
    %41 = vector.load %arg4[%c0_20, %c0_21, %c0_22] : memref<9x128x128xf32, #tpu.memory_space<vmem>>, vector<1x128x128xf32>
    %42 = vector.shape_cast %41 : vector<1x128x128xf32> to vector<128x128xf32>
    %cst_23 = arith.constant dense<0.000000e+00> : vector<64x128xf32>
    %43 = tpu.matmul %40, %42, %cst_23 {dimension_numbers = #tpu.dot_dimension_numbers<[1], [0], [0], [1], [0, 0, 1, 1], [], []>} : vector<64x128xf32>, vector<128x128xf32>, vector<64x128xf32> -> vector<64x128xf32>
    %44 = arith.addf %32, %43 : vector<64x128xf32>
    %45 = vector.extract_strided_slice %39 {offsets = [8, 0], sizes = [64, 128], strides = [1, 1]} : vector<80x128xf32> to vector<64x128xf32>
    %c3 = arith.constant 3 : index
    %c0_24 = arith.constant 0 : index
    %c0_25 = arith.constant 0 : index
    %46 = vector.load %arg4[%c3, %c0_24, %c0_25] : memref<9x128x128xf32, #tpu.memory_space<vmem>>, vector<1x128x128xf32>
    %47 = vector.shape_cast %46 : vector<1x128x128xf32> to vector<128x128xf32>
    %cst_26 = arith.constant dense<0.000000e+00> : vector<64x128xf32>
    %48 = tpu.matmul %45, %47, %cst_26 {dimension_numbers = #tpu.dot_dimension_numbers<[1], [0], [0], [1], [0, 0, 1, 1], [], []>} : vector<64x128xf32>, vector<128x128xf32>, vector<64x128xf32> -> vector<64x128xf32>
    %49 = arith.addf %44, %48 : vector<64x128xf32>
    %50 = vector.extract_strided_slice %39 {offsets = [16, 0], sizes = [64, 128], strides = [1, 1]} : vector<80x128xf32> to vector<64x128xf32>
    %c6 = arith.constant 6 : index
    %c0_27 = arith.constant 0 : index
    %c0_28 = arith.constant 0 : index
    %51 = vector.load %arg4[%c6, %c0_27, %c0_28] : memref<9x128x128xf32, #tpu.memory_space<vmem>>, vector<1x128x128xf32>
    %52 = vector.shape_cast %51 : vector<1x128x128xf32> to vector<128x128xf32>
    %cst_29 = arith.constant dense<0.000000e+00> : vector<64x128xf32>
    %53 = tpu.matmul %50, %52, %cst_29 {dimension_numbers = #tpu.dot_dimension_numbers<[1], [0], [0], [1], [0, 0, 1, 1], [], []>} : vector<64x128xf32>, vector<128x128xf32>, vector<64x128xf32> -> vector<64x128xf32>
    %54 = arith.addf %49, %53 : vector<64x128xf32>
    %c1 = arith.constant 1 : index
    %c0_30 = arith.constant 0 : index
    %55 = vector.load %arg7[%c1, %c0_30] : memref<82x128xf32, #tpu.memory_space<vmem>>, vector<80x128xf32>
    %56 = vector.extract_strided_slice %55 {offsets = [0, 0], sizes = [64, 128], strides = [1, 1]} : vector<80x128xf32> to vector<64x128xf32>
    %c1_31 = arith.constant 1 : index
    %c0_32 = arith.constant 0 : index
    %c0_33 = arith.constant 0 : index
    %57 = vector.load %arg4[%c1_31, %c0_32, %c0_33] : memref<9x128x128xf32, #tpu.memory_space<vmem>>, vector<1x128x128xf32>
    %58 = vector.shape_cast %57 : vector<1x128x128xf32> to vector<128x128xf32>
    %cst_34 = arith.constant dense<0.000000e+00> : vector<64x128xf32>
    %59 = tpu.matmul %56, %58, %cst_34 {dimension_numbers = #tpu.dot_dimension_numbers<[1], [0], [0], [1], [0, 0, 1, 1], [], []>} : vector<64x128xf32>, vector<128x128xf32>, vector<64x128xf32> -> vector<64x128xf32>
    %60 = arith.addf %54, %59 : vector<64x128xf32>
    %61 = vector.extract_strided_slice %55 {offsets = [8, 0], sizes = [64, 128], strides = [1, 1]} : vector<80x128xf32> to vector<64x128xf32>
    %c4 = arith.constant 4 : index
    %c0_35 = arith.constant 0 : index
    %c0_36 = arith.constant 0 : index
    %62 = vector.load %arg4[%c4, %c0_35, %c0_36] : memref<9x128x128xf32, #tpu.memory_space<vmem>>, vector<1x128x128xf32>
    %63 = vector.shape_cast %62 : vector<1x128x128xf32> to vector<128x128xf32>
    %cst_37 = arith.constant dense<0.000000e+00> : vector<64x128xf32>
    %64 = tpu.matmul %61, %63, %cst_37 {dimension_numbers = #tpu.dot_dimension_numbers<[1], [0], [0], [1], [0, 0, 1, 1], [], []>} : vector<64x128xf32>, vector<128x128xf32>, vector<64x128xf32> -> vector<64x128xf32>
    %65 = arith.addf %60, %64 : vector<64x128xf32>
    %66 = vector.extract_strided_slice %55 {offsets = [16, 0], sizes = [64, 128], strides = [1, 1]} : vector<80x128xf32> to vector<64x128xf32>
    %c7 = arith.constant 7 : index
    %c0_38 = arith.constant 0 : index
    %c0_39 = arith.constant 0 : index
    %67 = vector.load %arg4[%c7, %c0_38, %c0_39] : memref<9x128x128xf32, #tpu.memory_space<vmem>>, vector<1x128x128xf32>
    %68 = vector.shape_cast %67 : vector<1x128x128xf32> to vector<128x128xf32>
    %cst_40 = arith.constant dense<0.000000e+00> : vector<64x128xf32>
    %69 = tpu.matmul %66, %68, %cst_40 {dimension_numbers = #tpu.dot_dimension_numbers<[1], [0], [0], [1], [0, 0, 1, 1], [], []>} : vector<64x128xf32>, vector<128x128xf32>, vector<64x128xf32> -> vector<64x128xf32>
    %70 = arith.addf %65, %69 : vector<64x128xf32>
    %c2 = arith.constant 2 : index
    %c0_41 = arith.constant 0 : index
    %71 = vector.load %arg7[%c2, %c0_41] : memref<82x128xf32, #tpu.memory_space<vmem>>, vector<80x128xf32>
    %c7_i32 = arith.constant 7 : i32
    %72 = vector.broadcast %c7_i32 : i32 to vector<80x1xi32>
    %73 = arith.cmpi eq, %31, %72 : vector<80x1xi32>
    %cst_42 = arith.constant 0.000000e+00 : f32
    %74 = vector.shape_cast %73 : vector<80x1xi1> to vector<80x1xi1>
    %75 = vector.broadcast %74 : vector<80x1xi1> to vector<80x128xi1>
    %76 = vector.broadcast %cst_42 : f32 to vector<80x128xf32>
    %77 = arith.select %75, %76, %71 : vector<80x128xi1>, vector<80x128xf32>
    %78 = vector.extract_strided_slice %77 {offsets = [0, 0], sizes = [64, 128], strides = [1, 1]} : vector<80x128xf32> to vector<64x128xf32>
    %c2_43 = arith.constant 2 : index
    %c0_44 = arith.constant 0 : index
    %c0_45 = arith.constant 0 : index
    %79 = vector.load %arg4[%c2_43, %c0_44, %c0_45] : memref<9x128x128xf32, #tpu.memory_space<vmem>>, vector<1x128x128xf32>
    %80 = vector.shape_cast %79 : vector<1x128x128xf32> to vector<128x128xf32>
    %cst_46 = arith.constant dense<0.000000e+00> : vector<64x128xf32>
    %81 = tpu.matmul %78, %80, %cst_46 {dimension_numbers = #tpu.dot_dimension_numbers<[1], [0], [0], [1], [0, 0, 1, 1], [], []>} : vector<64x128xf32>, vector<128x128xf32>, vector<64x128xf32> -> vector<64x128xf32>
    %82 = arith.addf %70, %81 : vector<64x128xf32>
    %83 = vector.extract_strided_slice %77 {offsets = [8, 0], sizes = [64, 128], strides = [1, 1]} : vector<80x128xf32> to vector<64x128xf32>
    %c5 = arith.constant 5 : index
    %c0_47 = arith.constant 0 : index
    %c0_48 = arith.constant 0 : index
    %84 = vector.load %arg4[%c5, %c0_47, %c0_48] : memref<9x128x128xf32, #tpu.memory_space<vmem>>, vector<1x128x128xf32>
    %85 = vector.shape_cast %84 : vector<1x128x128xf32> to vector<128x128xf32>
    %cst_49 = arith.constant dense<0.000000e+00> : vector<64x128xf32>
    %86 = tpu.matmul %83, %85, %cst_49 {dimension_numbers = #tpu.dot_dimension_numbers<[1], [0], [0], [1], [0, 0, 1, 1], [], []>} : vector<64x128xf32>, vector<128x128xf32>, vector<64x128xf32> -> vector<64x128xf32>
    %87 = arith.addf %82, %86 : vector<64x128xf32>
    %88 = vector.extract_strided_slice %77 {offsets = [16, 0], sizes = [64, 128], strides = [1, 1]} : vector<80x128xf32> to vector<64x128xf32>
    %c8 = arith.constant 8 : index
    %c0_50 = arith.constant 0 : index
    %c0_51 = arith.constant 0 : index
    %89 = vector.load %arg4[%c8, %c0_50, %c0_51] : memref<9x128x128xf32, #tpu.memory_space<vmem>>, vector<1x128x128xf32>
    %90 = vector.shape_cast %89 : vector<1x128x128xf32> to vector<128x128xf32>
    %cst_52 = arith.constant dense<0.000000e+00> : vector<64x128xf32>
    %91 = tpu.matmul %88, %90, %cst_52 {dimension_numbers = #tpu.dot_dimension_numbers<[1], [0], [0], [1], [0, 0, 1, 1], [], []>} : vector<64x128xf32>, vector<128x128xf32>, vector<64x128xf32> -> vector<64x128xf32>
    %92 = arith.addf %87, %91 : vector<64x128xf32>
    %c0_53 = arith.constant 0 : index
    %c0_54 = arith.constant 0 : index
    %c0_55 = arith.constant 0 : index
    %93 = vector.load %arg5[%c0_53, %c0_54, %c0_55] : memref<1x64x128xf32, #tpu.memory_space<vmem>>, vector<1x64x128xf32>
    %94 = vector.shape_cast %93 : vector<1x64x128xf32> to vector<64x128xf32>
    %95 = vector.shape_cast %92 : vector<64x128xf32> to vector<1x64x128xf32>
    tpu.vector_store %arg5[%c0_53, %c0_54, %c0_55], %95 {strides = array<i32>} : memref<1x64x128xf32, #tpu.memory_space<vmem>>, vector<1x64x128xf32>,
    %cst_56 = arith.constant dense<0.000000e+00> : vector<128xf32>
    %96 = vector.multi_reduction <add>, %92, %cst_56 [0] : vector<64x128xf32> to vector<128xf32>
    %97 = vector.shape_cast %96 : vector<128xf32> to vector<1x128xf32>
    %c0_57 = arith.constant 0 : index
    %c0_58 = arith.constant 0 : index
    %c0_59 = arith.constant 0 : index
    %98 = vector.load %arg6[%c0_57, %c0_58, %c0_59] : memref<1x2x128xf32, #tpu.memory_space<vmem>>, vector<1x1x128xf32>
    %99 = vector.shape_cast %98 : vector<1x1x128xf32> to vector<1x128xf32>
    %100 = vector.shape_cast %97 : vector<1x128xf32> to vector<1x1x128xf32>
    tpu.vector_store %arg6[%c0_57, %c0_58, %c0_59], %100 {strides = array<i32>} : memref<1x2x128xf32, #tpu.memory_space<vmem>>, vector<1x1x128xf32>,
    %101 = arith.mulf %92, %92 : vector<64x128xf32>
    %cst_60 = arith.constant dense<0.000000e+00> : vector<128xf32>
    %102 = vector.multi_reduction <add>, %101, %cst_60 [0] : vector<64x128xf32> to vector<128xf32>
    %103 = vector.shape_cast %102 : vector<128xf32> to vector<1x128xf32>
    %c0_61 = arith.constant 0 : index
    %c1_62 = arith.constant 1 : index
    %c0_63 = arith.constant 0 : index
    %104 = vector.load %arg6[%c0_61, %c1_62, %c0_63] : memref<1x2x128xf32, #tpu.memory_space<vmem>>, vector<1x1x128xf32>
    %105 = vector.shape_cast %104 : vector<1x1x128xf32> to vector<1x128xf32>
    %106 = vector.shape_cast %103 : vector<1x128xf32> to vector<1x1x128xf32>
    tpu.vector_store %arg6[%c0_61, %c1_62, %c0_63], %106 {strides = array<i32>} : memref<1x2x128xf32, #tpu.memory_space<vmem>>, vector<1x1x128xf32>,
    return
  }
  func.func @transform_0(%arg0: i32) -> (i32, i32, i32) {
    %c0_i32 = arith.constant 0 : i32
    %c0_i32_0 = arith.constant 0 : i32
    %c0_i32_1 = arith.constant 0 : i32
    return %arg0, %c0_i32, %c0_i32_0 : i32, i32, i32
  }
  func.func @transform_1(%arg0: i32) -> (i32, i32) {
    %c0_i32 = arith.constant 0 : i32
    %c0_i32_0 = arith.constant 0 : i32
    %c0_i32_1 = arith.constant 0 : i32
    return %c0_i32, %c0_i32_0 : i32, i32
  }
  func.func @transform_2(%arg0: i32) -> (i32, i32) {
    %c0_i32 = arith.constant 0 : i32
    %c0_i32_0 = arith.constant 0 : i32
    %c0_i32_1 = arith.constant 0 : i32
    return %c0_i32, %c0_i32_0 : i32, i32
  }
  func.func @transform_3(%arg0: i32) -> (i32, i32, i32) {
    %c0_i32 = arith.constant 0 : i32
    %c0_i32_0 = arith.constant 0 : i32
    %c0_i32_1 = arith.constant 0 : i32
    %c0_i32_2 = arith.constant 0 : i32
    return %c0_i32, %c0_i32_0, %c0_i32_1 : i32, i32, i32
  }
  func.func @transform_4(%arg0: i32) -> (i32, i32, i32) {
    %c0_i32 = arith.constant 0 : i32
    %c0_i32_0 = arith.constant 0 : i32
    %c0_i32_1 = arith.constant 0 : i32
    return %arg0, %c0_i32, %c0_i32_0 : i32, i32, i32
  }
  func.func @transform_5(%arg0: i32) -> (i32, i32, i32) {
    %c0_i32 = arith.constant 0 : i32
    %c0_i32_0 = arith.constant 0 : i32
    %c0_i32_1 = arith.constant 0 : i32
    return %arg0, %c0_i32, %c0_i32_0 : i32, i32, i32
  }
}

module attributes {stable_mosaic.version = 11 : i64} {
  func.func @_bn_relu_conv1x1_stats_kernel(%arg0: i32, %arg1: memref<128x128xf32, #tpu.memory_space<vmem>>, %arg2: memref<1x128xf32, #tpu.memory_space<vmem>>, %arg3: memref<1x128xf32, #tpu.memory_space<vmem>>, %arg4: memref<128x128xf32, #tpu.memory_space<vmem>>, %arg5: memref<128x128xf32, #tpu.memory_space<vmem>>, %arg6: memref<1x2x128xf32, #tpu.memory_space<vmem>>) attributes {dimension_semantics = [#tpu.dimension_semantics<parallel>], iteration_bounds = array<i64: 1>, scalar_prefetch = 0 : i64, scratch_operands = 0 : i64, tpu.core_type = #tpu.core_type<tc>, window_params = [{transform_indices = @transform_0, window_bounds = array<i64: 128, 128>}, {pipeline_mode = #tpu.pipeline_mode<synchronous>, transform_indices = @transform_1, window_bounds = array<i64: 1, 128>}, {pipeline_mode = #tpu.pipeline_mode<synchronous>, transform_indices = @transform_2, window_bounds = array<i64: 1, 128>}, {pipeline_mode = #tpu.pipeline_mode<synchronous>, transform_indices = @transform_3, window_bounds = array<i64: 128, 128>}, {transform_indices = @transform_4, window_bounds = array<i64: 128, 128>}, {transform_indices = @transform_5, window_bounds = array<i64: 1, 2, 128>}]} {
    %c0 = arith.constant 0 : index
    %c0_0 = arith.constant 0 : index
    %0 = vector.load %arg1[%c0, %c0_0] : memref<128x128xf32, #tpu.memory_space<vmem>>, vector<128x128xf32>
    %c0_1 = arith.constant 0 : index
    %c0_2 = arith.constant 0 : index
    %1 = vector.load %arg2[%c0_1, %c0_2] : memref<1x128xf32, #tpu.memory_space<vmem>>, vector<1x128xf32>
    %2 = vector.broadcast %1 : vector<1x128xf32> to vector<128x128xf32>
    %3 = arith.mulf %0, %2 : vector<128x128xf32>
    %c0_3 = arith.constant 0 : index
    %c0_4 = arith.constant 0 : index
    %4 = vector.load %arg3[%c0_3, %c0_4] : memref<1x128xf32, #tpu.memory_space<vmem>>, vector<1x128xf32>
    %5 = vector.broadcast %4 : vector<1x128xf32> to vector<128x128xf32>
    %6 = arith.addf %3, %5 : vector<128x128xf32>
    %cst = arith.constant 0.000000e+00 : f32
    %7 = vector.broadcast %cst : f32 to vector<128x128xf32>
    %8 = arith.maximumf %6, %7 : vector<128x128xf32>
    %c0_5 = arith.constant 0 : index
    %c0_6 = arith.constant 0 : index
    %9 = vector.load %arg4[%c0_5, %c0_6] : memref<128x128xf32, #tpu.memory_space<vmem>>, vector<128x128xf32>
    %cst_7 = arith.constant dense<0.000000e+00> : vector<128x128xf32>
    %10 = tpu.matmul %8, %9, %cst_7 {dimension_numbers = #tpu.dot_dimension_numbers<[1], [0], [0], [1], [0, 0, 1, 1], [], []>} : vector<128x128xf32>, vector<128x128xf32>, vector<128x128xf32> -> vector<128x128xf32>
    %c0_8 = arith.constant 0 : index
    %c0_9 = arith.constant 0 : index
    %11 = vector.load %arg5[%c0_8, %c0_9] : memref<128x128xf32, #tpu.memory_space<vmem>>, vector<128x128xf32>
    tpu.vector_store %arg5[%c0_8, %c0_9], %10 {strides = array<i32>} : memref<128x128xf32, #tpu.memory_space<vmem>>, vector<128x128xf32>,
    %cst_10 = arith.constant dense<0.000000e+00> : vector<128xf32>
    %12 = vector.multi_reduction <add>, %10, %cst_10 [0] : vector<128x128xf32> to vector<128xf32>
    %13 = vector.shape_cast %12 : vector<128xf32> to vector<1x128xf32>
    %c0_11 = arith.constant 0 : index
    %c0_12 = arith.constant 0 : index
    %c0_13 = arith.constant 0 : index
    %14 = vector.load %arg6[%c0_11, %c0_12, %c0_13] : memref<1x2x128xf32, #tpu.memory_space<vmem>>, vector<1x1x128xf32>
    %15 = vector.shape_cast %14 : vector<1x1x128xf32> to vector<1x128xf32>
    %16 = vector.shape_cast %13 : vector<1x128xf32> to vector<1x1x128xf32>
    tpu.vector_store %arg6[%c0_11, %c0_12, %c0_13], %16 {strides = array<i32>} : memref<1x2x128xf32, #tpu.memory_space<vmem>>, vector<1x1x128xf32>,
    %17 = arith.mulf %10, %10 : vector<128x128xf32>
    %cst_14 = arith.constant dense<0.000000e+00> : vector<128xf32>
    %18 = vector.multi_reduction <add>, %17, %cst_14 [0] : vector<128x128xf32> to vector<128xf32>
    %19 = vector.shape_cast %18 : vector<128xf32> to vector<1x128xf32>
    %c0_15 = arith.constant 0 : index
    %c1 = arith.constant 1 : index
    %c0_16 = arith.constant 0 : index
    %20 = vector.load %arg6[%c0_15, %c1, %c0_16] : memref<1x2x128xf32, #tpu.memory_space<vmem>>, vector<1x1x128xf32>
    %21 = vector.shape_cast %20 : vector<1x1x128xf32> to vector<1x128xf32>
    %22 = vector.shape_cast %19 : vector<1x128xf32> to vector<1x1x128xf32>
    tpu.vector_store %arg6[%c0_15, %c1, %c0_16], %22 {strides = array<i32>} : memref<1x2x128xf32, #tpu.memory_space<vmem>>, vector<1x1x128xf32>,
    return
  }
  func.func @transform_0(%arg0: i32) -> (i32, i32) {
    %c0_i32 = arith.constant 0 : i32
    %c0_i32_0 = arith.constant 0 : i32
    return %arg0, %c0_i32 : i32, i32
  }
  func.func @transform_1(%arg0: i32) -> (i32, i32) {
    %c0_i32 = arith.constant 0 : i32
    %c0_i32_0 = arith.constant 0 : i32
    %c0_i32_1 = arith.constant 0 : i32
    return %c0_i32, %c0_i32_0 : i32, i32
  }
  func.func @transform_2(%arg0: i32) -> (i32, i32) {
    %c0_i32 = arith.constant 0 : i32
    %c0_i32_0 = arith.constant 0 : i32
    %c0_i32_1 = arith.constant 0 : i32
    return %c0_i32, %c0_i32_0 : i32, i32
  }
  func.func @transform_3(%arg0: i32) -> (i32, i32) {
    %c0_i32 = arith.constant 0 : i32
    %c0_i32_0 = arith.constant 0 : i32
    %c0_i32_1 = arith.constant 0 : i32
    return %c0_i32, %c0_i32_0 : i32, i32
  }
  func.func @transform_4(%arg0: i32) -> (i32, i32) {
    %c0_i32 = arith.constant 0 : i32
    %c0_i32_0 = arith.constant 0 : i32
    return %arg0, %c0_i32 : i32, i32
  }
  func.func @transform_5(%arg0: i32) -> (i32, i32, i32) {
    %c0_i32 = arith.constant 0 : i32
    %c0_i32_0 = arith.constant 0 : i32
    %c0_i32_1 = arith.constant 0 : i32
    return %arg0, %c0_i32, %c0_i32_0 : i32, i32, i32
  }
}

module attributes {stable_mosaic.version = 11 : i64} {
  func.func @_bn_add_relu_kernel(%arg0: i32, %arg1: memref<128x128xf32, #tpu.memory_space<vmem>>, %arg2: memref<1x128xf32, #tpu.memory_space<vmem>>, %arg3: memref<1x128xf32, #tpu.memory_space<vmem>>, %arg4: memref<128x128xf32, #tpu.memory_space<vmem>>, %arg5: memref<128x128xf32, #tpu.memory_space<vmem>>) attributes {dimension_semantics = [#tpu.dimension_semantics<parallel>], iteration_bounds = array<i64: 1>, scalar_prefetch = 0 : i64, scratch_operands = 0 : i64, tpu.core_type = #tpu.core_type<tc>, window_params = [{transform_indices = @transform_0, window_bounds = array<i64: 128, 128>}, {pipeline_mode = #tpu.pipeline_mode<synchronous>, transform_indices = @transform_1, window_bounds = array<i64: 1, 128>}, {pipeline_mode = #tpu.pipeline_mode<synchronous>, transform_indices = @transform_2, window_bounds = array<i64: 1, 128>}, {transform_indices = @transform_3, window_bounds = array<i64: 128, 128>}, {transform_indices = @transform_4, window_bounds = array<i64: 128, 128>}]} {
    %c0 = arith.constant 0 : index
    %c0_0 = arith.constant 0 : index
    %0 = vector.load %arg1[%c0, %c0_0] : memref<128x128xf32, #tpu.memory_space<vmem>>, vector<128x128xf32>
    %c0_1 = arith.constant 0 : index
    %c0_2 = arith.constant 0 : index
    %1 = vector.load %arg2[%c0_1, %c0_2] : memref<1x128xf32, #tpu.memory_space<vmem>>, vector<1x128xf32>
    %2 = vector.broadcast %1 : vector<1x128xf32> to vector<128x128xf32>
    %3 = arith.mulf %0, %2 : vector<128x128xf32>
    %c0_3 = arith.constant 0 : index
    %c0_4 = arith.constant 0 : index
    %4 = vector.load %arg3[%c0_3, %c0_4] : memref<1x128xf32, #tpu.memory_space<vmem>>, vector<1x128xf32>
    %5 = vector.broadcast %4 : vector<1x128xf32> to vector<128x128xf32>
    %6 = arith.addf %3, %5 : vector<128x128xf32>
    %c0_5 = arith.constant 0 : index
    %c0_6 = arith.constant 0 : index
    %7 = vector.load %arg4[%c0_5, %c0_6] : memref<128x128xf32, #tpu.memory_space<vmem>>, vector<128x128xf32>
    %8 = arith.addf %6, %7 : vector<128x128xf32>
    %cst = arith.constant 0.000000e+00 : f32
    %9 = vector.broadcast %cst : f32 to vector<128x128xf32>
    %10 = arith.maximumf %8, %9 : vector<128x128xf32>
    %c0_7 = arith.constant 0 : index
    %c0_8 = arith.constant 0 : index
    %11 = vector.load %arg5[%c0_7, %c0_8] : memref<128x128xf32, #tpu.memory_space<vmem>>, vector<128x128xf32>
    tpu.vector_store %arg5[%c0_7, %c0_8], %10 {strides = array<i32>} : memref<128x128xf32, #tpu.memory_space<vmem>>, vector<128x128xf32>,
    return
  }
  func.func @transform_0(%arg0: i32) -> (i32, i32) {
    %c0_i32 = arith.constant 0 : i32
    %c0_i32_0 = arith.constant 0 : i32
    return %arg0, %c0_i32 : i32, i32
  }
  func.func @transform_1(%arg0: i32) -> (i32, i32) {
    %c0_i32 = arith.constant 0 : i32
    %c0_i32_0 = arith.constant 0 : i32
    %c0_i32_1 = arith.constant 0 : i32
    return %c0_i32, %c0_i32_0 : i32, i32
  }
  func.func @transform_2(%arg0: i32) -> (i32, i32) {
    %c0_i32 = arith.constant 0 : i32
    %c0_i32_0 = arith.constant 0 : i32
    %c0_i32_1 = arith.constant 0 : i32
    return %c0_i32, %c0_i32_0 : i32, i32
  }
  func.func @transform_3(%arg0: i32) -> (i32, i32) {
    %c0_i32 = arith.constant 0 : i32
    %c0_i32_0 = arith.constant 0 : i32
    return %arg0, %c0_i32 : i32, i32
  }
  func.func @transform_4(%arg0: i32) -> (i32, i32) {
    %c0_i32 = arith.constant 0 : i32
    %c0_i32_0 = arith.constant 0 : i32
    return %arg0, %c0_i32 : i32, i32
  }
}

</mosaic_0001>

<llo_original>
// kernel: bottleneck_pallas.4
$region0: #{bottleneck_pallas.4}
  #allocation0 [shape = 'u32[]', space=smem, size = 0x4, offset = 0x4, fixed_abs, tag = 'smem constant byte address 0x4 - core index']
  #allocation1 [shape = 'u32[144,128]{1,0:T(1,128)}', space=vmem, size = 0x12000, scoped, tag = 'internal scratch']
  %s0 = inlined_call_operand.vmem [shape: f32[128,128], index: 0, kind: input, shape index: {}]
  %s1 = inlined_call_operand.vmem [shape: f32[128,128], index: 1, kind: input, shape index: {}]
  %s2 = inlined_call_operand.vmem [shape: f32[128,128], index: 2, kind: output, shape index: {0}]
  %s3 = inlined_call_operand.vmem [shape: f32[1,2,128], index: 3, kind: output, shape index: {1}]
  %4 = xla_tuple %s2, %s3
  %s5 = sld [smem:[#allocation0]]
  $region26: #{bottleneck_pallas.4} parent=0
    _
  %s7 = ssub.s32 1, %s5
  %s8 = scalar_select 0, %s7, %s5
  // Predicated region
  $region2: #{bottleneck_pallas.4} parent=0 // pred_check
    _
  $region3: #{bottleneck_pallas.4} parent=0 // pred_check_branch
    %10 = sbr.rel (0) target = $region5
  $region4: #{bottleneck_pallas.4} parent=0 // pred_region
    _
  $region5: #{bottleneck_pallas.4} parent=0 // pred_fallthru
    _
  // Predicated region
  $region6: #{bottleneck_pallas.4} parent=0 // pred_check
    _
  $region7: #{bottleneck_pallas.4} parent=0 // pred_check_branch
    %12 = sbr.rel (0) target = $region9
  $region8: #{bottleneck_pallas.4} parent=0 // pred_region
    _
  $region9: #{bottleneck_pallas.4} parent=0 // pred_fallthru
    _
  %v13 = vld [vmem:[%s0] sm:$0xff]
  %v14 = vld [vmem:[%s0 + $0x8] sm:$0xff]
  %v15 = vld [vmem:[%s0 + $0x10] sm:$0xff]
  %v16 = vld [vmem:[%s0 + $0x18] sm:$0xff]
  %v17 = vld [vmem:[%s0 + $0x20] sm:$0xff]
  %v18 = vld [vmem:[%s0 + $0x28] sm:$0xff]
  %v19 = vld [vmem:[%s0 + $0x30] sm:$0xff]
  %v20 = vld [vmem:[%s0 + $0x38] sm:$0xff]
  %v21 = vld [vmem:[%s0 + $0x40] sm:$0xff]
  %v22 = vld [vmem:[%s0 + $0x48] sm:$0xff]
  %v23 = vld [vmem:[%s0 + $0x50] sm:$0xff]
  %v24 = vld [vmem:[%s0 + $0x58] sm:$0xff]
  %v25 = vld [vmem:[%s0 + $0x60] sm:$0xff]
  %v26 = vld [vmem:[%s0 + $0x68] sm:$0xff]
  %v27 = vld [vmem:[%s0 + $0x70] sm:$0xff]
  %v28 = vld [vmem:[%s0 + $0x78] sm:$0xff]
  %v29 = vld [vmem:[%s1] sm:$0xff]
  %v30 = vld [vmem:[%s1 + $0x8] sm:$0xff]
  %v31 = vld [vmem:[%s1 + $0x10] sm:$0xff]
  %v32 = vld [vmem:[%s1 + $0x18] sm:$0xff]
  %v33 = vld [vmem:[%s1 + $0x20] sm:$0xff]
  %v34 = vld [vmem:[%s1 + $0x28] sm:$0xff]
  %v35 = vld [vmem:[%s1 + $0x30] sm:$0xff]
  %v36 = vld [vmem:[%s1 + $0x38] sm:$0xff]
  %v37 = vld [vmem:[%s1 + $0x40] sm:$0xff]
  %v38 = vld [vmem:[%s1 + $0x48] sm:$0xff]
  %v39 = vld [vmem:[%s1 + $0x50] sm:$0xff]
  %v40 = vld [vmem:[%s1 + $0x58] sm:$0xff]
  %v41 = vld [vmem:[%s1 + $0x60] sm:$0xff]
  %v42 = vld [vmem:[%s1 + $0x68] sm:$0xff]
  %v43 = vld [vmem:[%s1 + $0x70] sm:$0xff]
  %v44 = vld [vmem:[%s1 + $0x78] sm:$0xff]
  %45 = vmatprep.subr.mxu0 0.0
  %46 = vmatpush1.msra.mxu0 %v44
  %47 = vmatprep.subr.mxu0 0.0
  %48 = vmatpush1.msra.mxu0 %v43
  %49 = vmatprep.subr.mxu0 0.0
  %50 = vmatpush1.msra.mxu0 %v42
  %51 = vmatprep.subr.mxu0 0.0
  %52 = vmatpush1.msra.mxu0 %v41
  %53 = vmatprep.subr.mxu0 0.0
  %54 = vmatpush1.msra.mxu0 %v40
  %55 = vmatprep.subr.mxu0 0.0
  %56 = vmatpush1.msra.mxu0 %v39
  %57 = vmatprep.subr.mxu0 0.0
  %58 = vmatpush1.msra.mxu0 %v38
  %59 = vmatprep.subr.mxu0 0.0
  %60 = vmatpush1.msra.mxu0 %v37
  %61 = vmatprep.subr.mxu0 0.0
  %62 = vmatpush1.msra.mxu0 %v36
  %63 = vmatprep.subr.mxu0 0.0
  %64 = vmatpush1.msra.mxu0 %v35
  %65 = vmatprep.subr.mxu0 0.0
  %66 = vmatpush1.msra.mxu0 %v34
  %67 = vmatprep.subr.mxu0 0.0
  %68 = vmatpush1.msra.mxu0 %v33
  %69 = vmatprep.subr.mxu0 0.0
  %70 = vmatpush1.msra.mxu0 %v32
  %71 = vmatprep.subr.mxu0 0.0
  %72 = vmatpush1.msra.mxu0 %v31
  %73 = vmatprep.subr.mxu0 0.0
  %74 = vmatpush1.msra.mxu0 %v30
  %75 = vmatprep.subr.mxu0 0.0
  %76 = vmatpush1.msra.mxu0 %v29
  %77 = vmatprep.subr.mxu0 0.0
  %78 = vmatpush2.msra.mxu0 0.0
  %79 = vmatprep.subr.mxu0 0.0
  %80 = vmatpush2.msra.mxu0 0.0
  %81 = vmatprep.subr.mxu0 0.0
  %82 = vmatpush2.msra.mxu0 0.0
  %83 = vmatprep.subr.mxu0 0.0
  %84 = vmatpush2.msra.mxu0 0.0
  %85 = vmatprep.subr.mxu0 0.0
  %86 = vmatpush2.msra.mxu0 0.0
  %87 = vmatprep.subr.mxu0 0.0
  %88 = vmatpush2.msra.mxu0 0.0
  %89 = vmatprep.subr.mxu0 0.0
  %90 = vmatpush2.msra.mxu0 0.0
  %91 = vmatprep.subr.mxu0 0.0
  %92 = vmatpush2.msra.mxu0 0.0
  %93 = vmatprep.subr.mxu0 0.0
  %94 = vmatpush2.msra.mxu0 0.0
  %95 = vmatprep.subr.mxu0 0.0
  %96 = vmatpush2.msra.mxu0 0.0
  %97 = vmatprep.subr.mxu0 0.0
  %98 = vmatpush2.msra.mxu0 0.0
  %99 = vmatprep.subr.mxu0 0.0
  %100 = vmatpush2.msra.mxu0 0.0
  %101 = vmatprep.subr.mxu0 0.0
  %102 = vmatpush2.msra.mxu0 0.0
  %103 = vmatprep.subr.mxu0 0.0
  %104 = vmatpush2.msra.mxu0 0.0
  %105 = vmatprep.subr.mxu0 0.0
  %106 = vmatpush2.msra.mxu0 0.0
  %107 = vmatprep.subr.mxu0 0.0
  %108 = vmatpush2.msra.mxu0 0.0
  %109 = vmatprep.mubr.f32.mxu0 0.0
  %110 = vmatmul.mubr.f32.gmra.mxu0 %v13
  %v111 = vpop.f32.mrf.mxu0
  %v112 = vadd.f32 0.0, %v111
  %v113 = vpop.f32.mrf.mxu0
  %114 = vmatprep.mubr.f32.mxu0 0.0
  %115 = vmatmul.mubr.f32.gmra.mxu0 %v14
  %v116 = vpop.f32.mrf.mxu0
  %v117 = vadd.f32 0.0, %v116
  %v118 = vpop.f32.mrf.mxu0
  %119 = vmatprep.mubr.f32.mxu0 0.0
  %120 = vmatmul.mubr.f32.gmra.mxu0 %v15
  %v121 = vpop.f32.mrf.mxu0
  %v122 = vadd.f32 0.0, %v121
  %v123 = vpop.f32.mrf.mxu0
  %124 = vmatprep.mubr.f32.mxu0 0.0
  %125 = vmatmul.mubr.f32.gmra.mxu0 %v16
  %v126 = vpop.f32.mrf.mxu0
  %v127 = vadd.f32 0.0, %v126
  %v128 = vpop.f32.mrf.mxu0
  %129 = vmatprep.mubr.f32.mxu0 0.0
  %130 = vmatmul.mubr.f32.gmra.mxu0 %v17
  %v131 = vpop.f32.mrf.mxu0
  %v132 = vadd.f32 0.0, %v131
  %v133 = vpop.f32.mrf.mxu0
  %134 = vmatprep.mubr.f32.mxu0 0.0
  %135 = vmatmul.mubr.f32.gmra.mxu0 %v18
  %v136 = vpop.f32.mrf.mxu0
  %v137 = vadd.f32 0.0, %v136
  %v138 = vpop.f32.mrf.mxu0
  %139 = vmatprep.mubr.f32.mxu0 0.0
  %140 = vmatmul.mubr.f32.gmra.mxu0 %v19
  %v141 = vpop.f32.mrf.mxu0
  %v142 = vadd.f32 0.0, %v141
  %v143 = vpop.f32.mrf.mxu0
  %144 = vmatprep.mubr.f32.mxu0 0.0
  %145 = vmatmul.mubr.f32.gmra.mxu0 %v20
  %v146 = vpop.f32.mrf.mxu0
  %v147 = vadd.f32 0.0, %v146
  %v148 = vpop.f32.mrf.mxu0
  %149 = vmatprep.mubr.f32.mxu0 0.0
  %150 = vmatmul.mubr.f32.gmra.mxu0 %v21
  %v151 = vpop.f32.mrf.mxu0
  %v152 = vadd.f32 0.0, %v151
  %v153 = vpop.f32.mrf.mxu0
  %154 = vmatprep.mubr.f32.mxu0 0.0
  %155 = vmatmul.mubr.f32.gmra.mxu0 %v22
  %v156 = vpop.f32.mrf.mxu0
  %v157 = vadd.f32 0.0, %v156
  %v158 = vpop.f32.mrf.mxu0
  %159 = vmatprep.mubr.f32.mxu0 0.0
  %160 = vmatmul.mubr.f32.gmra.mxu0 %v23
  %v161 = vpop.f32.mrf.mxu0
  %v162 = vadd.f32 0.0, %v161
  %v163 = vpop.f32.mrf.mxu0
  %164 = vmatprep.mubr.f32.mxu0 0.0
  %165 = vmatmul.mubr.f32.gmra.mxu0 %v24
  %v166 = vpop.f32.mrf.mxu0
  %v167 = vadd.f32 0.0, %v166
  %v168 = vpop.f32.mrf.mxu0
  %169 = vmatprep.mubr.f32.mxu0 0.0
  %170 = vmatmul.mubr.f32.gmra.mxu0 %v25
  %v171 = vpop.f32.mrf.mxu0
  %v172 = vadd.f32 0.0, %v171
  %v173 = vpop.f32.mrf.mxu0
  %174 = vmatprep.mubr.f32.mxu0 0.0
  %175 = vmatmul.mubr.f32.gmra.mxu0 %v26
  %v176 = vpop.f32.mrf.mxu0
  %v177 = vadd.f32 0.0, %v176
  %v178 = vpop.f32.mrf.mxu0
  %179 = vmatprep.mubr.f32.mxu0 0.0
  %180 = vmatmul.mubr.f32.gmra.mxu0 %v27
  %v181 = vpop.f32.mrf.mxu0
  %v182 = vadd.f32 0.0, %v181
  %v183 = vpop.f32.mrf.mxu0
  %184 = vmatprep.mubr.f32.mxu0 0.0
  %185 = vmatmul.mubr.f32.gmra.mxu0 %v28
  %v186 = vpop.f32.mrf.mxu0
  %v187 = vadd.f32 0.0, %v186
  %v188 = vpop.f32.mrf.mxu0
  %189 = vdwg.mxu0
  %190 = vst [vmem:[%s2] sm:$0xff] %v112
  %191 = vst [vmem:[%s2 + $0x8] sm:$0xff] %v117
  %192 = vst [vmem:[%s2 + $0x10] sm:$0xff] %v122
  %193 = vst [vmem:[%s2 + $0x18] sm:$0xff] %v127
  %194 = vst [vmem:[%s2 + $0x20] sm:$0xff] %v132
  %195 = vst [vmem:[%s2 + $0x28] sm:$0xff] %v137
  %196 = vst [vmem:[%s2 + $0x30] sm:$0xff] %v142
  %197 = vst [vmem:[%s2 + $0x38] sm:$0xff] %v147
  %198 = vst [vmem:[%s2 + $0x40] sm:$0xff] %v152
  %199 = vst [vmem:[%s2 + $0x48] sm:$0xff] %v157
  %200 = vst [vmem:[%s2 + $0x50] sm:$0xff] %v162
  %201 = vst [vmem:[%s2 + $0x58] sm:$0xff] %v167
  %202 = vst [vmem:[%s2 + $0x60] sm:$0xff] %v172
  %203 = vst [vmem:[%s2 + $0x68] sm:$0xff] %v177
  %204 = vst [vmem:[%s2 + $0x70] sm:$0xff] %v182
  %205 = vst [vmem:[%s2 + $0x78] sm:$0xff] %v187
  %v206 = vadd.f32 %v112, %v117
  %v207 = vadd.f32 %v206, %v122
  %v208 = vadd.f32 %v207, %v127
  %v209 = vadd.f32 %v208, %v132
  %v210 = vadd.f32 %v209, %v137
  %v211 = vadd.f32 %v210, %v142
  %v212 = vadd.f32 %v211, %v147
  %v213 = vadd.f32 %v212, %v152
  %v214 = vadd.f32 %v213, %v157
  %v215 = vadd.f32 %v214, %v162
  %v216 = vadd.f32 %v215, %v167
  %v217 = vadd.f32 %v216, %v172
  %v218 = vadd.f32 %v217, %v177
  %v219 = vadd.f32 %v218, %v182
  %v220 = vadd.f32 %v219, %v187
  %v221 = vrot.slane %v220, 4
  %v222 = vadd.f32 %v220, %v221
  %v223 = vrot.slane %v222, 2
  %v224 = vadd.f32 %v222, %v223
  %v225 = vrot.slane %v224, 1
  %v226 = vadd.f32 %v224, %v225
  %227 = vst [vmem:[%s3] sm:$0x1] %v226
  %v228 = vmul.f32 %v112, %v112
  %v229 = vmul.f32 %v117, %v117
  %v230 = vmul.f32 %v122, %v122
  %v231 = vmul.f32 %v127, %v127
  %v232 = vmul.f32 %v132, %v132
  %v233 = vmul.f32 %v137, %v137
  %v234 = vmul.f32 %v142, %v142
  %v235 = vmul.f32 %v147, %v147
  %v236 = vmul.f32 %v152, %v152
  %v237 = vmul.f32 %v157, %v157
  %v238 = vmul.f32 %v162, %v162
  %v239 = vmul.f32 %v167, %v167
  %v240 = vmul.f32 %v172, %v172
  %v241 = vmul.f32 %v177, %v177
  %v242 = vmul.f32 %v182, %v182
  %v243 = vmul.f32 %v187, %v187
  %v244 = vadd.f32 %v228, %v229
  %v245 = vadd.f32 %v244, %v230
  %v246 = vadd.f32 %v245, %v231
  %v247 = vadd.f32 %v246, %v232
  %v248 = vadd.f32 %v247, %v233
  %v249 = vadd.f32 %v248, %v234
  %v250 = vadd.f32 %v249, %v235
  %v251 = vadd.f32 %v250, %v236
  %v252 = vadd.f32 %v251, %v237
  %v253 = vadd.f32 %v252, %v238
  %v254 = vadd.f32 %v253, %v239
  %v255 = vadd.f32 %v254, %v240
  %v256 = vadd.f32 %v255, %v241
  %v257 = vadd.f32 %v256, %v242
  %v258 = vadd.f32 %v257, %v243
  %v259 = vrot.slane %v258, 4
  %v260 = vadd.f32 %v258, %v259
  %v261 = vrot.slane %v260, 2
  %v262 = vadd.f32 %v260, %v261
  %v263 = vrot.slane %v262, 1
  %v264 = vadd.f32 %v262, %v263
  %265 = vst [vmem:[%s3 + $0x1] sm:$0x1] %v264
  // Predicated region
  $region10: #{bottleneck_pallas.4} parent=0 // pred_check
    _
  $region11: #{bottleneck_pallas.4} parent=0 // pred_check_branch
    %267 = sbr.rel (0) target = $region13
  $region12: #{bottleneck_pallas.4} parent=0 // pred_region
    _
  $region13: #{bottleneck_pallas.4} parent=0 // pred_fallthru
    _
  // Predicated region
  $region14: #{bottleneck_pallas.4} parent=0 // pred_check
    _
  $region15: #{bottleneck_pallas.4} parent=0 // pred_check_branch
    %269 = sbr.rel (0) target = $region17
  $region16: #{bottleneck_pallas.4} parent=0 // pred_region
    _
  $region17: #{bottleneck_pallas.4} parent=0 // pred_fallthru
    _
  // Predicated region
  $region18: #{bottleneck_pallas.4} parent=0 // pred_check
    _
  $region19: #{bottleneck_pallas.4} parent=0 // pred_check_branch
    %271 = sbr.rel (0) target = $region21
  $region20: #{bottleneck_pallas.4} parent=0 // pred_region
    _
  $region21: #{bottleneck_pallas.4} parent=0 // pred_fallthru
    _
  // Predicated region
  $region22: #{bottleneck_pallas.4} parent=0 // pred_check
    _
  $region23: #{bottleneck_pallas.4} parent=0 // pred_check_branch
    %273 = sbr.rel (0) target = $region25
  $region24: #{bottleneck_pallas.4} parent=0 // pred_region
    _
  $region25: #{bottleneck_pallas.4} parent=0 // pred_fallthru
    _

// kernel: bottleneck_pallas.7
$region0: #{bottleneck_pallas.7}
  #allocation0 [shape = 'u32[]', space=smem, size = 0x4, offset = 0x4, fixed_abs, tag = 'smem constant byte address 0x4 - core index']
  #allocation1 [shape = 'u32[144,128]{1,0:T(1,128)}', space=vmem, size = 0x12000, scoped, tag = 'internal scratch']
  %s0 = inlined_call_operand.vmem [shape: f32[128,128], index: 0, kind: input, shape index: {}]
  %s1 = inlined_call_operand.vmem [shape: f32[1,128], index: 1, kind: input, shape index: {}]
  %s2 = inlined_call_operand.vmem [shape: f32[1,128], index: 2, kind: input, shape index: {}]
  %s3 = inlined_call_operand.vmem [shape: f32[128,128], index: 3, kind: input, shape index: {}]
  %s4 = inlined_call_operand.hbm [shape: f32[128,128], index: 4, kind: output, shape index: {}]
  %s5 = sld [smem:[#allocation0]]
  $region26: #{bottleneck_pallas.7} parent=0
    _
  %s7 = ssub.s32 1, %s5
  %s8 = scalar_select 0, %s7, %s5
  $region1: #{bottleneck_pallas.7} parent=0
    #allocation2 [shape = 'u8[65536]{0}', space=vmem, size = 0x10000, scoped, tag = 'output window, operand 0, single buffered']
    #allocation3 [shape = 's32[1]{0}', space=sflag, size = 0x4, scoped, tag = 'scoped memory for bottleneck_pallas.7']
    %9 = vsyncpa [#allocation3], 0
    // Predicated region
    $region2: #{bottleneck_pallas.7} parent=1 // pred_check
      _
    $region3: #{bottleneck_pallas.7} parent=1 // pred_check_branch
      %11 = sbr.rel (0) target = $region5
    $region4: #{bottleneck_pallas.7} parent=1 // pred_region
      _
    $region5: #{bottleneck_pallas.7} parent=1 // pred_fallthru
      _
    // Predicated region
    $region6: #{bottleneck_pallas.7} parent=1 // pred_check
      _
    $region7: #{bottleneck_pallas.7} parent=1 // pred_check_branch
      %13 = sbr.rel (0) target = $region9
    $region8: #{bottleneck_pallas.7} parent=1 // pred_region
      _
    $region9: #{bottleneck_pallas.7} parent=1 // pred_fallthru
      _
    // Predicated region
    $region10: #{bottleneck_pallas.7} parent=1 // pred_check
      _
    $region11: #{bottleneck_pallas.7} parent=1 // pred_check_branch
      %15 = sbr.rel (0) target = $region13
    $region12: #{bottleneck_pallas.7} parent=1 // pred_region
      _
    $region13: #{bottleneck_pallas.7} parent=1 // pred_fallthru
      _
    // Predicated region
    $region14: #{bottleneck_pallas.7} parent=1 // pred_check
      _
    $region15: #{bottleneck_pallas.7} parent=1 // pred_check_branch
      %17 = sbr.rel (0) target = $region17
    $region16: #{bottleneck_pallas.7} parent=1 // pred_region
      _
    $region17: #{bottleneck_pallas.7} parent=1 // pred_fallthru
      _
    %v18 = vld [vmem:[%s0] sm:$0xff]
    %v19 = vld [vmem:[%s0 + $0x8] sm:$0xff]
    %v20 = vld [vmem:[%s0 + $0x10] sm:$0xff]
    %v21 = vld [vmem:[%s0 + $0x18] sm:$0xff]
    %v22 = vld [vmem:[%s0 + $0x20] sm:$0xff]
    %v23 = vld [vmem:[%s0 + $0x28] sm:$0xff]
    %v24 = vld [vmem:[%s0 + $0x30] sm:$0xff]
    %v25 = vld [vmem:[%s0 + $0x38] sm:$0xff]
    %v26 = vld [vmem:[%s0 + $0x40] sm:$0xff]
    %v27 = vld [vmem:[%s0 + $0x48] sm:$0xff]
    %v28 = vld [vmem:[%s0 + $0x50] sm:$0xff]
    %v29 = vld [vmem:[%s0 + $0x58] sm:$0xff]
    %v30 = vld [vmem:[%s0 + $0x60] sm:$0xff]
    %v31 = vld [vmem:[%s0 + $0x68] sm:$0xff]
    %v32 = vld [vmem:[%s0 + $0x70] sm:$0xff]
    %v33 = vld [vmem:[%s0 + $0x78] sm:$0xff]
    %v34 = vld [vmem:[%s1] sm:$0x1]
    %v36 = vlaneseq
    %v37 = vshrl.u32 %v36, 7
    %v38 = vsub.s32 0, %v37
    %v39 = vrot.slane %v34, %v38
    %v41 = vmul.f32 %v18, %v39
    %v42 = vmul.f32 %v19, %v39
    %v43 = vmul.f32 %v20, %v39
    %v44 = vmul.f32 %v21, %v39
    %v45 = vmul.f32 %v22, %v39
    %v46 = vmul.f32 %v23, %v39
    %v47 = vmul.f32 %v24, %v39
    %v48 = vmul.f32 %v25, %v39
    %v49 = vmul.f32 %v26, %v39
    %v50 = vmul.f32 %v27, %v39
    %v51 = vmul.f32 %v28, %v39
    %v52 = vmul.f32 %v29, %v39
    %v53 = vmul.f32 %v30, %v39
    %v54 = vmul.f32 %v31, %v39
    %v55 = vmul.f32 %v32, %v39
    %v56 = vmul.f32 %v33, %v39
    %v57 = vld [vmem:[%s2] sm:$0x1]
    %v59 = vlaneseq
    %v60 = vshrl.u32 %v59, 7
    %v61 = vsub.s32 0, %v60
    %v62 = vrot.slane %v57, %v61
    %v64 = vadd.f32 %v41, %v62
    %v65 = vadd.f32 %v42, %v62
    %v66 = vadd.f32 %v43, %v62
    %v67 = vadd.f32 %v44, %v62
    %v68 = vadd.f32 %v45, %v62
    %v69 = vadd.f32 %v46, %v62
    %v70 = vadd.f32 %v47, %v62
    %v71 = vadd.f32 %v48, %v62
    %v72 = vadd.f32 %v49, %v62
    %v73 = vadd.f32 %v50, %v62
    %v74 = vadd.f32 %v51, %v62
    %v75 = vadd.f32 %v52, %v62
    %v76 = vadd.f32 %v53, %v62
    %v77 = vadd.f32 %v54, %v62
    %v78 = vadd.f32 %v55, %v62
    %v79 = vadd.f32 %v56, %v62
    %v80 = vld [vmem:[%s3] sm:$0xff]
    %v81 = vld [vmem:[%s3 + $0x8] sm:$0xff]
    %v82 = vld [vmem:[%s3 + $0x10] sm:$0xff]
    %v83 = vld [vmem:[%s3 + $0x18] sm:$0xff]
    %v84 = vld [vmem:[%s3 + $0x20] sm:$0xff]
    %v85 = vld [vmem:[%s3 + $0x28] sm:$0xff]
    %v86 = vld [vmem:[%s3 + $0x30] sm:$0xff]
    %v87 = vld [vmem:[%s3 + $0x38] sm:$0xff]
    %v88 = vld [vmem:[%s3 + $0x40] sm:$0xff]
    %v89 = vld [vmem:[%s3 + $0x48] sm:$0xff]
    %v90 = vld [vmem:[%s3 + $0x50] sm:$0xff]
    %v91 = vld [vmem:[%s3 + $0x58] sm:$0xff]
    %v92 = vld [vmem:[%s3 + $0x60] sm:$0xff]
    %v93 = vld [vmem:[%s3 + $0x68] sm:$0xff]
    %v94 = vld [vmem:[%s3 + $0x70] sm:$0xff]
    %v95 = vld [vmem:[%s3 + $0x78] sm:$0xff]
    %v96 = vadd.f32 %v64, %v80
    %v97 = vadd.f32 %v65, %v81
    %v98 = vadd.f32 %v66, %v82
    %v99 = vadd.f32 %v67, %v83
    %v100 = vadd.f32 %v68, %v84
    %v101 = vadd.f32 %v69, %v85
    %v102 = vadd.f32 %v70, %v86
    %v103 = vadd.f32 %v71, %v87
    %v104 = vadd.f32 %v72, %v88
    %v105 = vadd.f32 %v73, %v89
    %v106 = vadd.f32 %v74, %v90
    %v107 = vadd.f32 %v75, %v91
    %v108 = vadd.f32 %v76, %v92
    %v109 = vadd.f32 %v77, %v93
    %v110 = vadd.f32 %v78, %v94
    %v111 = vadd.f32 %v79, %v95
    %v112 = vmax.f32 %v96, 0.0
    %v113 = vmax.f32 %v97, 0.0
    %v114 = vmax.f32 %v98, 0.0
    %v115 = vmax.f32 %v99, 0.0
    %v116 = vmax.f32 %v100, 0.0
    %v117 = vmax.f32 %v101, 0.0
    %v118 = vmax.f32 %v102, 0.0
    %v119 = vmax.f32 %v103, 0.0
    %v120 = vmax.f32 %v104, 0.0
    %v121 = vmax.f32 %v105, 0.0
    %v122 = vmax.f32 %v106, 0.0
    %v123 = vmax.f32 %v107, 0.0
    %v124 = vmax.f32 %v108, 0.0
    %v125 = vmax.f32 %v109, 0.0
    %v126 = vmax.f32 %v110, 0.0
    %v127 = vmax.f32 %v111, 0.0
    %128 = vst [vmem:[#allocation2] sm:$0xff] %v112
    %129 = vst [vmem:[#allocation2 + $0x8] sm:$0xff] %v113
    %130 = vst [vmem:[#allocation2 + $0x10] sm:$0xff] %v114
    %131 = vst [vmem:[#allocation2 + $0x18] sm:$0xff] %v115
    %132 = vst [vmem:[#allocation2 + $0x20] sm:$0xff] %v116
    %133 = vst [vmem:[#allocation2 + $0x28] sm:$0xff] %v117
    %134 = vst [vmem:[#allocation2 + $0x30] sm:$0xff] %v118
    %135 = vst [vmem:[#allocation2 + $0x38] sm:$0xff] %v119
    %136 = vst [vmem:[#allocation2 + $0x40] sm:$0xff] %v120
    %137 = vst [vmem:[#allocation2 + $0x48] sm:$0xff] %v121
    %138 = vst [vmem:[#allocation2 + $0x50] sm:$0xff] %v122
    %139 = vst [vmem:[#allocation2 + $0x58] sm:$0xff] %v123
    %140 = vst [vmem:[#allocation2 + $0x60] sm:$0xff] %v124
    %141 = vst [vmem:[#allocation2 + $0x68] sm:$0xff] %v125
    %142 = vst [vmem:[#allocation2 + $0x70] sm:$0xff] %v126
    %143 = vst [vmem:[#allocation2 + $0x78] sm:$0xff] %v127
    // Predicated region
    $region18: #{bottleneck_pallas.7} parent=1 // pred_check
      _
    $region19: #{bottleneck_pallas.7} parent=1 // pred_check_branch
      %145 = sbr.rel (0) target = $region21
    $region20: #{bottleneck_pallas.7} parent=1 // pred_region
      %s147 = ssub.s32 2048, 2048
      %148 = vsyncadd [#allocation3], %s147
      %s149 = sshll.u32 [#allocation2], 4
      %s150 = int_to_ptr.vmem [resolvable:$true] %s149
      %155 = dma.vmem_to_hbm [thread:$0]  %s150, 2048, %s4, [#allocation3], 128, 128, 8
    $region21: #{bottleneck_pallas.7} parent=1 // pred_fallthru
      _
    // Predicated region
    $region22: #{bottleneck_pallas.7} parent=1 // pred_check
      _
    $region23: #{bottleneck_pallas.7} parent=1 // pred_check_branch
      %157 = sbr.rel (0) target = $region25
    $region24: #{bottleneck_pallas.7} parent=1 // pred_region
      %158 = dma.done [#allocation3], 2048
    $region25: #{bottleneck_pallas.7} parent=1 // pred_fallthru
      _
    %159 = vsyncpa [#allocation3], 1

// kernel: bottleneck_pallas.6
$region0: #{bottleneck_pallas.6}
  #allocation0 [shape = 'u32[]', space=smem, size = 0x4, offset = 0x4, fixed_abs, tag = 'smem constant byte address 0x4 - core index']
  #allocation1 [shape = 'u32[144,128]{1,0:T(1,128)}', space=vmem, size = 0x12000, scoped, tag = 'internal scratch']
  %s0 = inlined_call_operand.vmem [shape: f32[128,128], index: 0, kind: input, shape index: {}]
  %s1 = inlined_call_operand.vmem [shape: f32[1,128], index: 1, kind: input, shape index: {}]
  %s2 = inlined_call_operand.vmem [shape: f32[1,128], index: 2, kind: input, shape index: {}]
  %s3 = inlined_call_operand.vmem [shape: f32[128,128], index: 3, kind: input, shape index: {}]
  %s4 = inlined_call_operand.vmem [shape: f32[128,128], index: 4, kind: output, shape index: {0}]
  %s5 = inlined_call_operand.vmem [shape: f32[1,2,128], index: 5, kind: output, shape index: {1}]
  %6 = xla_tuple %s4, %s5
  %s7 = sld [smem:[#allocation0]]
  $region34: #{bottleneck_pallas.6} parent=0
    _
  %s9 = ssub.s32 1, %s7
  %s10 = scalar_select 0, %s9, %s7
  // Predicated region
  $region2: #{bottleneck_pallas.6} parent=0 // pred_check
    _
  $region3: #{bottleneck_pallas.6} parent=0 // pred_check_branch
    %12 = sbr.rel (0) target = $region5
  $region4: #{bottleneck_pallas.6} parent=0 // pred_region
    _
  $region5: #{bottleneck_pallas.6} parent=0 // pred_fallthru
    _
  // Predicated region
  $region6: #{bottleneck_pallas.6} parent=0 // pred_check
    _
  $region7: #{bottleneck_pallas.6} parent=0 // pred_check_branch
    %14 = sbr.rel (0) target = $region9
  $region8: #{bottleneck_pallas.6} parent=0 // pred_region
    _
  $region9: #{bottleneck_pallas.6} parent=0 // pred_fallthru
    _
  // Predicated region
  $region10: #{bottleneck_pallas.6} parent=0 // pred_check
    _
  $region11: #{bottleneck_pallas.6} parent=0 // pred_check_branch
    %16 = sbr.rel (0) target = $region13
  $region12: #{bottleneck_pallas.6} parent=0 // pred_region
    _
  $region13: #{bottleneck_pallas.6} parent=0 // pred_fallthru
    _
  // Predicated region
  $region14: #{bottleneck_pallas.6} parent=0 // pred_check
    _
  $region15: #{bottleneck_pallas.6} parent=0 // pred_check_branch
    %18 = sbr.rel (0) target = $region17
  $region16: #{bottleneck_pallas.6} parent=0 // pred_region
    _
  $region17: #{bottleneck_pallas.6} parent=0 // pred_fallthru
    _
  %v19 = vld [vmem:[%s0] sm:$0xff]
  %v20 = vld [vmem:[%s0 + $0x8] sm:$0xff]
  %v21 = vld [vmem:[%s0 + $0x10] sm:$0xff]
  %v22 = vld [vmem:[%s0 + $0x18] sm:$0xff]
  %v23 = vld [vmem:[%s0 + $0x20] sm:$0xff]
  %v24 = vld [vmem:[%s0 + $0x28] sm:$0xff]
  %v25 = vld [vmem:[%s0 + $0x30] sm:$0xff]
  %v26 = vld [vmem:[%s0 + $0x38] sm:$0xff]
  %v27 = vld [vmem:[%s0 + $0x40] sm:$0xff]
  %v28 = vld [vmem:[%s0 + $0x48] sm:$0xff]
  %v29 = vld [vmem:[%s0 + $0x50] sm:$0xff]
  %v30 = vld [vmem:[%s0 + $0x58] sm:$0xff]
  %v31 = vld [vmem:[%s0 + $0x60] sm:$0xff]
  %v32 = vld [vmem:[%s0 + $0x68] sm:$0xff]
  %v33 = vld [vmem:[%s0 + $0x70] sm:$0xff]
  %v34 = vld [vmem:[%s0 + $0x78] sm:$0xff]
  %v35 = vld [vmem:[%s1] sm:$0x1]
  %v37 = vlaneseq
  %v38 = vshrl.u32 %v37, 7
  %v39 = vsub.s32 0, %v38
  %v40 = vrot.slane %v35, %v39
  %v42 = vmul.f32 %v19, %v40
  %v43 = vmul.f32 %v20, %v40
  %v44 = vmul.f32 %v21, %v40
  %v45 = vmul.f32 %v22, %v40
  %v46 = vmul.f32 %v23, %v40
  %v47 = vmul.f32 %v24, %v40
  %v48 = vmul.f32 %v25, %v40
  %v49 = vmul.f32 %v26, %v40
  %v50 = vmul.f32 %v27, %v40
  %v51 = vmul.f32 %v28, %v40
  %v52 = vmul.f32 %v29, %v40
  %v53 = vmul.f32 %v30, %v40
  %v54 = vmul.f32 %v31, %v40
  %v55 = vmul.f32 %v32, %v40
  %v56 = vmul.f32 %v33, %v40
  %v57 = vmul.f32 %v34, %v40
  %v58 = vld [vmem:[%s2] sm:$0x1]
  %v60 = vlaneseq
  %v61 = vshrl.u32 %v60, 7
  %v62 = vsub.s32 0, %v61
  %v63 = vrot.slane %v58, %v62
  %v65 = vadd.f32 %v42, %v63
  %v66 = vadd.f32 %v43, %v63
  %v67 = vadd.f32 %v44, %v63
  %v68 = vadd.f32 %v45, %v63
  %v69 = vadd.f32 %v46, %v63
  %v70 = vadd.f32 %v47, %v63
  %v71 = vadd.f32 %v48, %v63
  %v72 = vadd.f32 %v49, %v63
  %v73 = vadd.f32 %v50, %v63
  %v74 = vadd.f32 %v51, %v63
  %v75 = vadd.f32 %v52, %v63
  %v76 = vadd.f32 %v53, %v63
  %v77 = vadd.f32 %v54, %v63
  %v78 = vadd.f32 %v55, %v63
  %v79 = vadd.f32 %v56, %v63
  %v80 = vadd.f32 %v57, %v63
  %v81 = vmax.f32 %v65, 0.0
  %v82 = vmax.f32 %v66, 0.0
  %v83 = vmax.f32 %v67, 0.0
  %v84 = vmax.f32 %v68, 0.0
  %v85 = vmax.f32 %v69, 0.0
  %v86 = vmax.f32 %v70, 0.0
  %v87 = vmax.f32 %v71, 0.0
  %v88 = vmax.f32 %v72, 0.0
  %v89 = vmax.f32 %v73, 0.0
  %v90 = vmax.f32 %v74, 0.0
  %v91 = vmax.f32 %v75, 0.0
  %v92 = vmax.f32 %v76, 0.0
  %v93 = vmax.f32 %v77, 0.0
  %v94 = vmax.f32 %v78, 0.0
  %v95 = vmax.f32 %v79, 0.0
  %v96 = vmax.f32 %v80, 0.0
  %v97 = vld [vmem:[%s3] sm:$0xff]
  %v98 = vld [vmem:[%s3 + $0x8] sm:$0xff]
  %v99 = vld [vmem:[%s3 + $0x10] sm:$0xff]
  %v100 = vld [vmem:[%s3 + $0x18] sm:$0xff]
  %v101 = vld [vmem:[%s3 + $0x20] sm:$0xff]
  %v102 = vld [vmem:[%s3 + $0x28] sm:$0xff]
  %v103 = vld [vmem:[%s3 + $0x30] sm:$0xff]
  %v104 = vld [vmem:[%s3 + $0x38] sm:$0xff]
  %v105 = vld [vmem:[%s3 + $0x40] sm:$0xff]
  %v106 = vld [vmem:[%s3 + $0x48] sm:$0xff]
  %v107 = vld [vmem:[%s3 + $0x50] sm:$0xff]
  %v108 = vld [vmem:[%s3 + $0x58] sm:$0xff]
  %v109 = vld [vmem:[%s3 + $0x60] sm:$0xff]
  %v110 = vld [vmem:[%s3 + $0x68] sm:$0xff]
  %v111 = vld [vmem:[%s3 + $0x70] sm:$0xff]
  %v112 = vld [vmem:[%s3 + $0x78] sm:$0xff]
  %113 = vmatprep.subr.mxu0 0.0
  %114 = vmatpush1.msra.mxu0 %v112
  %115 = vmatprep.subr.mxu0 0.0
  %116 = vmatpush1.msra.mxu0 %v111
  %117 = vmatprep.subr.mxu0 0.0
  %118 = vmatpush1.msra.mxu0 %v110
  %119 = vmatprep.subr.mxu0 0.0
  %120 = vmatpush1.msra.mxu0 %v109
  %121 = vmatprep.subr.mxu0 0.0
  %122 = vmatpush1.msra.mxu0 %v108
  %123 = vmatprep.subr.mxu0 0.0
  %124 = vmatpush1.msra.mxu0 %v107
  %125 = vmatprep.subr.mxu0 0.0
  %126 = vmatpush1.msra.mxu0 %v106
  %127 = vmatprep.subr.mxu0 0.0
  %128 = vmatpush1.msra.mxu0 %v105
  %129 = vmatprep.subr.mxu0 0.0
  %130 = vmatpush1.msra.mxu0 %v104
  %131 = vmatprep.subr.mxu0 0.0
  %132 = vmatpush1.msra.mxu0 %v103
  %133 = vmatprep.subr.mxu0 0.0
  %134 = vmatpush1.msra.mxu0 %v102
  %135 = vmatprep.subr.mxu0 0.0
  %136 = vmatpush1.msra.mxu0 %v101
  %137 = vmatprep.subr.mxu0 0.0
  %138 = vmatpush1.msra.mxu0 %v100
  %139 = vmatprep.subr.mxu0 0.0
  %140 = vmatpush1.msra.mxu0 %v99
  %141 = vmatprep.subr.mxu0 0.0
  %142 = vmatpush1.msra.mxu0 %v98
  %143 = vmatprep.subr.mxu0 0.0
  %144 = vmatpush1.msra.mxu0 %v97
  %145 = vmatprep.subr.mxu0 0.0
  %146 = vmatpush2.msra.mxu0 0.0
  %147 = vmatprep.subr.mxu0 0.0
  %148 = vmatpush2.msra.mxu0 0.0
  %149 = vmatprep.subr.mxu0 0.0
  %150 = vmatpush2.msra.mxu0 0.0
  %151 = vmatprep.subr.mxu0 0.0
  %152 = vmatpush2.msra.mxu0 0.0
  %153 = vmatprep.subr.mxu0 0.0
  %154 = vmatpush2.msra.mxu0 0.0
  %155 = vmatprep.subr.mxu0 0.0
  %156 = vmatpush2.msra.mxu0 0.0
  %157 = vmatprep.subr.mxu0 0.0
  %158 = vmatpush2.msra.mxu0 0.0
  %159 = vmatprep.subr.mxu0 0.0
  %160 = vmatpush2.msra.mxu0 0.0
  %161 = vmatprep.subr.mxu0 0.0
  %162 = vmatpush2.msra.mxu0 0.0
  %163 = vmatprep.subr.mxu0 0.0
  %164 = vmatpush2.msra.mxu0 0.0
  %165 = vmatprep.subr.mxu0 0.0
  %166 = vmatpush2.msra.mxu0 0.0
  %167 = vmatprep.subr.mxu0 0.0
  %168 = vmatpush2.msra.mxu0 0.0
  %169 = vmatprep.subr.mxu0 0.0
  %170 = vmatpush2.msra.mxu0 0.0
  %171 = vmatprep.subr.mxu0 0.0
  %172 = vmatpush2.msra.mxu0 0.0
  %173 = vmatprep.subr.mxu0 0.0
  %174 = vmatpush2.msra.mxu0 0.0
  %175 = vmatprep.subr.mxu0 0.0
  %176 = vmatpush2.msra.mxu0 0.0
  %177 = vmatprep.mubr.f32.mxu0 0.0
  %178 = vmatmul.mubr.f32.gmra.mxu0 %v81
  %v179 = vpop.f32.mrf.mxu0
  %v180 = vadd.f32 0.0, %v179
  %v181 = vpop.f32.mrf.mxu0
  %182 = vmatprep.mubr.f32.mxu0 0.0
  %183 = vmatmul.mubr.f32.gmra.mxu0 %v82
  %v184 = vpop.f32.mrf.mxu0
  %v185 = vadd.f32 0.0, %v184
  %v186 = vpop.f32.mrf.mxu0
  %187 = vmatprep.mubr.f32.mxu0 0.0
  %188 = vmatmul.mubr.f32.gmra.mxu0 %v83
  %v189 = vpop.f32.mrf.mxu0
  %v190 = vadd.f32 0.0, %v189
  %v191 = vpop.f32.mrf.mxu0
  %192 = vmatprep.mubr.f32.mxu0 0.0
  %193 = vmatmul.mubr.f32.gmra.mxu0 %v84
  %v194 = vpop.f32.mrf.mxu0
  %v195 = vadd.f32 0.0, %v194
  %v196 = vpop.f32.mrf.mxu0
  %197 = vmatprep.mubr.f32.mxu0 0.0
  %198 = vmatmul.mubr.f32.gmra.mxu0 %v85
  %v199 = vpop.f32.mrf.mxu0
  %v200 = vadd.f32 0.0, %v199
  %v201 = vpop.f32.mrf.mxu0
  %202 = vmatprep.mubr.f32.mxu0 0.0
  %203 = vmatmul.mubr.f32.gmra.mxu0 %v86
  %v204 = vpop.f32.mrf.mxu0
  %v205 = vadd.f32 0.0, %v204
  %v206 = vpop.f32.mrf.mxu0
  %207 = vmatprep.mubr.f32.mxu0 0.0
  %208 = vmatmul.mubr.f32.gmra.mxu0 %v87
  %v209 = vpop.f32.mrf.mxu0
  %v210 = vadd.f32 0.0, %v209
  %v211 = vpop.f32.mrf.mxu0
  %212 = vmatprep.mubr.f32.mxu0 0.0
  %213 = vmatmul.mubr.f32.gmra.mxu0 %v88
  %v214 = vpop.f32.mrf.mxu0
  %v215 = vadd.f32 0.0, %v214
  %v216 = vpop.f32.mrf.mxu0
  %217 = vmatprep.mubr.f32.mxu0 0.0
  %218 = vmatmul.mubr.f32.gmra.mxu0 %v89
  %v219 = vpop.f32.mrf.mxu0
  %v220 = vadd.f32 0.0, %v219
  %v221 = vpop.f32.mrf.mxu0
  %222 = vmatprep.mubr.f32.mxu0 0.0
  %223 = vmatmul.mubr.f32.gmra.mxu0 %v90
  %v224 = vpop.f32.mrf.mxu0
  %v225 = vadd.f32 0.0, %v224
  %v226 = vpop.f32.mrf.mxu0
  %227 = vmatprep.mubr.f32.mxu0 0.0
  %228 = vmatmul.mubr.f32.gmra.mxu0 %v91
  %v229 = vpop.f32.mrf.mxu0
  %v230 = vadd.f32 0.0, %v229
  %v231 = vpop.f32.mrf.mxu0
  %232 = vmatprep.mubr.f32.mxu0 0.0
  %233 = vmatmul.mubr.f32.gmra.mxu0 %v92
  %v234 = vpop.f32.mrf.mxu0
  %v235 = vadd.f32 0.0, %v234
  %v236 = vpop.f32.mrf.mxu0
  %237 = vmatprep.mubr.f32.mxu0 0.0
  %238 = vmatmul.mubr.f32.gmra.mxu0 %v93
  %v239 = vpop.f32.mrf.mxu0
  %v240 = vadd.f32 0.0, %v239
  %v241 = vpop.f32.mrf.mxu0
  %242 = vmatprep.mubr.f32.mxu0 0.0
  %243 = vmatmul.mubr.f32.gmra.mxu0 %v94
  %v244 = vpop.f32.mrf.mxu0
  %v245 = vadd.f32 0.0, %v244
  %v246 = vpop.f32.mrf.mxu0
  %247 = vmatprep.mubr.f32.mxu0 0.0
  %248 = vmatmul.mubr.f32.gmra.mxu0 %v95
  %v249 = vpop.f32.mrf.mxu0
  %v250 = vadd.f32 0.0, %v249
  %v251 = vpop.f32.mrf.mxu0
  %252 = vmatprep.mubr.f32.mxu0 0.0
  %253 = vmatmul.mubr.f32.gmra.mxu0 %v96
  %v254 = vpop.f32.mrf.mxu0
  %v255 = vadd.f32 0.0, %v254
  %v256 = vpop.f32.mrf.mxu0
  %257 = vdwg.mxu0
  %258 = vst [vmem:[%s4] sm:$0xff] %v180
  %259 = vst [vmem:[%s4 + $0x8] sm:$0xff] %v185
  %260 = vst [vmem:[%s4 + $0x10] sm:$0xff] %v190
  %261 = vst [vmem:[%s4 + $0x18] sm:$0xff] %v195
  %262 = vst [vmem:[%s4 + $0x20] sm:$0xff] %v200
  %263 = vst [vmem:[%s4 + $0x28] sm:$0xff] %v205
  %264 = vst [vmem:[%s4 + $0x30] sm:$0xff] %v210
  %265 = vst [vmem:[%s4 + $0x38] sm:$0xff] %v215
  %266 = vst [vmem:[%s4 + $0x40] sm:$0xff] %v220
  %267 = vst [vmem:[%s4 + $0x48] sm:$0xff] %v225
  %268 = vst [vmem:[%s4 + $0x50] sm:$0xff] %v230
  %269 = vst [vmem:[%s4 + $0x58] sm:$0xff] %v235
  %270 = vst [vmem:[%s4 + $0x60] sm:$0xff] %v240
  %271 = vst [vmem:[%s4 + $0x68] sm:$0xff] %v245
  %272 = vst [vmem:[%s4 + $0x70] sm:$0xff] %v250
  %273 = vst [vmem:[%s4 + $0x78] sm:$0xff] %v255
  %v274 = vadd.f32 %v180, %v185
  %v275 = vadd.f32 %v274, %v190
  %v276 = vadd.f32 %v275, %v195
  %v277 = vadd.f32 %v276, %v200
  %v278 = vadd.f32 %v277, %v205
  %v279 = vadd.f32 %v278, %v210
  %v280 = vadd.f32 %v279, %v215
  %v281 = vadd.f32 %v280, %v220
  %v282 = vadd.f32 %v281, %v225
  %v283 = vadd.f32 %v282, %v230
  %v284 = vadd.f32 %v283, %v235
  %v285 = vadd.f32 %v284, %v240
  %v286 = vadd.f32 %v285, %v245
  %v287 = vadd.f32 %v286, %v250
  %v288 = vadd.f32 %v287, %v255
  %v289 = vrot.slane %v288, 4
  %v290 = vadd.f32 %v288, %v289
  %v291 = vrot.slane %v290, 2
  %v292 = vadd.f32 %v290, %v291
  %v293 = vrot.slane %v292, 1
  %v294 = vadd.f32 %v292, %v293
  %295 = vst [vmem:[%s5] sm:$0x1] %v294
  %v296 = vmul.f32 %v180, %v180
  %v297 = vmul.f32 %v185, %v185
  %v298 = vmul.f32 %v190, %v190
  %v299 = vmul.f32 %v195, %v195
  %v300 = vmul.f32 %v200, %v200
  %v301 = vmul.f32 %v205, %v205
  %v302 = vmul.f32 %v210, %v210
  %v303 = vmul.f32 %v215, %v215
  %v304 = vmul.f32 %v220, %v220
  %v305 = vmul.f32 %v225, %v225
  %v306 = vmul.f32 %v230, %v230
  %v307 = vmul.f32 %v235, %v235
  %v308 = vmul.f32 %v240, %v240
  %v309 = vmul.f32 %v245, %v245
  %v310 = vmul.f32 %v250, %v250
  %v311 = vmul.f32 %v255, %v255
  %v312 = vadd.f32 %v296, %v297
  %v313 = vadd.f32 %v312, %v298
  %v314 = vadd.f32 %v313, %v299
  %v315 = vadd.f32 %v314, %v300
  %v316 = vadd.f32 %v315, %v301
  %v317 = vadd.f32 %v316, %v302
  %v318 = vadd.f32 %v317, %v303
  %v319 = vadd.f32 %v318, %v304
  %v320 = vadd.f32 %v319, %v305
  %v321 = vadd.f32 %v320, %v306
  %v322 = vadd.f32 %v321, %v307
  %v323 = vadd.f32 %v322, %v308
  %v324 = vadd.f32 %v323, %v309
  %v325 = vadd.f32 %v324, %v310
  %v326 = vadd.f32 %v325, %v311
  %v327 = vrot.slane %v326, 4
  %v328 = vadd.f32 %v326, %v327
  %v329 = vrot.slane %v328, 2
  %v330 = vadd.f32 %v328, %v329
  %v331 = vrot.slane %v330, 1
  %v332 = vadd.f32 %v330, %v331
  %333 = vst [vmem:[%s5 + $0x1] sm:$0x1] %v332
  // Predicated region
  $region18: #{bottleneck_pallas.6} parent=0 // pred_check
    _
  $region19: #{bottleneck_pallas.6} parent=0 // pred_check_branch
    %335 = sbr.rel (0) target = $region21
  $region20: #{bottleneck_pallas.6} parent=0 // pred_region
    _
  $region21: #{bottleneck_pallas.6} parent=0 // pred_fallthru
    _
  // Predicated region
  $region22: #{bottleneck_pallas.6} parent=0 // pred_check
    _
  $region23: #{bottleneck_pallas.6} parent=0 // pred_check_branch
    %337 = sbr.rel (0) target = $region25
  $region24: #{bottleneck_pallas.6} parent=0 // pred_region
    _
  $region25: #{bottleneck_pallas.6} parent=0 // pred_fallthru
    _
  // Predicated region
  $region26: #{bottleneck_pallas.6} parent=0 // pred_check
    _
  $region27: #{bottleneck_pallas.6} parent=0 // pred_check_branch
    %339 = sbr.rel (0) target = $region29
  $region28: #{bottleneck_pallas.6} parent=0 // pred_region
    _
  $region29: #{bottleneck_pallas.6} parent=0 // pred_fallthru
    _
  // Predicated region
  $region30: #{bottleneck_pallas.6} parent=0 // pred_check
    _
  $region31: #{bottleneck_pallas.6} parent=0 // pred_check_branch
    %341 = sbr.rel (0) target = $region33
  $region32: #{bottleneck_pallas.6} parent=0 // pred_region
    _
  $region33: #{bottleneck_pallas.6} parent=0 // pred_fallthru
    _

// kernel: bottleneck_pallas.5
$region0: #{bottleneck_pallas.5}
  #allocation0 [shape = 'u32[]', space=smem, size = 0x4, offset = 0x4, fixed_abs, tag = 'smem constant byte address 0x4 - core index']
  #allocation1 [shape = 'u32[144,128]{1,0:T(1,128)}', space=vmem, size = 0x12000, scoped, tag = 'internal scratch']
  #allocation2 [shape = 'f32[82,128]{1,0:T(8,128)}', space=vmem, size = 0xb000, scoped, tag = 'scratch operand']
  %s0 = inlined_call_operand.vmem [shape: f32[2,64,128], index: 0, kind: input, shape index: {}]
  %s1 = inlined_call_operand.vmem [shape: f32[1,128], index: 1, kind: input, shape index: {}]
  %s2 = inlined_call_operand.vmem [shape: f32[1,128], index: 2, kind: input, shape index: {}]
  %s3 = inlined_call_operand.vmem [shape: f32[9,128,128], index: 3, kind: input, shape index: {}]
  %s4 = inlined_call_operand.vmem [shape: f32[2,64,128], index: 4, kind: output, shape index: {0}]
  %s5 = inlined_call_operand.vmem [shape: f32[2,2,128], index: 5, kind: output, shape index: {1}]
  %6 = xla_tuple %s4, %s5
  %s7 = sld [smem:[#allocation0]]
  $region57: #{bottleneck_pallas.5} parent=0
    _
  %s9 = ssub.s32 1, %s7
  %s10 = scalar_select 0, %s9, %s7
  loop: start=0, step=1, limit=4
  $region2: #{bottleneck_pallas.5} parent=0 // loop_pre_header
    _
  $region3: #{bottleneck_pallas.5} parent=0 // loop_header
    %s12 = sphi 0, %s16
    %p13 = scmp.ge.s32.totalorder %s12, 4
    %s22 = sphi 0, %s24
    %s25 = sphi 0, %s22
    %s26 = sphi 0, %s25
    %s42 = sphi 0, %s26
    %s46 = sphi 0, %s46
    %s48 = sphi 0, %s46
    %s49 = sphi 0, %s48
    %s63 = sphi 0, %s49
    %s67 = sphi 0, %s67
    %s69 = sphi 0, %s67
    %s70 = sphi 0, %s69
    %s84 = sphi 0, %s70
    %s88 = sphi 0, %s88
    %s90 = sphi 0, %s88
    %s91 = sphi 0, %s90
    %s105 = sphi 0, %s91
    %s111 = sphi 0, %s113
    %s114 = sphi 0, %s111
    %s115 = sphi 0, %s114
    %s131 = sphi 0, %s115
    %s137 = sphi 0, %s139
    %s140 = sphi 0, %s137
    %s141 = sphi 0, %s140
    %s157 = sphi 0, %s141
  $region4: #{bottleneck_pallas.5} parent=0 // loop_header_branch
    %15 = sbr.rel (%p13) target = $region8
  $region5: #{bottleneck_pallas.5} parent=0 // loop_body
    %s17 = ssub.s32 %s12, 1
    %s18 = ssub.s32 %s12, 2
    %s19 = sadd.s32 %s12, 1
    %s20 = ssub.s32 %s12, %s19
    %p21 = scmp.eq.s32.totalorder %s20, 0
    %s23 = sadd.s32 %s22, 1
    %s24 = scalar_select %p21, %s22, %s23
    %p27 = pneg %p21
    %p28 = scmp.eq.s32.totalorder %s12, 1
    %p29 = por %p27, %p28
    %p30 = scmp.ne.s32.totalorder %s22, %s25
    %p31 = scmp.eq.s32.totalorder %s12, 0
    %p32 = por %p30, %p31
    %p33 = scmp.ne.s32.totalorder %s22, %s25
    %p34 = scmp.eq.s32.totalorder %s17, 1
    %p35 = por %p33, %p34
    %p36 = scmp.ne.s32.totalorder %s25, %s26
    %p37 = scmp.eq.s32.totalorder %s17, 0
    %p38 = por %p36, %p37
    %p39 = scmp.ne.s32.totalorder %s25, %s26
    %p40 = scmp.eq.s32.totalorder %s18, 1
    %p41 = por %p39, %p40
    %p43 = scmp.ne.s32.totalorder %s26, %s42
    %p44 = scmp.eq.s32.totalorder %s18, 0
    %p45 = por %p43, %p44
    %s47 = sadd.s32 %s46, 1
    %p50 = scmp.eq.s32.totalorder %s12, 1
    %p51 = scmp.ne.s32.totalorder %s46, %s48
    %p52 = scmp.eq.s32.totalorder %s12, 0
    %p53 = por %p51, %p52
    %p54 = scmp.ne.s32.totalorder %s46, %s48
    %p55 = scmp.eq.s32.totalorder %s17, 1
    %p56 = por %p54, %p55
    %p57 = scmp.ne.s32.totalorder %s48, %s49
    %p58 = scmp.eq.s32.totalorder %s17, 0
    %p59 = por %p57, %p58
    %p60 = scmp.ne.s32.totalorder %s48, %s49
    %p61 = scmp.eq.s32.totalorder %s18, 1
    %p62 = por %p60, %p61
    %p64 = scmp.ne.s32.totalorder %s49, %s63
    %p65 = scmp.eq.s32.totalorder %s18, 0
    %p66 = por %p64, %p65
    %s68 = sadd.s32 %s67, 1
    %p71 = scmp.eq.s32.totalorder %s12, 1
    %p72 = scmp.ne.s32.totalorder %s67, %s69
    %p73 = scmp.eq.s32.totalorder %s12, 0
    %p74 = por %p72, %p73
    %p75 = scmp.ne.s32.totalorder %s67, %s69
    %p76 = scmp.eq.s32.totalorder %s17, 1
    %p77 = por %p75, %p76
    %p78 = scmp.ne.s32.totalorder %s69, %s70
    %p79 = scmp.eq.s32.totalorder %s17, 0
    %p80 = por %p78, %p79
    %p81 = scmp.ne.s32.totalorder %s69, %s70
    %p82 = scmp.eq.s32.totalorder %s18, 1
    %p83 = por %p81, %p82
    %p85 = scmp.ne.s32.totalorder %s70, %s84
    %p86 = scmp.eq.s32.totalorder %s18, 0
    %p87 = por %p85, %p86
    %s89 = sadd.s32 %s88, 1
    %p92 = scmp.eq.s32.totalorder %s12, 1
    %p93 = scmp.ne.s32.totalorder %s88, %s90
    %p94 = scmp.eq.s32.totalorder %s12, 0
    %p95 = por %p93, %p94
    %p96 = scmp.ne.s32.totalorder %s88, %s90
    %p97 = scmp.eq.s32.totalorder %s17, 1
    %p98 = por %p96, %p97
    %p99 = scmp.ne.s32.totalorder %s90, %s91
    %p100 = scmp.eq.s32.totalorder %s17, 0
    %p101 = por %p99, %p100
    %p102 = scmp.ne.s32.totalorder %s90, %s91
    %p103 = scmp.eq.s32.totalorder %s18, 1
    %p104 = por %p102, %p103
    %p106 = scmp.ne.s32.totalorder %s91, %s105
    %p107 = scmp.eq.s32.totalorder %s18, 0
    %p108 = por %p106, %p107
    %s109 = ssub.s32 %s12, %s19
    %p110 = scmp.eq.s32.totalorder %s109, 0
    %s112 = sadd.s32 %s111, 1
    %s113 = scalar_select %p110, %s111, %s112
    %p116 = pneg %p110
    %p117 = scmp.eq.s32.totalorder %s12, 1
    %p118 = por %p116, %p117
    %p119 = scmp.ne.s32.totalorder %s111, %s114
    %p120 = scmp.eq.s32.totalorder %s12, 0
    %p121 = por %p119, %p120
    %p122 = scmp.ne.s32.totalorder %s111, %s114
    %p123 = scmp.eq.s32.totalorder %s17, 1
    %p124 = por %p122, %p123
    %p125 = scmp.ne.s32.totalorder %s114, %s115
    %p126 = scmp.eq.s32.totalorder %s17, 0
    %p127 = por %p125, %p126
    %p128 = scmp.ne.s32.totalorder %s114, %s115
    %p129 = scmp.eq.s32.totalorder %s18, 1
    %p130 = por %p128, %p129
    %p132 = scmp.ne.s32.totalorder %s115, %s131
    %p133 = scmp.eq.s32.totalorder %s18, 0
    %p134 = por %p132, %p133
    %s135 = ssub.s32 %s12, %s19
    %p136 = scmp.eq.s32.totalorder %s135, 0
    %s138 = sadd.s32 %s137, 1
    %s139 = scalar_select %p136, %s137, %s138
    %p142 = pneg %p136
    %p143 = scmp.eq.s32.totalorder %s12, 1
    %p144 = por %p142, %p143
    %p145 = scmp.ne.s32.totalorder %s137, %s140
    %p146 = scmp.eq.s32.totalorder %s12, 0
    %p147 = por %p145, %p146
    %p148 = scmp.ne.s32.totalorder %s137, %s140
    %p149 = scmp.eq.s32.totalorder %s17, 1
    %p150 = por %p148, %p149
    %p151 = scmp.ne.s32.totalorder %s140, %s141
    %p152 = scmp.eq.s32.totalorder %s17, 0
    %p153 = por %p151, %p152
    %p154 = scmp.ne.s32.totalorder %s140, %s141
    %p155 = scmp.eq.s32.totalorder %s18, 1
    %p156 = por %p154, %p155
    %p158 = scmp.ne.s32.totalorder %s141, %s157
    %p159 = scmp.eq.s32.totalorder %s18, 0
    %p160 = por %p158, %p159
    %p161 = scmp.le.s32.totalorder 1, %s12
    %p162 = scmp.lt.s32.totalorder %s12, 3
    %p163 = pnand %p161, %p162
    %p164 = pneg %p163
    // Predicated region
    $region9: #{bottleneck_pallas.5} parent=5 // pred_check
      _
    $region10: #{bottleneck_pallas.5} parent=5 // pred_check_branch
      %166 = sbr.rel (%p163) target = $region12
    $region11: #{bottleneck_pallas.5} parent=5 // pred_region
      %s167 = ssub.s32 %s12, 1
      // Predicated region
      $region13: #{bottleneck_pallas.5} parent=11 // pred_check
        %p168 = pneg %p59
      $region14: #{bottleneck_pallas.5} parent=11 // pred_check_branch
        %170 = sbr.rel (%p168) target = $region16
      $region15: #{bottleneck_pallas.5} parent=11 // pred_region
        _
      $region16: #{bottleneck_pallas.5} parent=11 // pred_fallthru
        _
      // Predicated region
      $region17: #{bottleneck_pallas.5} parent=11 // pred_check
        %p171 = pneg %p80
      $region18: #{bottleneck_pallas.5} parent=11 // pred_check_branch
        %173 = sbr.rel (%p171) target = $region20
      $region19: #{bottleneck_pallas.5} parent=11 // pred_region
        _
      $region20: #{bottleneck_pallas.5} parent=11 // pred_fallthru
        _
      // Predicated region
      $region21: #{bottleneck_pallas.5} parent=11 // pred_check
        %p174 = pneg %p101
      $region22: #{bottleneck_pallas.5} parent=11 // pred_check_branch
        %176 = sbr.rel (%p174) target = $region24
      $region23: #{bottleneck_pallas.5} parent=11 // pred_region
        _
      $region24: #{bottleneck_pallas.5} parent=11 // pred_fallthru
        _
    $region12: #{bottleneck_pallas.5} parent=5 // pred_fallthru
      _
    %p177 = scmp.lt.s32.totalorder %s12, 2
    // Predicated region
    $region25: #{bottleneck_pallas.5} parent=5 // pred_check
      %p178 = pneg %p177
    $region26: #{bottleneck_pallas.5} parent=5 // pred_check_branch
      %180 = sbr.rel (%p178) target = $region28
    $region27: #{bottleneck_pallas.5} parent=5 // pred_region
      // Predicated region
      $region29: #{bottleneck_pallas.5} parent=27 // pred_check
        %p181 = pneg %p32
      $region30: #{bottleneck_pallas.5} parent=27 // pred_check_branch
        %183 = sbr.rel (%p181) target = $region32
      $region31: #{bottleneck_pallas.5} parent=27 // pred_region
        %p184 = scmp.lt.s32.totalorder %s12, 1
        %s185 = scalar_select %p184, %s12, 1
        %s186 = smul.addr %s185, 8
        %s187 = smul.addr %s186, 8
        %s188 = scalar_lea.vmem %s0, %s187
      $region32: #{bottleneck_pallas.5} parent=27 // pred_fallthru
        _
    $region28: #{bottleneck_pallas.5} parent=5 // pred_fallthru
      _
    %p189 = scmp.le.s32.totalorder 1, %s12
    %p190 = scmp.lt.s32.totalorder %s12, 3
    %p191 = pnand %p189, %p190
    %p192 = pneg %p191
    // Predicated region
    $region33: #{bottleneck_pallas.5} parent=5 // pred_check
      _
    $region34: #{bottleneck_pallas.5} parent=5 // pred_check_branch
      %194 = sbr.rel (%p191) target = $region36
    $region35: #{bottleneck_pallas.5} parent=5 // pred_region
      %s195 = ssub.s32 %s12, 1
      %p196 = scmp.lt.s32.totalorder %s17, 1
      %s197 = scalar_select %p196, %s17, 1
      %s198 = smul.addr %s197, 8
      %s199 = smul.addr %s198, 8
      %s200 = scalar_lea.vmem %s0, %s199
      %p201 = pneg %p38
      %p202 = pneg %p35
      %p203 = pneg %p59
      %p204 = pneg %p56
      %p205 = pneg %p80
      %p206 = pneg %p77
      %p207 = pneg %p101
      %p208 = pneg %p98
      %p209 = pneg %p127
      %p210 = pneg %p124
      %p211 = scmp.lt.s32.totalorder %s17, 1
      %s212 = scalar_select %p211, %s17, 1
      %s213 = smul.addr %s212, 8
      %s214 = smul.addr %s213, 8
      %s215 = scalar_lea.vmem %s4, %s214
      %p216 = pneg %p153
      %p217 = pneg %p150
      %p218 = scmp.lt.s32.totalorder %s17, 1
      %s219 = scalar_select %p218, %s17, 1
      %s220 = smul.addr %s219, 2
      %s221 = scalar_lea.vmem %s5, %s220
      %p222 = scmp.lt.s32.totalorder %s17, 1
      %s223 = scalar_select %p222, %s17, 1
      %s224 = smul.addr %s223, 8
      %s225 = smul.addr %s224, 8
      %s226 = scalar_lea.vmem %s0, %s225
      %p227 = scmp.lt.s32.totalorder %s17, 1
      %s228 = scalar_select %p227, %s17, 1
      %s229 = smul.addr %s228, 8
      %s230 = smul.addr %s229, 8
      %s231 = scalar_lea.vmem %s4, %s230
      %p232 = scmp.lt.s32.totalorder %s17, 1
      %s233 = scalar_select %p232, %s17, 1
      %s234 = smul.addr %s233, 2
      %s235 = scalar_lea.vmem %s5, %s234
      %v236 = vld [vmem:[%s226] sm:$0xff]
      %v237 = vld [vmem:[%s226 + $0x8] sm:$0xff]
      %v238 = vld [vmem:[%s226 + $0x10] sm:$0xff]
      %v239 = vld [vmem:[%s226 + $0x18] sm:$0xff]
      %v240 = vld [vmem:[%s226 + $0x20] sm:$0xff]
      %v241 = vld [vmem:[%s226 + $0x28] sm:$0xff]
      %v242 = vld [vmem:[%s226 + $0x30] sm:$0xff]
      %v243 = vld [vmem:[%s226 + $0x38] sm:$0xff]
      %v244 = vld [vmem:[%s1] sm:$0x1]
      %v246 = vlaneseq
      %v247 = vshrl.u32 %v246, 7
      %v248 = vsub.s32 0, %v247
      %v249 = vrot.slane %v244, %v248
      %v251 = vmul.f32 %v236, %v249
      %v252 = vmul.f32 %v237, %v249
      %v253 = vmul.f32 %v238, %v249
      %v254 = vmul.f32 %v239, %v249
      %v255 = vmul.f32 %v240, %v249
      %v256 = vmul.f32 %v241, %v249
      %v257 = vmul.f32 %v242, %v249
      %v258 = vmul.f32 %v243, %v249
      %v259 = vld [vmem:[%s2] sm:$0x1]
      %v261 = vlaneseq
      %v262 = vshrl.u32 %v261, 7
      %v263 = vsub.s32 0, %v262
      %v264 = vrot.slane %v259, %v263
      %v266 = vadd.f32 %v251, %v264
      %v267 = vadd.f32 %v252, %v264
      %v268 = vadd.f32 %v253, %v264
      %v269 = vadd.f32 %v254, %v264
      %v270 = vadd.f32 %v255, %v264
      %v271 = vadd.f32 %v256, %v264
      %v272 = vadd.f32 %v257, %v264
      %v273 = vadd.f32 %v258, %v264
      %v274 = vmax.f32 %v266, 0.0
      %v275 = vmax.f32 %v267, 0.0
      %v276 = vmax.f32 %v268, 0.0
      %v277 = vmax.f32 %v269, 0.0
      %v278 = vmax.f32 %v270, 0.0
      %v279 = vmax.f32 %v271, 0.0
      %v280 = vmax.f32 %v272, 0.0
      %v281 = vmax.f32 %v273, 0.0
      %282 = vst [vmem:[#allocation2] sm:$0xff] 0.0
      %283 = vst [vmem:[#allocation2 + $0x8] sm:$0x1] 0.0
      %284 = vst [vmem:[#allocation2 + $0x49] sm:$0xff] 0.0
      %285 = vst [vmem:[#allocation2 + $0x51] sm:$0x1] 0.0
      %286 = vst [vmem:[#allocation2 + $0x9] sm:$0xff] %v274
      %287 = vst [vmem:[#allocation2 + $0x11] sm:$0xff] %v275
      %288 = vst [vmem:[#allocation2 + $0x19] sm:$0xff] %v276
      %289 = vst [vmem:[#allocation2 + $0x21] sm:$0xff] %v277
      %290 = vst [vmem:[#allocation2 + $0x29] sm:$0xff] %v278
      %291 = vst [vmem:[#allocation2 + $0x31] sm:$0xff] %v279
      %292 = vst [vmem:[#allocation2 + $0x39] sm:$0xff] %v280
      %293 = vst [vmem:[#allocation2 + $0x41] sm:$0xff] %v281
      %v294 = vlaneseq
      %v295 = vshrl.u32 %v294, 7
      %v296 = vadd.s32 %v295, 8
      %v297 = vadd.s32 %v295, 16
      %v298 = vadd.s32 %v295, 24
      %v299 = vadd.s32 %v295, 32
      %v300 = vadd.s32 %v295, 40
      %v301 = vadd.s32 %v295, 48
      %v302 = vadd.s32 %v295, 56
      %v303 = vadd.s32 %v295, 64
      %v304 = vadd.s32 %v295, 72
      %vm305 = vcmp.lt.s32.totalorder %v295, 0
      %v306 = vsub.s32 0, %v295
      %v307 = vsel %vm305, %v306, %v295
      %v308 = vshrl.u32 %v307, 3
      %v309 = vand.u32 %v307, 7
      %v310 = vsub.s32 0, %v309
      %v311 = vsel %vm305, %v310, %v309
      %vm312 = vcmp.lt.s32.totalorder %v296, 0
      %v313 = vsub.s32 0, %v296
      %v314 = vsel %vm312, %v313, %v296
      %v315 = vshrl.u32 %v314, 3
      %v316 = vand.u32 %v314, 7
      %v317 = vsub.s32 0, %v316
      %v318 = vsel %vm312, %v317, %v316
      %vm319 = vcmp.lt.s32.totalorder %v297, 0
      %v320 = vsub.s32 0, %v297
      %v321 = vsel %vm319, %v320, %v297
      %v322 = vshrl.u32 %v321, 3
      %v323 = vand.u32 %v321, 7
      %v324 = vsub.s32 0, %v323
      %v325 = vsel %vm319, %v324, %v323
      %vm326 = vcmp.lt.s32.totalorder %v298, 0
      %v327 = vsub.s32 0, %v298
      %v328 = vsel %vm326, %v327, %v298
      %v329 = vshrl.u32 %v328, 3
      %v330 = vand.u32 %v328, 7
      %v331 = vsub.s32 0, %v330
      %v332 = vsel %vm326, %v331, %v330
      %vm333 = vcmp.lt.s32.totalorder %v299, 0
      %v334 = vsub.s32 0, %v299
      %v335 = vsel %vm333, %v334, %v299
      %v336 = vshrl.u32 %v335, 3
      %v337 = vand.u32 %v335, 7
      %v338 = vsub.s32 0, %v337
      %v339 = vsel %vm333, %v338, %v337
      %vm340 = vcmp.lt.s32.totalorder %v300, 0
      %v341 = vsub.s32 0, %v300
      %v342 = vsel %vm340, %v341, %v300
      %v343 = vshrl.u32 %v342, 3
      %v344 = vand.u32 %v342, 7
      %v345 = vsub.s32 0, %v344
      %v346 = vsel %vm340, %v345, %v344
      %vm347 = vcmp.lt.s32.totalorder %v301, 0
      %v348 = vsub.s32 0, %v301
      %v349 = vsel %vm347, %v348, %v301
      %v350 = vshrl.u32 %v349, 3
      %v351 = vand.u32 %v349, 7
      %v352 = vsub.s32 0, %v351
      %v353 = vsel %vm347, %v352, %v351
      %vm354 = vcmp.lt.s32.totalorder %v302, 0
      %v355 = vsub.s32 0, %v302
      %v356 = vsel %vm354, %v355, %v302
      %v357 = vshrl.u32 %v356, 3
      %v358 = vand.u32 %v356, 7
      %v359 = vsub.s32 0, %v358
      %v360 = vsel %vm354, %v359, %v358
      %vm361 = vcmp.lt.s32.totalorder %v303, 0
      %v362 = vsub.s32 0, %v303
      %v363 = vsel %vm361, %v362, %v303
      %v364 = vshrl.u32 %v363, 3
      %v365 = vand.u32 %v363, 7
      %v366 = vsub.s32 0, %v365
      %v367 = vsel %vm361, %v366, %v365
      %vm368 = vcmp.lt.s32.totalorder %v304, 0
      %v369 = vsub.s32 0, %v304
      %v370 = vsel %vm368, %v369, %v304
      %v371 = vshrl.u32 %v370, 3
      %v372 = vand.u32 %v370, 7
      %v373 = vsub.s32 0, %v372
      %v374 = vsel %vm368, %v373, %v372
      %vm375 = vcmp.ne.s32.totalorder %v311, 0
      %vm376 = vcmp.ne.s32.totalorder %v318, 0
      %vm377 = vcmp.ne.s32.totalorder %v325, 0
      %vm378 = vcmp.ne.s32.totalorder %v332, 0
      %vm379 = vcmp.ne.s32.totalorder %v339, 0
      %vm380 = vcmp.ne.s32.totalorder %v346, 0
      %vm381 = vcmp.ne.s32.totalorder %v353, 0
      %vm382 = vcmp.ne.s32.totalorder %v360, 0
      %vm383 = vcmp.ne.s32.totalorder %v367, 0
      %vm384 = vcmp.ne.s32.totalorder %v374, 0
      %vm385 = vcmp.lt.s32.totalorder %v311, 0
      %vm386 = vcmp.lt.s32.totalorder %v318, 0
      %vm387 = vcmp.lt.s32.totalorder %v325, 0
      %vm388 = vcmp.lt.s32.totalorder %v332, 0
      %vm389 = vcmp.lt.s32.totalorder %v339, 0
      %vm390 = vcmp.lt.s32.totalorder %v346, 0
      %vm391 = vcmp.lt.s32.totalorder %v353, 0
      %vm392 = vcmp.lt.s32.totalorder %v360, 0
      %vm393 = vcmp.lt.s32.totalorder %v367, 0
      %vm394 = vcmp.lt.s32.totalorder %v374, 0
      %vm395 = vmand %vm385, %vm375
      %vm396 = vmand %vm386, %vm376
      %vm397 = vmand %vm387, %vm377
      %vm398 = vmand %vm388, %vm378
      %vm399 = vmand %vm389, %vm379
      %vm400 = vmand %vm390, %vm380
      %vm401 = vmand %vm391, %vm381
      %vm402 = vmand %vm392, %vm382
      %vm403 = vmand %vm393, %vm383
      %vm404 = vmand %vm394, %vm384
      %v405 = vadd.s32 %v311, 8
      %v406 = vadd.s32 %v318, 8
      %v407 = vadd.s32 %v325, 8
      %v408 = vadd.s32 %v332, 8
      %v409 = vadd.s32 %v339, 8
      %v410 = vadd.s32 %v346, 8
      %v411 = vadd.s32 %v353, 8
      %v412 = vadd.s32 %v360, 8
      %v413 = vadd.s32 %v367, 8
      %v414 = vadd.s32 %v374, 8
      %v415 = vsel %vm395, %v405, %v311
      %v416 = vsel %vm396, %v406, %v318
      %v417 = vsel %vm397, %v407, %v325
      %v418 = vsel %vm398, %v408, %v332
      %v419 = vsel %vm399, %v409, %v339
      %v420 = vsel %vm400, %v410, %v346
      %v421 = vsel %vm401, %v411, %v353
      %v422 = vsel %vm402, %v412, %v360
      %v423 = vsel %vm403, %v413, %v367
      %v424 = vsel %vm404, %v414, %v374
      %v425 = vld [vmem:[#allocation2] sm:$0xff]
      %v426 = vld [vmem:[#allocation2 + $0x8] sm:$0xff]
      %v427 = vld [vmem:[#allocation2 + $0x10] sm:$0xff]
      %v428 = vld [vmem:[#allocation2 + $0x18] sm:$0xff]
      %v429 = vld [vmem:[#allocation2 + $0x20] sm:$0xff]
      %v430 = vld [vmem:[#allocation2 + $0x28] sm:$0xff]
      %v431 = vld [vmem:[#allocation2 + $0x30] sm:$0xff]
      %v432 = vld [vmem:[#allocation2 + $0x38] sm:$0xff]
      %v433 = vld [vmem:[#allocation2 + $0x40] sm:$0xff]
      %v434 = vld [vmem:[#allocation2 + $0x48] sm:$0xff]
      %vm435 = vcmp.eq.s32.totalorder %v415, 0
      %vm436 = vcmp.eq.s32.totalorder %v416, 0
      %vm437 = vcmp.eq.s32.totalorder %v417, 0
      %vm438 = vcmp.eq.s32.totalorder %v418, 0
      %vm439 = vcmp.eq.s32.totalorder %v419, 0
      %vm440 = vcmp.eq.s32.totalorder %v420, 0
      %vm441 = vcmp.eq.s32.totalorder %v421, 0
      %vm442 = vcmp.eq.s32.totalorder %v422, 0
      %vm443 = vcmp.eq.s32.totalorder %v423, 0
      %vm444 = vcmp.eq.s32.totalorder %v424, 0
      %v445 = vsel %vm435, 1, 0
      %v446 = vsel %vm436, 1, 0
      %v447 = vsel %vm437, 1, 0
      %v448 = vsel %vm438, 1, 0
      %v449 = vsel %vm439, 1, 0
      %v450 = vsel %vm440, 1, 0
      %v451 = vsel %vm441, 1, 0
      %v452 = vsel %vm442, 1, 0
      %v453 = vsel %vm443, 1, 0
      %v454 = vsel %vm444, 1, 0
      %vm455 = vcmp.eq.s32.totalorder %v445, 1
      %vm456 = vcmp.eq.s32.totalorder %v446, 1
      %vm457 = vcmp.eq.s32.totalorder %v447, 1
      %vm458 = vcmp.eq.s32.totalorder %v448, 1
      %vm459 = vcmp.eq.s32.totalorder %v449, 1
      %vm460 = vcmp.eq.s32.totalorder %v450, 1
      %vm461 = vcmp.eq.s32.totalorder %v451, 1
      %vm462 = vcmp.eq.s32.totalorder %v452, 1
      %vm463 = vcmp.eq.s32.totalorder %v453, 1
      %vm464 = vcmp.eq.s32.totalorder %v454, 1
      %v465 = vsel %vm455, 0.0, %v425
      %v466 = vsel %vm456, 0.0, %v426
      %v467 = vsel %vm457, 0.0, %v427
      %v468 = vsel %vm458, 0.0, %v428
      %v469 = vsel %vm459, 0.0, %v429
      %v470 = vsel %vm460, 0.0, %v430
      %v471 = vsel %vm461, 0.0, %v431
      %v472 = vsel %vm462, 0.0, %v432
      %v473 = vsel %vm463, 0.0, %v433
      %v474 = vsel %vm464, 0.0, %v434
      %v475 = vld [vmem:[%s3] sm:$0xff]
      %v476 = vld [vmem:[%s3 + $0x8] sm:$0xff]
      %v477 = vld [vmem:[%s3 + $0x10] sm:$0xff]
      %v478 = vld [vmem:[%s3 + $0x18] sm:$0xff]
      %v479 = vld [vmem:[%s3 + $0x20] sm:$0xff]
      %v480 = vld [vmem:[%s3 + $0x28] sm:$0xff]
      %v481 = vld [vmem:[%s3 + $0x30] sm:$0xff]
      %v482 = vld [vmem:[%s3 + $0x38] sm:$0xff]
      %v483 = vld [vmem:[%s3 + $0x40] sm:$0xff]
      %v484 = vld [vmem:[%s3 + $0x48] sm:$0xff]
      %v485 = vld [vmem:[%s3 + $0x50] sm:$0xff]
      %v486 = vld [vmem:[%s3 + $0x58] sm:$0xff]
      %v487 = vld [vmem:[%s3 + $0x60] sm:$0xff]
      %v488 = vld [vmem:[%s3 + $0x68] sm:$0xff]
      %v489 = vld [vmem:[%s3 + $0x70] sm:$0xff]
      %v490 = vld [vmem:[%s3 + $0x78] sm:$0xff]
      %s491 = scalar_lea.vmem %s3, 384
      %v492 = vld [vmem:[%s491] sm:$0xff]
      %v493 = vld [vmem:[%s491 + $0x8] sm:$0xff]
      %v494 = vld [vmem:[%s491 + $0x10] sm:$0xff]
      %v495 = vld [vmem:[%s491 + $0x18] sm:$0xff]
      %v496 = vld [vmem:[%s491 + $0x20] sm:$0xff]
      %v497 = vld [vmem:[%s491 + $0x28] sm:$0xff]
      %v498 = vld [vmem:[%s491 + $0x30] sm:$0xff]
      %v499 = vld [vmem:[%s491 + $0x38] sm:$0xff]
      %v500 = vld [vmem:[%s491 + $0x40] sm:$0xff]
      %v501 = vld [vmem:[%s491 + $0x48] sm:$0xff]
      %v502 = vld [vmem:[%s491 + $0x50] sm:$0xff]
      %v503 = vld [vmem:[%s491 + $0x58] sm:$0xff]
      %v504 = vld [vmem:[%s491 + $0x60] sm:$0xff]
      %v505 = vld [vmem:[%s491 + $0x68] sm:$0xff]
      %v506 = vld [vmem:[%s491 + $0x70] sm:$0xff]
      %v507 = vld [vmem:[%s491 + $0x78] sm:$0xff]
      %508 = vmatprep.subr.mxu0 0.0
      %509 = vmatpush1.msra.mxu0 %v507
      %510 = vmatprep.subr.mxu0 0.0
      %511 = vmatpush1.msra.mxu0 %v506
      %512 = vmatprep.subr.mxu0 0.0
      %513 = vmatpush1.msra.mxu0 %v505
      %514 = vmatprep.subr.mxu0 0.0
      %515 = vmatpush1.msra.mxu0 %v504
      %516 = vmatprep.subr.mxu0 0.0
      %517 = vmatpush1.msra.mxu0 %v503
      %518 = vmatprep.subr.mxu0 0.0
      %519 = vmatpush1.msra.mxu0 %v502
      %520 = vmatprep.subr.mxu0 0.0
      %521 = vmatpush1.msra.mxu0 %v501
      %522 = vmatprep.subr.mxu0 0.0
      %523 = vmatpush1.msra.mxu0 %v500
      %524 = vmatprep.subr.mxu0 0.0
      %525 = vmatpush1.msra.mxu0 %v499
      %526 = vmatprep.subr.mxu0 0.0
      %527 = vmatpush1.msra.mxu0 %v498
      %528 = vmatprep.subr.mxu0 0.0
      %529 = vmatpush1.msra.mxu0 %v497
      %530 = vmatprep.subr.mxu0 0.0
      %531 = vmatpush1.msra.mxu0 %v496
      %532 = vmatprep.subr.mxu0 0.0
      %533 = vmatpush1.msra.mxu0 %v495
      %534 = vmatprep.subr.mxu0 0.0
      %535 = vmatpush1.msra.mxu0 %v494
      %536 = vmatprep.subr.mxu0 0.0
      %537 = vmatpush1.msra.mxu0 %v493
      %538 = vmatprep.subr.mxu0 0.0
      %539 = vmatpush1.msra.mxu0 %v492
      %540 = vmatprep.subr.mxu0 0.0
      %541 = vmatpush2.msra.mxu0 0.0
      %542 = vmatprep.subr.mxu0 0.0
      %543 = vmatpush2.msra.mxu0 0.0
      %544 = vmatprep.subr.mxu0 0.0
      %545 = vmatpush2.msra.mxu0 0.0
      %546 = vmatprep.subr.mxu0 0.0
      %547 = vmatpush2.msra.mxu0 0.0
      %548 = vmatprep.subr.mxu0 0.0
      %549 = vmatpush2.msra.mxu0 0.0
      %550 = vmatprep.subr.mxu0 0.0
      %551 = vmatpush2.msra.mxu0 0.0
      %552 = vmatprep.subr.mxu0 0.0
      %553 = vmatpush2.msra.mxu0 0.0
      %554 = vmatprep.subr.mxu0 0.0
      %555 = vmatpush2.msra.mxu0 0.0
      %556 = vmatprep.subr.mxu0 0.0
      %557 = vmatpush2.msra.mxu0 0.0
      %558 = vmatprep.subr.mxu0 0.0
      %559 = vmatpush2.msra.mxu0 0.0
      %560 = vmatprep.subr.mxu0 0.0
      %561 = vmatpush2.msra.mxu0 0.0
      %562 = vmatprep.subr.mxu0 0.0
      %563 = vmatpush2.msra.mxu0 0.0
      %564 = vmatprep.subr.mxu0 0.0
      %565 = vmatpush2.msra.mxu0 0.0
      %566 = vmatprep.subr.mxu0 0.0
      %567 = vmatpush2.msra.mxu0 0.0
      %568 = vmatprep.subr.mxu0 0.0
      %569 = vmatpush2.msra.mxu0 0.0
      %570 = vmatprep.subr.mxu0 0.0
      %571 = vmatpush2.msra.mxu0 0.0
      %572 = vmatprep.mubr.f32.mxu0 0.0
      %573 = vmatmul.mubr.f32.gmra.mxu0 %v466
      %v574 = vpop.f32.mrf.mxu0
      %v575 = vadd.f32 0.0, %v574
      %v576 = vpop.f32.mrf.mxu0
      %577 = vmatprep.mubr.f32.mxu0 0.0
      %578 = vmatmul.mubr.f32.gmra.mxu0 %v467
      %v579 = vpop.f32.mrf.mxu0
      %v580 = vadd.f32 0.0, %v579
      %v581 = vpop.f32.mrf.mxu0
      %582 = vmatprep.mubr.f32.mxu0 0.0
      %583 = vmatmul.mubr.f32.gmra.mxu0 %v468
      %v584 = vpop.f32.mrf.mxu0
      %v585 = vadd.f32 0.0, %v584
      %v586 = vpop.f32.mrf.mxu0
      %587 = vmatprep.mubr.f32.mxu0 0.0
      %588 = vmatmul.mubr.f32.gmra.mxu0 %v469
      %v589 = vpop.f32.mrf.mxu0
      %v590 = vadd.f32 0.0, %v589
      %v591 = vpop.f32.mrf.mxu0
      %592 = vmatprep.mubr.f32.mxu0 0.0
      %593 = vmatmul.mubr.f32.gmra.mxu0 %v470
      %v594 = vpop.f32.mrf.mxu0
      %v595 = vadd.f32 0.0, %v594
      %v596 = vpop.f32.mrf.mxu0
      %597 = vmatprep.mubr.f32.mxu0 0.0
      %598 = vmatmul.mubr.f32.gmra.mxu0 %v471
      %v599 = vpop.f32.mrf.mxu0
      %v600 = vadd.f32 0.0, %v599
      %v601 = vpop.f32.mrf.mxu0
      %602 = vmatprep.mubr.f32.mxu0 0.0
      %603 = vmatmul.mubr.f32.gmra.mxu0 %v472
      %v604 = vpop.f32.mrf.mxu0
      %v605 = vadd.f32 0.0, %v604
      %v606 = vpop.f32.mrf.mxu0
      %607 = vmatprep.mubr.f32.mxu0 0.0
      %608 = vmatmul.mubr.f32.gmra.mxu0 %v473
      %v609 = vpop.f32.mrf.mxu0
      %v610 = vadd.f32 0.0, %v609
      %v611 = vpop.f32.mrf.mxu0
      %612 = vdwg.mxu0
      %613 = vmatprep.subr.mxu0 0.0
      %614 = vmatpush1.msra.mxu0 %v490
      %615 = vmatprep.subr.mxu0 0.0
      %616 = vmatpush1.msra.mxu0 %v489
      %617 = vmatprep.subr.mxu0 0.0
      %618 = vmatpush1.msra.mxu0 %v488
      %619 = vmatprep.subr.mxu0 0.0
      %620 = vmatpush1.msra.mxu0 %v487
      %621 = vmatprep.subr.mxu0 0.0
      %622 = vmatpush1.msra.mxu0 %v486
      %623 = vmatprep.subr.mxu0 0.0
      %624 = vmatpush1.msra.mxu0 %v485
      %625 = vmatprep.subr.mxu0 0.0
      %626 = vmatpush1.msra.mxu0 %v484
      %627 = vmatprep.subr.mxu0 0.0
      %628 = vmatpush1.msra.mxu0 %v483
      %629 = vmatprep.subr.mxu0 0.0
      %630 = vmatpush1.msra.mxu0 %v482
      %631 = vmatprep.subr.mxu0 0.0
      %632 = vmatpush1.msra.mxu0 %v481
      %633 = vmatprep.subr.mxu0 0.0
      %634 = vmatpush1.msra.mxu0 %v480
      %635 = vmatprep.subr.mxu0 0.0
      %636 = vmatpush1.msra.mxu0 %v479
      %637 = vmatprep.subr.mxu0 0.0
      %638 = vmatpush1.msra.mxu0 %v478
      %639 = vmatprep.subr.mxu0 0.0
      %640 = vmatpush1.msra.mxu0 %v477
      %641 = vmatprep.subr.mxu0 0.0
      %642 = vmatpush1.msra.mxu0 %v476
      %643 = vmatprep.subr.mxu0 0.0
      %644 = vmatpush1.msra.mxu0 %v475
      %645 = vmatprep.subr.mxu0 0.0
      %646 = vmatpush2.msra.mxu0 0.0
      %647 = vmatprep.subr.mxu0 0.0
      %648 = vmatpush2.msra.mxu0 0.0
      %649 = vmatprep.subr.mxu0 0.0
      %650 = vmatpush2.msra.mxu0 0.0
      %651 = vmatprep.subr.mxu0 0.0
      %652 = vmatpush2.msra.mxu0 0.0
      %653 = vmatprep.subr.mxu0 0.0
      %654 = vmatpush2.msra.mxu0 0.0
      %655 = vmatprep.subr.mxu0 0.0
      %656 = vmatpush2.msra.mxu0 0.0
      %657 = vmatprep.subr.mxu0 0.0
      %658 = vmatpush2.msra.mxu0 0.0
      %659 = vmatprep.subr.mxu0 0.0
      %660 = vmatpush2.msra.mxu0 0.0
      %661 = vmatprep.subr.mxu0 0.0
      %662 = vmatpush2.msra.mxu0 0.0
      %663 = vmatprep.subr.mxu0 0.0
      %664 = vmatpush2.msra.mxu0 0.0
      %665 = vmatprep.subr.mxu0 0.0
      %666 = vmatpush2.msra.mxu0 0.0
      %667 = vmatprep.subr.mxu0 0.0
      %668 = vmatpush2.msra.mxu0 0.0
      %669 = vmatprep.subr.mxu0 0.0
      %670 = vmatpush2.msra.mxu0 0.0
      %671 = vmatprep.subr.mxu0 0.0
      %672 = vmatpush2.msra.mxu0 0.0
      %673 = vmatprep.subr.mxu0 0.0
      %674 = vmatpush2.msra.mxu0 0.0
      %675 = vmatprep.subr.mxu0 0.0
      %676 = vmatpush2.msra.mxu0 0.0
      %677 = vmatprep.mubr.f32.mxu0 0.0
      %678 = vmatmul.mubr.f32.gmra.mxu0 %v465
      %v679 = vpop.f32.mrf.mxu0
      %v680 = vadd.f32 %v575, %v679
      %v681 = vpop.f32.mrf.mxu0
      %682 = vmatprep.mubr.f32.mxu0 0.0
      %683 = vmatmul.mubr.f32.gmra.mxu0 %v466
      %v684 = vpop.f32.mrf.mxu0
      %v685 = vadd.f32 %v580, %v684
      %v686 = vpop.f32.mrf.mxu0
      %687 = vmatprep.mubr.f32.mxu0 0.0
      %688 = vmatmul.mubr.f32.gmra.mxu0 %v467
      %v689 = vpop.f32.mrf.mxu0
      %v690 = vadd.f32 %v585, %v689
      %v691 = vpop.f32.mrf.mxu0
      %692 = vmatprep.mubr.f32.mxu0 0.0
      %693 = vmatmul.mubr.f32.gmra.mxu0 %v468
      %v694 = vpop.f32.mrf.mxu0
      %v695 = vadd.f32 %v590, %v694
      %v696 = vpop.f32.mrf.mxu0
      %697 = vmatprep.mubr.f32.mxu0 0.0
      %698 = vmatmul.mubr.f32.gmra.mxu0 %v469
      %v699 = vpop.f32.mrf.mxu0
      %v700 = vadd.f32 %v595, %v699
      %v701 = vpop.f32.mrf.mxu0
      %702 = vmatprep.mubr.f32.mxu0 0.0
      %703 = vmatmul.mubr.f32.gmra.mxu0 %v470
      %v704 = vpop.f32.mrf.mxu0
      %v705 = vadd.f32 %v600, %v704
      %v706 = vpop.f32.mrf.mxu0
      %707 = vmatprep.mubr.f32.mxu0 0.0
      %708 = vmatmul.mubr.f32.gmra.mxu0 %v471
      %v709 = vpop.f32.mrf.mxu0
      %v710 = vadd.f32 %v605, %v709
      %v711 = vpop.f32.mrf.mxu0
      %712 = vmatprep.mubr.f32.mxu0 0.0
      %713 = vmatmul.mubr.f32.gmra.mxu0 %v472
      %v714 = vpop.f32.mrf.mxu0
      %v715 = vadd.f32 %v610, %v714
      %v716 = vpop.f32.mrf.mxu0
      %717 = vdwg.mxu0
      %s718 = scalar_lea.vmem %s3, 768
      %v719 = vld [vmem:[%s718] sm:$0xff]
      %v720 = vld [vmem:[%s718 + $0x8] sm:$0xff]
      %v721 = vld [vmem:[%s718 + $0x10] sm:$0xff]
      %v722 = vld [vmem:[%s718 + $0x18] sm:$0xff]
      %v723 = vld [vmem:[%s718 + $0x20] sm:$0xff]
      %v724 = vld [vmem:[%s718 + $0x28] sm:$0xff]
      %v725 = vld [vmem:[%s718 + $0x30] sm:$0xff]
      %v726 = vld [vmem:[%s718 + $0x38] sm:$0xff]
      %v727 = vld [vmem:[%s718 + $0x40] sm:$0xff]
      %v728 = vld [vmem:[%s718 + $0x48] sm:$0xff]
      %v729 = vld [vmem:[%s718 + $0x50] sm:$0xff]
      %v730 = vld [vmem:[%s718 + $0x58] sm:$0xff]
      %v731 = vld [vmem:[%s718 + $0x60] sm:$0xff]
      %v732 = vld [vmem:[%s718 + $0x68] sm:$0xff]
      %v733 = vld [vmem:[%s718 + $0x70] sm:$0xff]
      %v734 = vld [vmem:[%s718 + $0x78] sm:$0xff]
      %735 = vmatprep.subr.mxu0 0.0
      %736 = vmatpush1.msra.mxu0 %v734
      %737 = vmatprep.subr.mxu0 0.0
      %738 = vmatpush1.msra.mxu0 %v733
      %739 = vmatprep.subr.mxu0 0.0
      %740 = vmatpush1.msra.mxu0 %v732
      %741 = vmatprep.subr.mxu0 0.0
      %742 = vmatpush1.msra.mxu0 %v731
      %743 = vmatprep.subr.mxu0 0.0
      %744 = vmatpush1.msra.mxu0 %v730
      %745 = vmatprep.subr.mxu0 0.0
      %746 = vmatpush1.msra.mxu0 %v729
      %747 = vmatprep.subr.mxu0 0.0
      %748 = vmatpush1.msra.mxu0 %v728
      %749 = vmatprep.subr.mxu0 0.0
      %750 = vmatpush1.msra.mxu0 %v727
      %751 = vmatprep.subr.mxu0 0.0
      %752 = vmatpush1.msra.mxu0 %v726
      %753 = vmatprep.subr.mxu0 0.0
      %754 = vmatpush1.msra.mxu0 %v725
      %755 = vmatprep.subr.mxu0 0.0
      %756 = vmatpush1.msra.mxu0 %v724
      %757 = vmatprep.subr.mxu0 0.0
      %758 = vmatpush1.msra.mxu0 %v723
      %759 = vmatprep.subr.mxu0 0.0
      %760 = vmatpush1.msra.mxu0 %v722
      %761 = vmatprep.subr.mxu0 0.0
      %762 = vmatpush1.msra.mxu0 %v721
      %763 = vmatprep.subr.mxu0 0.0
      %764 = vmatpush1.msra.mxu0 %v720
      %765 = vmatprep.subr.mxu0 0.0
      %766 = vmatpush1.msra.mxu0 %v719
      %767 = vmatprep.subr.mxu0 0.0
      %768 = vmatpush2.msra.mxu0 0.0
      %769 = vmatprep.subr.mxu0 0.0
      %770 = vmatpush2.msra.mxu0 0.0
      %771 = vmatprep.subr.mxu0 0.0
      %772 = vmatpush2.msra.mxu0 0.0
      %773 = vmatprep.subr.mxu0 0.0
      %774 = vmatpush2.msra.mxu0 0.0
      %775 = vmatprep.subr.mxu0 0.0
      %776 = vmatpush2.msra.mxu0 0.0
      %777 = vmatprep.subr.mxu0 0.0
      %778 = vmatpush2.msra.mxu0 0.0
      %779 = vmatprep.subr.mxu0 0.0
      %780 = vmatpush2.msra.mxu0 0.0
      %781 = vmatprep.subr.mxu0 0.0
      %782 = vmatpush2.msra.mxu0 0.0
      %783 = vmatprep.subr.mxu0 0.0
      %784 = vmatpush2.msra.mxu0 0.0
      %785 = vmatprep.subr.mxu0 0.0
      %786 = vmatpush2.msra.mxu0 0.0
      %787 = vmatprep.subr.mxu0 0.0
      %788 = vmatpush2.msra.mxu0 0.0
      %789 = vmatprep.subr.mxu0 0.0
      %790 = vmatpush2.msra.mxu0 0.0
      %791 = vmatprep.subr.mxu0 0.0
      %792 = vmatpush2.msra.mxu0 0.0
      %793 = vmatprep.subr.mxu0 0.0
      %794 = vmatpush2.msra.mxu0 0.0
      %795 = vmatprep.subr.mxu0 0.0
      %796 = vmatpush2.msra.mxu0 0.0
      %797 = vmatprep.subr.mxu0 0.0
      %798 = vmatpush2.msra.mxu0 0.0
      %799 = vmatprep.mubr.f32.mxu0 0.0
      %800 = vmatmul.mubr.f32.gmra.mxu0 %v467
      %v801 = vpop.f32.mrf.mxu0
      %v802 = vadd.f32 0.0, %v801
      %v803 = vpop.f32.mrf.mxu0
      %804 = vmatprep.mubr.f32.mxu0 0.0
      %805 = vmatmul.mubr.f32.gmra.mxu0 %v468
      %v806 = vpop.f32.mrf.mxu0
      %v807 = vadd.f32 0.0, %v806
      %v808 = vpop.f32.mrf.mxu0
      %809 = vmatprep.mubr.f32.mxu0 0.0
      %810 = vmatmul.mubr.f32.gmra.mxu0 %v469
      %v811 = vpop.f32.mrf.mxu0
      %v812 = vadd.f32 0.0, %v811
      %v813 = vpop.f32.mrf.mxu0
      %814 = vmatprep.mubr.f32.mxu0 0.0
      %815 = vmatmul.mubr.f32.gmra.mxu0 %v470
      %v816 = vpop.f32.mrf.mxu0
      %v817 = vadd.f32 0.0, %v816
      %v818 = vpop.f32.mrf.mxu0
      %819 = vmatprep.mubr.f32.mxu0 0.0
      %820 = vmatmul.mubr.f32.gmra.mxu0 %v471
      %v821 = vpop.f32.mrf.mxu0
      %v822 = vadd.f32 0.0, %v821
      %v823 = vpop.f32.mrf.mxu0
      %824 = vmatprep.mubr.f32.mxu0 0.0
      %825 = vmatmul.mubr.f32.gmra.mxu0 %v472
      %v826 = vpop.f32.mrf.mxu0
      %v827 = vadd.f32 0.0, %v826
      %v828 = vpop.f32.mrf.mxu0
      %829 = vmatprep.mubr.f32.mxu0 0.0
      %830 = vmatmul.mubr.f32.gmra.mxu0 %v473
      %v831 = vpop.f32.mrf.mxu0
      %v832 = vadd.f32 0.0, %v831
      %v833 = vpop.f32.mrf.mxu0
      %834 = vmatprep.mubr.f32.mxu0 0.0
      %835 = vmatmul.mubr.f32.gmra.mxu0 %v474
      %v836 = vpop.f32.mrf.mxu0
      %v837 = vadd.f32 0.0, %v836
      %v838 = vpop.f32.mrf.mxu0
      %839 = vdwg.mxu0
      %v840 = vadd.f32 %v680, %v802
      %v841 = vadd.f32 %v685, %v807
      %v842 = vadd.f32 %v690, %v812
      %v843 = vadd.f32 %v695, %v817
      %v844 = vadd.f32 %v700, %v822
      %v845 = vadd.f32 %v705, %v827
      %v846 = vadd.f32 %v710, %v832
      %v847 = vadd.f32 %v715, %v837
      %v848 = vld [vmem:[#allocation2 + $0x1] sm:$0xff]
      %v849 = vld [vmem:[#allocation2 + $0x9] sm:$0xff]
      %v850 = vld [vmem:[#allocation2 + $0x11] sm:$0xff]
      %v851 = vld [vmem:[#allocation2 + $0x19] sm:$0xff]
      %v852 = vld [vmem:[#allocation2 + $0x21] sm:$0xff]
      %v853 = vld [vmem:[#allocation2 + $0x29] sm:$0xff]
      %v854 = vld [vmem:[#allocation2 + $0x31] sm:$0xff]
      %v855 = vld [vmem:[#allocation2 + $0x39] sm:$0xff]
      %v856 = vld [vmem:[#allocation2 + $0x41] sm:$0xff]
      %v857 = vld [vmem:[#allocation2 + $0x49] sm:$0xff]
      %s858 = scalar_lea.vmem %s3, 128
      %v859 = vld [vmem:[%s858] sm:$0xff]
      %v860 = vld [vmem:[%s858 + $0x8] sm:$0xff]
      %v861 = vld [vmem:[%s858 + $0x10] sm:$0xff]
      %v862 = vld [vmem:[%s858 + $0x18] sm:$0xff]
      %v863 = vld [vmem:[%s858 + $0x20] sm:$0xff]
      %v864 = vld [vmem:[%s858 + $0x28] sm:$0xff]
      %v865 = vld [vmem:[%s858 + $0x30] sm:$0xff]
      %v866 = vld [vmem:[%s858 + $0x38] sm:$0xff]
      %v867 = vld [vmem:[%s858 + $0x40] sm:$0xff]
      %v868 = vld [vmem:[%s858 + $0x48] sm:$0xff]
      %v869 = vld [vmem:[%s858 + $0x50] sm:$0xff]
      %v870 = vld [vmem:[%s858 + $0x58] sm:$0xff]
      %v871 = vld [vmem:[%s858 + $0x60] sm:$0xff]
      %v872 = vld [vmem:[%s858 + $0x68] sm:$0xff]
      %v873 = vld [vmem:[%s858 + $0x70] sm:$0xff]
      %v874 = vld [vmem:[%s858 + $0x78] sm:$0xff]
      %875 = vmatprep.subr.mxu0 0.0
      %876 = vmatpush1.msra.mxu0 %v874
      %877 = vmatprep.subr.mxu0 0.0
      %878 = vmatpush1.msra.mxu0 %v873
      %879 = vmatprep.subr.mxu0 0.0
      %880 = vmatpush1.msra.mxu0 %v872
      %881 = vmatprep.subr.mxu0 0.0
      %882 = vmatpush1.msra.mxu0 %v871
      %883 = vmatprep.subr.mxu0 0.0
      %884 = vmatpush1.msra.mxu0 %v870
      %885 = vmatprep.subr.mxu0 0.0
      %886 = vmatpush1.msra.mxu0 %v869
      %887 = vmatprep.subr.mxu0 0.0
      %888 = vmatpush1.msra.mxu0 %v868
      %889 = vmatprep.subr.mxu0 0.0
      %890 = vmatpush1.msra.mxu0 %v867
      %891 = vmatprep.subr.mxu0 0.0
      %892 = vmatpush1.msra.mxu0 %v866
      %893 = vmatprep.subr.mxu0 0.0
      %894 = vmatpush1.msra.mxu0 %v865
      %895 = vmatprep.subr.mxu0 0.0
      %896 = vmatpush1.msra.mxu0 %v864
      %897 = vmatprep.subr.mxu0 0.0
      %898 = vmatpush1.msra.mxu0 %v863
      %899 = vmatprep.subr.mxu0 0.0
      %900 = vmatpush1.msra.mxu0 %v862
      %901 = vmatprep.subr.mxu0 0.0
      %902 = vmatpush1.msra.mxu0 %v861
      %903 = vmatprep.subr.mxu0 0.0
      %904 = vmatpush1.msra.mxu0 %v860
      %905 = vmatprep.subr.mxu0 0.0
      %906 = vmatpush1.msra.mxu0 %v859
      %907 = vmatprep.subr.mxu0 0.0
      %908 = vmatpush2.msra.mxu0 0.0
      %909 = vmatprep.subr.mxu0 0.0
      %910 = vmatpush2.msra.mxu0 0.0
      %911 = vmatprep.subr.mxu0 0.0
      %912 = vmatpush2.msra.mxu0 0.0
      %913 = vmatprep.subr.mxu0 0.0
      %914 = vmatpush2.msra.mxu0 0.0
      %915 = vmatprep.subr.mxu0 0.0
      %916 = vmatpush2.msra.mxu0 0.0
      %917 = vmatprep.subr.mxu0 0.0
      %918 = vmatpush2.msra.mxu0 0.0
      %919 = vmatprep.subr.mxu0 0.0
      %920 = vmatpush2.msra.mxu0 0.0
      %921 = vmatprep.subr.mxu0 0.0
      %922 = vmatpush2.msra.mxu0 0.0
      %923 = vmatprep.subr.mxu0 0.0
      %924 = vmatpush2.msra.mxu0 0.0
      %925 = vmatprep.subr.mxu0 0.0
      %926 = vmatpush2.msra.mxu0 0.0
      %927 = vmatprep.subr.mxu0 0.0
      %928 = vmatpush2.msra.mxu0 0.0
      %929 = vmatprep.subr.mxu0 0.0
      %930 = vmatpush2.msra.mxu0 0.0
      %931 = vmatprep.subr.mxu0 0.0
      %932 = vmatpush2.msra.mxu0 0.0
      %933 = vmatprep.subr.mxu0 0.0
      %934 = vmatpush2.msra.mxu0 0.0
      %935 = vmatprep.subr.mxu0 0.0
      %936 = vmatpush2.msra.mxu0 0.0
      %937 = vmatprep.subr.mxu0 0.0
      %938 = vmatpush2.msra.mxu0 0.0
      %939 = vmatprep.mubr.f32.mxu0 0.0
      %940 = vmatmul.mubr.f32.gmra.mxu0 %v848
      %v941 = vpop.f32.mrf.mxu0
      %v942 = vadd.f32 0.0, %v941
      %v943 = vpop.f32.mrf.mxu0
      %944 = vmatprep.mubr.f32.mxu0 0.0
      %945 = vmatmul.mubr.f32.gmra.mxu0 %v849
      %v946 = vpop.f32.mrf.mxu0
      %v947 = vadd.f32 0.0, %v946
      %v948 = vpop.f32.mrf.mxu0
      %949 = vmatprep.mubr.f32.mxu0 0.0
      %950 = vmatmul.mubr.f32.gmra.mxu0 %v850
      %v951 = vpop.f32.mrf.mxu0
      %v952 = vadd.f32 0.0, %v951
      %v953 = vpop.f32.mrf.mxu0
      %954 = vmatprep.mubr.f32.mxu0 0.0
      %955 = vmatmul.mubr.f32.gmra.mxu0 %v851
      %v956 = vpop.f32.mrf.mxu0
      %v957 = vadd.f32 0.0, %v956
      %v958 = vpop.f32.mrf.mxu0
      %959 = vmatprep.mubr.f32.mxu0 0.0
      %960 = vmatmul.mubr.f32.gmra.mxu0 %v852
      %v961 = vpop.f32.mrf.mxu0
      %v962 = vadd.f32 0.0, %v961
      %v963 = vpop.f32.mrf.mxu0
      %964 = vmatprep.mubr.f32.mxu0 0.0
      %965 = vmatmul.mubr.f32.gmra.mxu0 %v853
      %v966 = vpop.f32.mrf.mxu0
      %v967 = vadd.f32 0.0, %v966
      %v968 = vpop.f32.mrf.mxu0
      %969 = vmatprep.mubr.f32.mxu0 0.0
      %970 = vmatmul.mubr.f32.gmra.mxu0 %v854
      %v971 = vpop.f32.mrf.mxu0
      %v972 = vadd.f32 0.0, %v971
      %v973 = vpop.f32.mrf.mxu0
      %974 = vmatprep.mubr.f32.mxu0 0.0
      %975 = vmatmul.mubr.f32.gmra.mxu0 %v855
      %v976 = vpop.f32.mrf.mxu0
      %v977 = vadd.f32 0.0, %v976
      %v978 = vpop.f32.mrf.mxu0
      %979 = vdwg.mxu0
      %v980 = vadd.f32 %v840, %v942
      %v981 = vadd.f32 %v841, %v947
      %v982 = vadd.f32 %v842, %v952
      %v983 = vadd.f32 %v843, %v957
      %v984 = vadd.f32 %v844, %v962
      %v985 = vadd.f32 %v845, %v967
      %v986 = vadd.f32 %v846, %v972
      %v987 = vadd.f32 %v847, %v977
      %s988 = scalar_lea.vmem %s3, 512
      %v989 = vld [vmem:[%s988] sm:$0xff]
      %v990 = vld [vmem:[%s988 + $0x8] sm:$0xff]
      %v991 = vld [vmem:[%s988 + $0x10] sm:$0xff]
      %v992 = vld [vmem:[%s988 + $0x18] sm:$0xff]
      %v993 = vld [vmem:[%s988 + $0x20] sm:$0xff]
      %v994 = vld [vmem:[%s988 + $0x28] sm:$0xff]
      %v995 = vld [vmem:[%s988 + $0x30] sm:$0xff]
      %v996 = vld [vmem:[%s988 + $0x38] sm:$0xff]
      %v997 = vld [vmem:[%s988 + $0x40] sm:$0xff]
      %v998 = vld [vmem:[%s988 + $0x48] sm:$0xff]
      %v999 = vld [vmem:[%s988 + $0x50] sm:$0xff]
      %v1000 = vld [vmem:[%s988 + $0x58] sm:$0xff]
      %v1001 = vld [vmem:[%s988 + $0x60] sm:$0xff]
      %v1002 = vld [vmem:[%s988 + $0x68] sm:$0xff]
      %v1003 = vld [vmem:[%s988 + $0x70] sm:$0xff]
      %v1004 = vld [vmem:[%s988 + $0x78] sm:$0xff]
      %1005 = vmatprep.subr.mxu0 0.0
      %1006 = vmatpush1.msra.mxu0 %v1004
      %1007 = vmatprep.subr.mxu0 0.0
      %1008 = vmatpush1.msra.mxu0 %v1003
      %1009 = vmatprep.subr.mxu0 0.0
      %1010 = vmatpush1.msra.mxu0 %v1002
      %1011 = vmatprep.subr.mxu0 0.0
      %1012 = vmatpush1.msra.mxu0 %v1001
      %1013 = vmatprep.subr.mxu0 0.0
      %1014 = vmatpush1.msra.mxu0 %v1000
      %1015 = vmatprep.subr.mxu0 0.0
      %1016 = vmatpush1.msra.mxu0 %v999
      %1017 = vmatprep.subr.mxu0 0.0
      %1018 = vmatpush1.msra.mxu0 %v998
      %1019 = vmatprep.subr.mxu0 0.0
      %1020 = vmatpush1.msra.mxu0 %v997
      %1021 = vmatprep.subr.mxu0 0.0
      %1022 = vmatpush1.msra.mxu0 %v996
      %1023 = vmatprep.subr.mxu0 0.0
      %1024 = vmatpush1.msra.mxu0 %v995
      %1025 = vmatprep.subr.mxu0 0.0
      %1026 = vmatpush1.msra.mxu0 %v994
      %1027 = vmatprep.subr.mxu0 0.0
      %1028 = vmatpush1.msra.mxu0 %v993
      %1029 = vmatprep.subr.mxu0 0.0
      %1030 = vmatpush1.msra.mxu0 %v992
      %1031 = vmatprep.subr.mxu0 0.0
      %1032 = vmatpush1.msra.mxu0 %v991
      %1033 = vmatprep.subr.mxu0 0.0
      %1034 = vmatpush1.msra.mxu0 %v990
      %1035 = vmatprep.subr.mxu0 0.0
      %1036 = vmatpush1.msra.mxu0 %v989
      %1037 = vmatprep.subr.mxu0 0.0
      %1038 = vmatpush2.msra.mxu0 0.0
      %1039 = vmatprep.subr.mxu0 0.0
      %1040 = vmatpush2.msra.mxu0 0.0
      %1041 = vmatprep.subr.mxu0 0.0
      %1042 = vmatpush2.msra.mxu0 0.0
      %1043 = vmatprep.subr.mxu0 0.0
      %1044 = vmatpush2.msra.mxu0 0.0
      %1045 = vmatprep.subr.mxu0 0.0
      %1046 = vmatpush2.msra.mxu0 0.0
      %1047 = vmatprep.subr.mxu0 0.0
      %1048 = vmatpush2.msra.mxu0 0.0
      %1049 = vmatprep.subr.mxu0 0.0
      %1050 = vmatpush2.msra.mxu0 0.0
      %1051 = vmatprep.subr.mxu0 0.0
      %1052 = vmatpush2.msra.mxu0 0.0
      %1053 = vmatprep.subr.mxu0 0.0
      %1054 = vmatpush2.msra.mxu0 0.0
      %1055 = vmatprep.subr.mxu0 0.0
      %1056 = vmatpush2.msra.mxu0 0.0
      %1057 = vmatprep.subr.mxu0 0.0
      %1058 = vmatpush2.msra.mxu0 0.0
      %1059 = vmatprep.subr.mxu0 0.0
      %1060 = vmatpush2.msra.mxu0 0.0
      %1061 = vmatprep.subr.mxu0 0.0
      %1062 = vmatpush2.msra.mxu0 0.0
      %1063 = vmatprep.subr.mxu0 0.0
      %1064 = vmatpush2.msra.mxu0 0.0
      %1065 = vmatprep.subr.mxu0 0.0
      %1066 = vmatpush2.msra.mxu0 0.0
      %1067 = vmatprep.subr.mxu0 0.0
      %1068 = vmatpush2.msra.mxu0 0.0
      %1069 = vmatprep.mubr.f32.mxu0 0.0
      %1070 = vmatmul.mubr.f32.gmra.mxu0 %v849
      %v1071 = vpop.f32.mrf.mxu0
      %v1072 = vadd.f32 0.0, %v1071
      %v1073 = vpop.f32.mrf.mxu0
      %1074 = vmatprep.mubr.f32.mxu0 0.0
      %1075 = vmatmul.mubr.f32.gmra.mxu0 %v850
      %v1076 = vpop.f32.mrf.mxu0
      %v1077 = vadd.f32 0.0, %v1076
      %v1078 = vpop.f32.mrf.mxu0
      %1079 = vmatprep.mubr.f32.mxu0 0.0
      %1080 = vmatmul.mubr.f32.gmra.mxu0 %v851
      %v1081 = vpop.f32.mrf.mxu0
      %v1082 = vadd.f32 0.0, %v1081
      %v1083 = vpop.f32.mrf.mxu0
      %1084 = vmatprep.mubr.f32.mxu0 0.0
      %1085 = vmatmul.mubr.f32.gmra.mxu0 %v852
      %v1086 = vpop.f32.mrf.mxu0
      %v1087 = vadd.f32 0.0, %v1086
      %v1088 = vpop.f32.mrf.mxu0
      %1089 = vmatprep.mubr.f32.mxu0 0.0
      %1090 = vmatmul.mubr.f32.gmra.mxu0 %v853
      %v1091 = vpop.f32.mrf.mxu0
      %v1092 = vadd.f32 0.0, %v1091
      %v1093 = vpop.f32.mrf.mxu0
      %1094 = vmatprep.mubr.f32.mxu0 0.0
      %1095 = vmatmul.mubr.f32.gmra.mxu0 %v854
      %v1096 = vpop.f32.mrf.mxu0
      %v1097 = vadd.f32 0.0, %v1096
      %v1098 = vpop.f32.mrf.mxu0
      %1099 = vmatprep.mubr.f32.mxu0 0.0
      %1100 = vmatmul.mubr.f32.gmra.mxu0 %v855
      %v1101 = vpop.f32.mrf.mxu0
      %v1102 = vadd.f32 0.0, %v1101
      %v1103 = vpop.f32.mrf.mxu0
      %1104 = vmatprep.mubr.f32.mxu0 0.0
      %1105 = vmatmul.mubr.f32.gmra.mxu0 %v856
      %v1106 = vpop.f32.mrf.mxu0
      %v1107 = vadd.f32 0.0, %v1106
      %v1108 = vpop.f32.mrf.mxu0
      %1109 = vdwg.mxu0
      %v1110 = vadd.f32 %v980, %v1072
      %v1111 = vadd.f32 %v981, %v1077
      %v1112 = vadd.f32 %v982, %v1082
      %v1113 = vadd.f32 %v983, %v1087
      %v1114 = vadd.f32 %v984, %v1092
      %v1115 = vadd.f32 %v985, %v1097
      %v1116 = vadd.f32 %v986, %v1102
      %v1117 = vadd.f32 %v987, %v1107
      %s1118 = scalar_lea.vmem %s3, 896
      %v1119 = vld [vmem:[%s1118] sm:$0xff]
      %v1120 = vld [vmem:[%s1118 + $0x8] sm:$0xff]
      %v1121 = vld [vmem:[%s1118 + $0x10] sm:$0xff]
      %v1122 = vld [vmem:[%s1118 + $0x18] sm:$0xff]
      %v1123 = vld [vmem:[%s1118 + $0x20] sm:$0xff]
      %v1124 = vld [vmem:[%s1118 + $0x28] sm:$0xff]
      %v1125 = vld [vmem:[%s1118 + $0x30] sm:$0xff]
      %v1126 = vld [vmem:[%s1118 + $0x38] sm:$0xff]
      %v1127 = vld [vmem:[%s1118 + $0x40] sm:$0xff]
      %v1128 = vld [vmem:[%s1118 + $0x48] sm:$0xff]
      %v1129 = vld [vmem:[%s1118 + $0x50] sm:$0xff]
      %v1130 = vld [vmem:[%s1118 + $0x58] sm:$0xff]
      %v1131 = vld [vmem:[%s1118 + $0x60] sm:$0xff]
      %v1132 = vld [vmem:[%s1118 + $0x68] sm:$0xff]
      %v1133 = vld [vmem:[%s1118 + $0x70] sm:$0xff]
      %v1134 = vld [vmem:[%s1118 + $0x78] sm:$0xff]
      %1135 = vmatprep.subr.mxu0 0.0
      %1136 = vmatpush1.msra.mxu0 %v1134
      %1137 = vmatprep.subr.mxu0 0.0
      %1138 = vmatpush1.msra.mxu0 %v1133
      %1139 = vmatprep.subr.mxu0 0.0
      %1140 = vmatpush1.msra.mxu0 %v1132
      %1141 = vmatprep.subr.mxu0 0.0
      %1142 = vmatpush1.msra.mxu0 %v1131
      %1143 = vmatprep.subr.mxu0 0.0
      %1144 = vmatpush1.msra.mxu0 %v1130
      %1145 = vmatprep.subr.mxu0 0.0
      %1146 = vmatpush1.msra.mxu0 %v1129
      %1147 = vmatprep.subr.mxu0 0.0
      %1148 = vmatpush1.msra.mxu0 %v1128
      %1149 = vmatprep.subr.mxu0 0.0
      %1150 = vmatpush1.msra.mxu0 %v1127
      %1151 = vmatprep.subr.mxu0 0.0
      %1152 = vmatpush1.msra.mxu0 %v1126
      %1153 = vmatprep.subr.mxu0 0.0
      %1154 = vmatpush1.msra.mxu0 %v1125
      %1155 = vmatprep.subr.mxu0 0.0
      %1156 = vmatpush1.msra.mxu0 %v1124
      %1157 = vmatprep.subr.mxu0 0.0
      %1158 = vmatpush1.msra.mxu0 %v1123
      %1159 = vmatprep.subr.mxu0 0.0
      %1160 = vmatpush1.msra.mxu0 %v1122
      %1161 = vmatprep.subr.mxu0 0.0
      %1162 = vmatpush1.msra.mxu0 %v1121
      %1163 = vmatprep.subr.mxu0 0.0
      %1164 = vmatpush1.msra.mxu0 %v1120
      %1165 = vmatprep.subr.mxu0 0.0
      %1166 = vmatpush1.msra.mxu0 %v1119
      %1167 = vmatprep.subr.mxu0 0.0
      %1168 = vmatpush2.msra.mxu0 0.0
      %1169 = vmatprep.subr.mxu0 0.0
      %1170 = vmatpush2.msra.mxu0 0.0
      %1171 = vmatprep.subr.mxu0 0.0
      %1172 = vmatpush2.msra.mxu0 0.0
      %1173 = vmatprep.subr.mxu0 0.0
      %1174 = vmatpush2.msra.mxu0 0.0
      %1175 = vmatprep.subr.mxu0 0.0
      %1176 = vmatpush2.msra.mxu0 0.0
      %1177 = vmatprep.subr.mxu0 0.0
      %1178 = vmatpush2.msra.mxu0 0.0
      %1179 = vmatprep.subr.mxu0 0.0
      %1180 = vmatpush2.msra.mxu0 0.0
      %1181 = vmatprep.subr.mxu0 0.0
      %1182 = vmatpush2.msra.mxu0 0.0
      %1183 = vmatprep.subr.mxu0 0.0
      %1184 = vmatpush2.msra.mxu0 0.0
      %1185 = vmatprep.subr.mxu0 0.0
      %1186 = vmatpush2.msra.mxu0 0.0
      %1187 = vmatprep.subr.mxu0 0.0
      %1188 = vmatpush2.msra.mxu0 0.0
      %1189 = vmatprep.subr.mxu0 0.0
      %1190 = vmatpush2.msra.mxu0 0.0
      %1191 = vmatprep.subr.mxu0 0.0
      %1192 = vmatpush2.msra.mxu0 0.0
      %1193 = vmatprep.subr.mxu0 0.0
      %1194 = vmatpush2.msra.mxu0 0.0
      %1195 = vmatprep.subr.mxu0 0.0
      %1196 = vmatpush2.msra.mxu0 0.0
      %1197 = vmatprep.subr.mxu0 0.0
      %1198 = vmatpush2.msra.mxu0 0.0
      %1199 = vmatprep.mubr.f32.mxu0 0.0
      %1200 = vmatmul.mubr.f32.gmra.mxu0 %v850
      %v1201 = vpop.f32.mrf.mxu0
      %v1202 = vadd.f32 0.0, %v1201
      %v1203 = vpop.f32.mrf.mxu0
      %1204 = vmatprep.mubr.f32.mxu0 0.0
      %1205 = vmatmul.mubr.f32.gmra.mxu0 %v851
      %v1206 = vpop.f32.mrf.mxu0
      %v1207 = vadd.f32 0.0, %v1206
      %v1208 = vpop.f32.mrf.mxu0
      %1209 = vmatprep.mubr.f32.mxu0 0.0
      %1210 = vmatmul.mubr.f32.gmra.mxu0 %v852
      %v1211 = vpop.f32.mrf.mxu0
      %v1212 = vadd.f32 0.0, %v1211
      %v1213 = vpop.f32.mrf.mxu0
      %1214 = vmatprep.mubr.f32.mxu0 0.0
      %1215 = vmatmul.mubr.f32.gmra.mxu0 %v853
      %v1216 = vpop.f32.mrf.mxu0
      %v1217 = vadd.f32 0.0, %v1216
      %v1218 = vpop.f32.mrf.mxu0
      %1219 = vmatprep.mubr.f32.mxu0 0.0
      %1220 = vmatmul.mubr.f32.gmra.mxu0 %v854
      %v1221 = vpop.f32.mrf.mxu0
      %v1222 = vadd.f32 0.0, %v1221
      %v1223 = vpop.f32.mrf.mxu0
      %1224 = vmatprep.mubr.f32.mxu0 0.0
      %1225 = vmatmul.mubr.f32.gmra.mxu0 %v855
      %v1226 = vpop.f32.mrf.mxu0
      %v1227 = vadd.f32 0.0, %v1226
      %v1228 = vpop.f32.mrf.mxu0
      %1229 = vmatprep.mubr.f32.mxu0 0.0
      %1230 = vmatmul.mubr.f32.gmra.mxu0 %v856
      %v1231 = vpop.f32.mrf.mxu0
      %v1232 = vadd.f32 0.0, %v1231
      %v1233 = vpop.f32.mrf.mxu0
      %1234 = vmatprep.mubr.f32.mxu0 0.0
      %1235 = vmatmul.mubr.f32.gmra.mxu0 %v857
      %v1236 = vpop.f32.mrf.mxu0
      %v1237 = vadd.f32 0.0, %v1236
      %v1238 = vpop.f32.mrf.mxu0
      %1239 = vdwg.mxu0
      %v1240 = vadd.f32 %v1110, %v1202
      %v1241 = vadd.f32 %v1111, %v1207
      %v1242 = vadd.f32 %v1112, %v1212
      %v1243 = vadd.f32 %v1113, %v1217
      %v1244 = vadd.f32 %v1114, %v1222
      %v1245 = vadd.f32 %v1115, %v1227
      %v1246 = vadd.f32 %v1116, %v1232
      %v1247 = vadd.f32 %v1117, %v1237
      %v1248 = vld [vmem:[#allocation2 + $0x2] sm:$0xff]
      %v1249 = vld [vmem:[#allocation2 + $0xa] sm:$0xff]
      %v1250 = vld [vmem:[#allocation2 + $0x12] sm:$0xff]
      %v1251 = vld [vmem:[#allocation2 + $0x1a] sm:$0xff]
      %v1252 = vld [vmem:[#allocation2 + $0x22] sm:$0xff]
      %v1253 = vld [vmem:[#allocation2 + $0x2a] sm:$0xff]
      %v1254 = vld [vmem:[#allocation2 + $0x32] sm:$0xff]
      %v1255 = vld [vmem:[#allocation2 + $0x3a] sm:$0xff]
      %v1256 = vld [vmem:[#allocation2 + $0x42] sm:$0xff]
      %v1257 = vld [vmem:[#allocation2 + $0x4a] sm:$0xff]
      %vm1258 = vcmp.eq.s32.totalorder %v415, 7
      %vm1259 = vcmp.eq.s32.totalorder %v416, 7
      %vm1260 = vcmp.eq.s32.totalorder %v417, 7
      %vm1261 = vcmp.eq.s32.totalorder %v418, 7
      %vm1262 = vcmp.eq.s32.totalorder %v419, 7
      %vm1263 = vcmp.eq.s32.totalorder %v420, 7
      %vm1264 = vcmp.eq.s32.totalorder %v421, 7
      %vm1265 = vcmp.eq.s32.totalorder %v422, 7
      %vm1266 = vcmp.eq.s32.totalorder %v423, 7
      %vm1267 = vcmp.eq.s32.totalorder %v424, 7
      %v1268 = vsel %vm1258, 1, 0
      %v1269 = vsel %vm1259, 1, 0
      %v1270 = vsel %vm1260, 1, 0
      %v1271 = vsel %vm1261, 1, 0
      %v1272 = vsel %vm1262, 1, 0
      %v1273 = vsel %vm1263, 1, 0
      %v1274 = vsel %vm1264, 1, 0
      %v1275 = vsel %vm1265, 1, 0
      %v1276 = vsel %vm1266, 1, 0
      %v1277 = vsel %vm1267, 1, 0
      %vm1278 = vcmp.eq.s32.totalorder %v1268, 1
      %vm1279 = vcmp.eq.s32.totalorder %v1269, 1
      %vm1280 = vcmp.eq.s32.totalorder %v1270, 1
      %vm1281 = vcmp.eq.s32.totalorder %v1271, 1
      %vm1282 = vcmp.eq.s32.totalorder %v1272, 1
      %vm1283 = vcmp.eq.s32.totalorder %v1273, 1
      %vm1284 = vcmp.eq.s32.totalorder %v1274, 1
      %vm1285 = vcmp.eq.s32.totalorder %v1275, 1
      %vm1286 = vcmp.eq.s32.totalorder %v1276, 1
      %vm1287 = vcmp.eq.s32.totalorder %v1277, 1
      %v1288 = vsel %vm1278, 0.0, %v1248
      %v1289 = vsel %vm1279, 0.0, %v1249
      %v1290 = vsel %vm1280, 0.0, %v1250
      %v1291 = vsel %vm1281, 0.0, %v1251
      %v1292 = vsel %vm1282, 0.0, %v1252
      %v1293 = vsel %vm1283, 0.0, %v1253
      %v1294 = vsel %vm1284, 0.0, %v1254
      %v1295 = vsel %vm1285, 0.0, %v1255
      %v1296 = vsel %vm1286, 0.0, %v1256
      %v1297 = vsel %vm1287, 0.0, %v1257
      %s1298 = scalar_lea.vmem %s3, 256
      %v1299 = vld [vmem:[%s1298] sm:$0xff]
      %v1300 = vld [vmem:[%s1298 + $0x8] sm:$0xff]
      %v1301 = vld [vmem:[%s1298 + $0x10] sm:$0xff]
      %v1302 = vld [vmem:[%s1298 + $0x18] sm:$0xff]
      %v1303 = vld [vmem:[%s1298 + $0x20] sm:$0xff]
      %v1304 = vld [vmem:[%s1298 + $0x28] sm:$0xff]
      %v1305 = vld [vmem:[%s1298 + $0x30] sm:$0xff]
      %v1306 = vld [vmem:[%s1298 + $0x38] sm:$0xff]
      %v1307 = vld [vmem:[%s1298 + $0x40] sm:$0xff]
      %v1308 = vld [vmem:[%s1298 + $0x48] sm:$0xff]
      %v1309 = vld [vmem:[%s1298 + $0x50] sm:$0xff]
      %v1310 = vld [vmem:[%s1298 + $0x58] sm:$0xff]
      %v1311 = vld [vmem:[%s1298 + $0x60] sm:$0xff]
      %v1312 = vld [vmem:[%s1298 + $0x68] sm:$0xff]
      %v1313 = vld [vmem:[%s1298 + $0x70] sm:$0xff]
      %v1314 = vld [vmem:[%s1298 + $0x78] sm:$0xff]
      %1315 = vmatprep.subr.mxu0 0.0
      %1316 = vmatpush1.msra.mxu0 %v1314
      %1317 = vmatprep.subr.mxu0 0.0
      %1318 = vmatpush1.msra.mxu0 %v1313
      %1319 = vmatprep.subr.mxu0 0.0
      %1320 = vmatpush1.msra.mxu0 %v1312
      %1321 = vmatprep.subr.mxu0 0.0
      %1322 = vmatpush1.msra.mxu0 %v1311
      %1323 = vmatprep.subr.mxu0 0.0
      %1324 = vmatpush1.msra.mxu0 %v1310
      %1325 = vmatprep.subr.mxu0 0.0
      %1326 = vmatpush1.msra.mxu0 %v1309
      %1327 = vmatprep.subr.mxu0 0.0
      %1328 = vmatpush1.msra.mxu0 %v1308
      %1329 = vmatprep.subr.mxu0 0.0
      %1330 = vmatpush1.msra.mxu0 %v1307
      %1331 = vmatprep.subr.mxu0 0.0
      %1332 = vmatpush1.msra.mxu0 %v1306
      %1333 = vmatprep.subr.mxu0 0.0
      %1334 = vmatpush1.msra.mxu0 %v1305
      %1335 = vmatprep.subr.mxu0 0.0
      %1336 = vmatpush1.msra.mxu0 %v1304
      %1337 = vmatprep.subr.mxu0 0.0
      %1338 = vmatpush1.msra.mxu0 %v1303
      %1339 = vmatprep.subr.mxu0 0.0
      %1340 = vmatpush1.msra.mxu0 %v1302
      %1341 = vmatprep.subr.mxu0 0.0
      %1342 = vmatpush1.msra.mxu0 %v1301
      %1343 = vmatprep.subr.mxu0 0.0
      %1344 = vmatpush1.msra.mxu0 %v1300
      %1345 = vmatprep.subr.mxu0 0.0
      %1346 = vmatpush1.msra.mxu0 %v1299
      %1347 = vmatprep.subr.mxu0 0.0
      %1348 = vmatpush2.msra.mxu0 0.0
      %1349 = vmatprep.subr.mxu0 0.0
      %1350 = vmatpush2.msra.mxu0 0.0
      %1351 = vmatprep.subr.mxu0 0.0
      %1352 = vmatpush2.msra.mxu0 0.0
      %1353 = vmatprep.subr.mxu0 0.0
      %1354 = vmatpush2.msra.mxu0 0.0
      %1355 = vmatprep.subr.mxu0 0.0
      %1356 = vmatpush2.msra.mxu0 0.0
      %1357 = vmatprep.subr.mxu0 0.0
      %1358 = vmatpush2.msra.mxu0 0.0
      %1359 = vmatprep.subr.mxu0 0.0
      %1360 = vmatpush2.msra.mxu0 0.0
      %1361 = vmatprep.subr.mxu0 0.0
      %1362 = vmatpush2.msra.mxu0 0.0
      %1363 = vmatprep.subr.mxu0 0.0
      %1364 = vmatpush2.msra.mxu0 0.0
      %1365 = vmatprep.subr.mxu0 0.0
      %1366 = vmatpush2.msra.mxu0 0.0
      %1367 = vmatprep.subr.mxu0 0.0
      %1368 = vmatpush2.msra.mxu0 0.0
      %1369 = vmatprep.subr.mxu0 0.0
      %1370 = vmatpush2.msra.mxu0 0.0
      %1371 = vmatprep.subr.mxu0 0.0
      %1372 = vmatpush2.msra.mxu0 0.0
      %1373 = vmatprep.subr.mxu0 0.0
      %1374 = vmatpush2.msra.mxu0 0.0
      %1375 = vmatprep.subr.mxu0 0.0
      %1376 = vmatpush2.msra.mxu0 0.0
      %1377 = vmatprep.subr.mxu0 0.0
      %1378 = vmatpush2.msra.mxu0 0.0
      %1379 = vmatprep.mubr.f32.mxu0 0.0
      %1380 = vmatmul.mubr.f32.gmra.mxu0 %v1288
      %v1381 = vpop.f32.mrf.mxu0
      %v1382 = vadd.f32 0.0, %v1381
      %v1383 = vpop.f32.mrf.mxu0
      %1384 = vmatprep.mubr.f32.mxu0 0.0
      %1385 = vmatmul.mubr.f32.gmra.mxu0 %v1289
      %v1386 = vpop.f32.mrf.mxu0
      %v1387 = vadd.f32 0.0, %v1386
      %v1388 = vpop.f32.mrf.mxu0
      %1389 = vmatprep.mubr.f32.mxu0 0.0
      %1390 = vmatmul.mubr.f32.gmra.mxu0 %v1290
      %v1391 = vpop.f32.mrf.mxu0
      %v1392 = vadd.f32 0.0, %v1391
      %v1393 = vpop.f32.mrf.mxu0
      %1394 = vmatprep.mubr.f32.mxu0 0.0
      %1395 = vmatmul.mubr.f32.gmra.mxu0 %v1291
      %v1396 = vpop.f32.mrf.mxu0
      %v1397 = vadd.f32 0.0, %v1396
      %v1398 = vpop.f32.mrf.mxu0
      %1399 = vmatprep.mubr.f32.mxu0 0.0
      %1400 = vmatmul.mubr.f32.gmra.mxu0 %v1292
      %v1401 = vpop.f32.mrf.mxu0
      %v1402 = vadd.f32 0.0, %v1401
      %v1403 = vpop.f32.mrf.mxu0
      %1404 = vmatprep.mubr.f32.mxu0 0.0
      %1405 = vmatmul.mubr.f32.gmra.mxu0 %v1293
      %v1406 = vpop.f32.mrf.mxu0
      %v1407 = vadd.f32 0.0, %v1406
      %v1408 = vpop.f32.mrf.mxu0
      %1409 = vmatprep.mubr.f32.mxu0 0.0
      %1410 = vmatmul.mubr.f32.gmra.mxu0 %v1294
      %v1411 = vpop.f32.mrf.mxu0
      %v1412 = vadd.f32 0.0, %v1411
      %v1413 = vpop.f32.mrf.mxu0
      %1414 = vmatprep.mubr.f32.mxu0 0.0
      %1415 = vmatmul.mubr.f32.gmra.mxu0 %v1295
      %v1416 = vpop.f32.mrf.mxu0
      %v1417 = vadd.f32 0.0, %v1416
      %v1418 = vpop.f32.mrf.mxu0
      %1419 = vdwg.mxu0
      %v1420 = vadd.f32 %v1240, %v1382
      %v1421 = vadd.f32 %v1241, %v1387
      %v1422 = vadd.f32 %v1242, %v1392
      %v1423 = vadd.f32 %v1243, %v1397
      %v1424 = vadd.f32 %v1244, %v1402
      %v1425 = vadd.f32 %v1245, %v1407
      %v1426 = vadd.f32 %v1246, %v1412
      %v1427 = vadd.f32 %v1247, %v1417
      %s1428 = scalar_lea.vmem %s3, 640
      %v1429 = vld [vmem:[%s1428] sm:$0xff]
      %v1430 = vld [vmem:[%s1428 + $0x8] sm:$0xff]
      %v1431 = vld [vmem:[%s1428 + $0x10] sm:$0xff]
      %v1432 = vld [vmem:[%s1428 + $0x18] sm:$0xff]
      %v1433 = vld [vmem:[%s1428 + $0x20] sm:$0xff]
      %v1434 = vld [vmem:[%s1428 + $0x28] sm:$0xff]
      %v1435 = vld [vmem:[%s1428 + $0x30] sm:$0xff]
      %v1436 = vld [vmem:[%s1428 + $0x38] sm:$0xff]
      %v1437 = vld [vmem:[%s1428 + $0x40] sm:$0xff]
      %v1438 = vld [vmem:[%s1428 + $0x48] sm:$0xff]
      %v1439 = vld [vmem:[%s1428 + $0x50] sm:$0xff]
      %v1440 = vld [vmem:[%s1428 + $0x58] sm:$0xff]
      %v1441 = vld [vmem:[%s1428 + $0x60] sm:$0xff]
      %v1442 = vld [vmem:[%s1428 + $0x68] sm:$0xff]
      %v1443 = vld [vmem:[%s1428 + $0x70] sm:$0xff]
      %v1444 = vld [vmem:[%s1428 + $0x78] sm:$0xff]
      %1445 = vmatprep.subr.mxu0 0.0
      %1446 = vmatpush1.msra.mxu0 %v1444
      %1447 = vmatprep.subr.mxu0 0.0
      %1448 = vmatpush1.msra.mxu0 %v1443
      %1449 = vmatprep.subr.mxu0 0.0
      %1450 = vmatpush1.msra.mxu0 %v1442
      %1451 = vmatprep.subr.mxu0 0.0
      %1452 = vmatpush1.msra.mxu0 %v1441
      %1453 = vmatprep.subr.mxu0 0.0
      %1454 = vmatpush1.msra.mxu0 %v1440
      %1455 = vmatprep.subr.mxu0 0.0
      %1456 = vmatpush1.msra.mxu0 %v1439
      %1457 = vmatprep.subr.mxu0 0.0
      %1458 = vmatpush1.msra.mxu0 %v1438
      %1459 = vmatprep.subr.mxu0 0.0
      %1460 = vmatpush1.msra.mxu0 %v1437
      %1461 = vmatprep.subr.mxu0 0.0
      %1462 = vmatpush1.msra.mxu0 %v1436
      %1463 = vmatprep.subr.mxu0 0.0
      %1464 = vmatpush1.msra.mxu0 %v1435
      %1465 = vmatprep.subr.mxu0 0.0
      %1466 = vmatpush1.msra.mxu0 %v1434
      %1467 = vmatprep.subr.mxu0 0.0
      %1468 = vmatpush1.msra.mxu0 %v1433
      %1469 = vmatprep.subr.mxu0 0.0
      %1470 = vmatpush1.msra.mxu0 %v1432
      %1471 = vmatprep.subr.mxu0 0.0
      %1472 = vmatpush1.msra.mxu0 %v1431
      %1473 = vmatprep.subr.mxu0 0.0
      %1474 = vmatpush1.msra.mxu0 %v1430
      %1475 = vmatprep.subr.mxu0 0.0
      %1476 = vmatpush1.msra.mxu0 %v1429
      %1477 = vmatprep.subr.mxu0 0.0
      %1478 = vmatpush2.msra.mxu0 0.0
      %1479 = vmatprep.subr.mxu0 0.0
      %1480 = vmatpush2.msra.mxu0 0.0
      %1481 = vmatprep.subr.mxu0 0.0
      %1482 = vmatpush2.msra.mxu0 0.0
      %1483 = vmatprep.subr.mxu0 0.0
      %1484 = vmatpush2.msra.mxu0 0.0
      %1485 = vmatprep.subr.mxu0 0.0
      %1486 = vmatpush2.msra.mxu0 0.0
      %1487 = vmatprep.subr.mxu0 0.0
      %1488 = vmatpush2.msra.mxu0 0.0
      %1489 = vmatprep.subr.mxu0 0.0
      %1490 = vmatpush2.msra.mxu0 0.0
      %1491 = vmatprep.subr.mxu0 0.0
      %1492 = vmatpush2.msra.mxu0 0.0
      %1493 = vmatprep.subr.mxu0 0.0
      %1494 = vmatpush2.msra.mxu0 0.0
      %1495 = vmatprep.subr.mxu0 0.0
      %1496 = vmatpush2.msra.mxu0 0.0
      %1497 = vmatprep.subr.mxu0 0.0
      %1498 = vmatpush2.msra.mxu0 0.0
      %1499 = vmatprep.subr.mxu0 0.0
      %1500 = vmatpush2.msra.mxu0 0.0
      %1501 = vmatprep.subr.mxu0 0.0
      %1502 = vmatpush2.msra.mxu0 0.0
      %1503 = vmatprep.subr.mxu0 0.0
      %1504 = vmatpush2.msra.mxu0 0.0
      %1505 = vmatprep.subr.mxu0 0.0
      %1506 = vmatpush2.msra.mxu0 0.0
      %1507 = vmatprep.subr.mxu0 0.0
      %1508 = vmatpush2.msra.mxu0 0.0
      %1509 = vmatprep.mubr.f32.mxu0 0.0
      %1510 = vmatmul.mubr.f32.gmra.mxu0 %v1289
      %v1511 = vpop.f32.mrf.mxu0
      %v1512 = vadd.f32 0.0, %v1511
      %v1513 = vpop.f32.mrf.mxu0
      %1514 = vmatprep.mubr.f32.mxu0 0.0
      %1515 = vmatmul.mubr.f32.gmra.mxu0 %v1290
      %v1516 = vpop.f32.mrf.mxu0
      %v1517 = vadd.f32 0.0, %v1516
      %v1518 = vpop.f32.mrf.mxu0
      %1519 = vmatprep.mubr.f32.mxu0 0.0
      %1520 = vmatmul.mubr.f32.gmra.mxu0 %v1291
      %v1521 = vpop.f32.mrf.mxu0
      %v1522 = vadd.f32 0.0, %v1521
      %v1523 = vpop.f32.mrf.mxu0
      %1524 = vmatprep.mubr.f32.mxu0 0.0
      %1525 = vmatmul.mubr.f32.gmra.mxu0 %v1292
      %v1526 = vpop.f32.mrf.mxu0
      %v1527 = vadd.f32 0.0, %v1526
      %v1528 = vpop.f32.mrf.mxu0
      %1529 = vmatprep.mubr.f32.mxu0 0.0
      %1530 = vmatmul.mubr.f32.gmra.mxu0 %v1293
      %v1531 = vpop.f32.mrf.mxu0
      %v1532 = vadd.f32 0.0, %v1531
      %v1533 = vpop.f32.mrf.mxu0
      %1534 = vmatprep.mubr.f32.mxu0 0.0
      %1535 = vmatmul.mubr.f32.gmra.mxu0 %v1294
      %v1536 = vpop.f32.mrf.mxu0
      %v1537 = vadd.f32 0.0, %v1536
      %v1538 = vpop.f32.mrf.mxu0
      %1539 = vmatprep.mubr.f32.mxu0 0.0
      %1540 = vmatmul.mubr.f32.gmra.mxu0 %v1295
      %v1541 = vpop.f32.mrf.mxu0
      %v1542 = vadd.f32 0.0, %v1541
      %v1543 = vpop.f32.mrf.mxu0
      %1544 = vmatprep.mubr.f32.mxu0 0.0
      %1545 = vmatmul.mubr.f32.gmra.mxu0 %v1296
      %v1546 = vpop.f32.mrf.mxu0
      %v1547 = vadd.f32 0.0, %v1546
      %v1548 = vpop.f32.mrf.mxu0
      %1549 = vdwg.mxu0
      %v1550 = vadd.f32 %v1420, %v1512
      %v1551 = vadd.f32 %v1421, %v1517
      %v1552 = vadd.f32 %v1422, %v1522
      %v1553 = vadd.f32 %v1423, %v1527
      %v1554 = vadd.f32 %v1424, %v1532
      %v1555 = vadd.f32 %v1425, %v1537
      %v1556 = vadd.f32 %v1426, %v1542
      %v1557 = vadd.f32 %v1427, %v1547
      %s1558 = scalar_lea.vmem %s3, 1024
      %v1559 = vld [vmem:[%s1558] sm:$0xff]
      %v1560 = vld [vmem:[%s1558 + $0x8] sm:$0xff]
      %v1561 = vld [vmem:[%s1558 + $0x10] sm:$0xff]
      %v1562 = vld [vmem:[%s1558 + $0x18] sm:$0xff]
      %v1563 = vld [vmem:[%s1558 + $0x20] sm:$0xff]
      %v1564 = vld [vmem:[%s1558 + $0x28] sm:$0xff]
      %v1565 = vld [vmem:[%s1558 + $0x30] sm:$0xff]
      %v1566 = vld [vmem:[%s1558 + $0x38] sm:$0xff]
      %v1567 = vld [vmem:[%s1558 + $0x40] sm:$0xff]
      %v1568 = vld [vmem:[%s1558 + $0x48] sm:$0xff]
      %v1569 = vld [vmem:[%s1558 + $0x50] sm:$0xff]
      %v1570 = vld [vmem:[%s1558 + $0x58] sm:$0xff]
      %v1571 = vld [vmem:[%s1558 + $0x60] sm:$0xff]
      %v1572 = vld [vmem:[%s1558 + $0x68] sm:$0xff]
      %v1573 = vld [vmem:[%s1558 + $0x70] sm:$0xff]
      %v1574 = vld [vmem:[%s1558 + $0x78] sm:$0xff]
      %1575 = vmatprep.subr.mxu0 0.0
      %1576 = vmatpush1.msra.mxu0 %v1574
      %1577 = vmatprep.subr.mxu0 0.0
      %1578 = vmatpush1.msra.mxu0 %v1573
      %1579 = vmatprep.subr.mxu0 0.0
      %1580 = vmatpush1.msra.mxu0 %v1572
      %1581 = vmatprep.subr.mxu0 0.0
      %1582 = vmatpush1.msra.mxu0 %v1571
      %1583 = vmatprep.subr.mxu0 0.0
      %1584 = vmatpush1.msra.mxu0 %v1570
      %1585 = vmatprep.subr.mxu0 0.0
      %1586 = vmatpush1.msra.mxu0 %v1569
      %1587 = vmatprep.subr.mxu0 0.0
      %1588 = vmatpush1.msra.mxu0 %v1568
      %1589 = vmatprep.subr.mxu0 0.0
      %1590 = vmatpush1.msra.mxu0 %v1567
      %1591 = vmatprep.subr.mxu0 0.0
      %1592 = vmatpush1.msra.mxu0 %v1566
      %1593 = vmatprep.subr.mxu0 0.0
      %1594 = vmatpush1.msra.mxu0 %v1565
      %1595 = vmatprep.subr.mxu0 0.0
      %1596 = vmatpush1.msra.mxu0 %v1564
      %1597 = vmatprep.subr.mxu0 0.0
      %1598 = vmatpush1.msra.mxu0 %v1563
      %1599 = vmatprep.subr.mxu0 0.0
      %1600 = vmatpush1.msra.mxu0 %v1562
      %1601 = vmatprep.subr.mxu0 0.0
      %1602 = vmatpush1.msra.mxu0 %v1561
      %1603 = vmatprep.subr.mxu0 0.0
      %1604 = vmatpush1.msra.mxu0 %v1560
      %1605 = vmatprep.subr.mxu0 0.0
      %1606 = vmatpush1.msra.mxu0 %v1559
      %1607 = vmatprep.subr.mxu0 0.0
      %1608 = vmatpush2.msra.mxu0 0.0
      %1609 = vmatprep.subr.mxu0 0.0
      %1610 = vmatpush2.msra.mxu0 0.0
      %1611 = vmatprep.subr.mxu0 0.0
      %1612 = vmatpush2.msra.mxu0 0.0
      %1613 = vmatprep.subr.mxu0 0.0
      %1614 = vmatpush2.msra.mxu0 0.0
      %1615 = vmatprep.subr.mxu0 0.0
      %1616 = vmatpush2.msra.mxu0 0.0
      %1617 = vmatprep.subr.mxu0 0.0
      %1618 = vmatpush2.msra.mxu0 0.0
      %1619 = vmatprep.subr.mxu0 0.0
      %1620 = vmatpush2.msra.mxu0 0.0
      %1621 = vmatprep.subr.mxu0 0.0
      %1622 = vmatpush2.msra.mxu0 0.0
      %1623 = vmatprep.subr.mxu0 0.0
      %1624 = vmatpush2.msra.mxu0 0.0
      %1625 = vmatprep.subr.mxu0 0.0
      %1626 = vmatpush2.msra.mxu0 0.0
      %1627 = vmatprep.subr.mxu0 0.0
      %1628 = vmatpush2.msra.mxu0 0.0
      %1629 = vmatprep.subr.mxu0 0.0
      %1630 = vmatpush2.msra.mxu0 0.0
      %1631 = vmatprep.subr.mxu0 0.0
      %1632 = vmatpush2.msra.mxu0 0.0
      %1633 = vmatprep.subr.mxu0 0.0
      %1634 = vmatpush2.msra.mxu0 0.0
      %1635 = vmatprep.subr.mxu0 0.0
      %1636 = vmatpush2.msra.mxu0 0.0
      %1637 = vmatprep.subr.mxu0 0.0
      %1638 = vmatpush2.msra.mxu0 0.0
      %1639 = vmatprep.mubr.f32.mxu0 0.0
      %1640 = vmatmul.mubr.f32.gmra.mxu0 %v1290
      %v1641 = vpop.f32.mrf.mxu0
      %v1642 = vadd.f32 0.0, %v1641
      %v1643 = vpop.f32.mrf.mxu0
      %1644 = vmatprep.mubr.f32.mxu0 0.0
      %1645 = vmatmul.mubr.f32.gmra.mxu0 %v1291
      %v1646 = vpop.f32.mrf.mxu0
      %v1647 = vadd.f32 0.0, %v1646
      %v1648 = vpop.f32.mrf.mxu0
      %1649 = vmatprep.mubr.f32.mxu0 0.0
      %1650 = vmatmul.mubr.f32.gmra.mxu0 %v1292
      %v1651 = vpop.f32.mrf.mxu0
      %v1652 = vadd.f32 0.0, %v1651
      %v1653 = vpop.f32.mrf.mxu0
      %1654 = vmatprep.mubr.f32.mxu0 0.0
      %1655 = vmatmul.mubr.f32.gmra.mxu0 %v1293
      %v1656 = vpop.f32.mrf.mxu0
      %v1657 = vadd.f32 0.0, %v1656
      %v1658 = vpop.f32.mrf.mxu0
      %1659 = vmatprep.mubr.f32.mxu0 0.0
      %1660 = vmatmul.mubr.f32.gmra.mxu0 %v1294
      %v1661 = vpop.f32.mrf.mxu0
      %v1662 = vadd.f32 0.0, %v1661
      %v1663 = vpop.f32.mrf.mxu0
      %1664 = vmatprep.mubr.f32.mxu0 0.0
      %1665 = vmatmul.mubr.f32.gmra.mxu0 %v1295
      %v1666 = vpop.f32.mrf.mxu0
      %v1667 = vadd.f32 0.0, %v1666
      %v1668 = vpop.f32.mrf.mxu0
      %1669 = vmatprep.mubr.f32.mxu0 0.0
      %1670 = vmatmul.mubr.f32.gmra.mxu0 %v1296
      %v1671 = vpop.f32.mrf.mxu0
      %v1672 = vadd.f32 0.0, %v1671
      %v1673 = vpop.f32.mrf.mxu0
      %1674 = vmatprep.mubr.f32.mxu0 0.0
      %1675 = vmatmul.mubr.f32.gmra.mxu0 %v1297
      %v1676 = vpop.f32.mrf.mxu0
      %v1677 = vadd.f32 0.0, %v1676
      %v1678 = vpop.f32.mrf.mxu0
      %1679 = vdwg.mxu0
      %v1680 = vadd.f32 %v1550, %v1642
      %v1681 = vadd.f32 %v1551, %v1647
      %v1682 = vadd.f32 %v1552, %v1652
      %v1683 = vadd.f32 %v1553, %v1657
      %v1684 = vadd.f32 %v1554, %v1662
      %v1685 = vadd.f32 %v1555, %v1667
      %v1686 = vadd.f32 %v1556, %v1672
      %v1687 = vadd.f32 %v1557, %v1677
      %1688 = vst [vmem:[%s231] sm:$0xff] %v1680
      %1689 = vst [vmem:[%s231 + $0x8] sm:$0xff] %v1681
      %1690 = vst [vmem:[%s231 + $0x10] sm:$0xff] %v1682
      %1691 = vst [vmem:[%s231 + $0x18] sm:$0xff] %v1683
      %1692 = vst [vmem:[%s231 + $0x20] sm:$0xff] %v1684
      %1693 = vst [vmem:[%s231 + $0x28] sm:$0xff] %v1685
      %1694 = vst [vmem:[%s231 + $0x30] sm:$0xff] %v1686
      %1695 = vst [vmem:[%s231 + $0x38] sm:$0xff] %v1687
      %v1696 = vadd.f32 %v1680, %v1681
      %v1697 = vadd.f32 %v1696, %v1682
      %v1698 = vadd.f32 %v1697, %v1683
      %v1699 = vadd.f32 %v1698, %v1684
      %v1700 = vadd.f32 %v1699, %v1685
      %v1701 = vadd.f32 %v1700, %v1686
      %v1702 = vadd.f32 %v1701, %v1687
      %v1703 = vrot.slane %v1702, 4
      %v1704 = vadd.f32 %v1702, %v1703
      %v1705 = vrot.slane %v1704, 2
      %v1706 = vadd.f32 %v1704, %v1705
      %v1707 = vrot.slane %v1706, 1
      %v1708 = vadd.f32 %v1706, %v1707
      %1709 = vst [vmem:[%s235] sm:$0x1] %v1708
      %v1710 = vmul.f32 %v1680, %v1680
      %v1711 = vmul.f32 %v1681, %v1681
      %v1712 = vmul.f32 %v1682, %v1682
      %v1713 = vmul.f32 %v1683, %v1683
      %v1714 = vmul.f32 %v1684, %v1684
      %v1715 = vmul.f32 %v1685, %v1685
      %v1716 = vmul.f32 %v1686, %v1686
      %v1717 = vmul.f32 %v1687, %v1687
      %v1718 = vadd.f32 %v1710, %v1711
      %v1719 = vadd.f32 %v1718, %v1712
      %v1720 = vadd.f32 %v1719, %v1713
      %v1721 = vadd.f32 %v1720, %v1714
      %v1722 = vadd.f32 %v1721, %v1715
      %v1723 = vadd.f32 %v1722, %v1716
      %v1724 = vadd.f32 %v1723, %v1717
      %v1725 = vrot.slane %v1724, 4
      %v1726 = vadd.f32 %v1724, %v1725
      %v1727 = vrot.slane %v1726, 2
      %v1728 = vadd.f32 %v1726, %v1727
      %v1729 = vrot.slane %v1728, 1
      %v1730 = vadd.f32 %v1728, %v1729
      %1731 = vst [vmem:[%s235 + $0x1] sm:$0x1] %v1730
      %p1732 = scmp.lt.s32.totalorder %s17, 1
      %s1733 = scalar_select %p1732, %s17, 1
      %s1734 = smul.addr %s1733, 8
      %s1735 = smul.addr %s1734, 8
      %s1736 = scalar_lea.vmem %s4, %s1735
      %p1737 = scmp.lt.s32.totalorder %s17, 1
      %s1738 = scalar_select %p1737, %s17, 1
      %s1739 = smul.addr %s1738, 2
      %s1740 = scalar_lea.vmem %s5, %s1739
      // Predicated region
      $region37: #{bottleneck_pallas.5} parent=35 // pred_check
        %p1741 = pneg %p124
      $region38: #{bottleneck_pallas.5} parent=35 // pred_check_branch
        %1743 = sbr.rel (%p1741) target = $region40
      $region39: #{bottleneck_pallas.5} parent=35 // pred_region
        _
      $region40: #{bottleneck_pallas.5} parent=35 // pred_fallthru
        _
      // Predicated region
      $region41: #{bottleneck_pallas.5} parent=35 // pred_check
        %p1744 = pneg %p150
      $region42: #{bottleneck_pallas.5} parent=35 // pred_check_branch
        %1746 = sbr.rel (%p1744) target = $region44
      $region43: #{bottleneck_pallas.5} parent=35 // pred_region
        _
      $region44: #{bottleneck_pallas.5} parent=35 // pred_fallthru
        _
    $region36: #{bottleneck_pallas.5} parent=5 // pred_fallthru
      _
    %p1747 = scmp.le.s32.totalorder 2, %s12
    // Predicated region
    $region45: #{bottleneck_pallas.5} parent=5 // pred_check
      %p1748 = pneg %p1747
    $region46: #{bottleneck_pallas.5} parent=5 // pred_check_branch
      %1750 = sbr.rel (%p1748) target = $region48
    $region47: #{bottleneck_pallas.5} parent=5 // pred_region
      %s1751 = ssub.s32 %s12, 2
      // Predicated region
      $region49: #{bottleneck_pallas.5} parent=47 // pred_check
        %p1752 = pneg %p130
      $region50: #{bottleneck_pallas.5} parent=47 // pred_check_branch
        %1754 = sbr.rel (%p1752) target = $region52
      $region51: #{bottleneck_pallas.5} parent=47 // pred_region
        %p1755 = scmp.lt.s32.totalorder %s18, 1
        %s1756 = scalar_select %p1755, %s18, 1
        %s1757 = smul.addr %s1756, 8
        %s1758 = smul.addr %s1757, 8
        %s1759 = scalar_lea.vmem %s4, %s1758
      $region52: #{bottleneck_pallas.5} parent=47 // pred_fallthru
        _
      // Predicated region
      $region53: #{bottleneck_pallas.5} parent=47 // pred_check
        %p1760 = pneg %p156
      $region54: #{bottleneck_pallas.5} parent=47 // pred_check_branch
        %1762 = sbr.rel (%p1760) target = $region56
      $region55: #{bottleneck_pallas.5} parent=47 // pred_region
        %p1763 = scmp.lt.s32.totalorder %s18, 1
        %s1764 = scalar_select %p1763, %s18, 1
        %s1765 = smul.addr %s1764, 2
        %s1766 = scalar_lea.vmem %s5, %s1765
      $region56: #{bottleneck_pallas.5} parent=47 // pred_fallthru
        _
    $region48: #{bottleneck_pallas.5} parent=5 // pred_fallthru
      _
  $region6: #{bottleneck_pallas.5} parent=0 // loop_footer
    %s16 = sadd.s32 1, %s12
  $region7: #{bottleneck_pallas.5} parent=0 // loop_footer_branch
    %11 = sbr.rel target = $region3
  $region8: #{bottleneck_pallas.5} parent=0 // loop_exit
    _

</llo_original>
